<compile_context>
chip_gen: v7x
topology: tpu7x:2x2x1
jax: 0.10.0
libtpu: 0.0.40
codegen_flags: <defaults>
</compile_context>

<pallas_src>
import jax
import jax.numpy as jnp
from jax.experimental import pallas as pl
from jax.experimental.pallas import tpu as pltpu

_PLANE_AXES = {"xz": (0, 2), "xy": (0, 1), "yz": (1, 2)}


def _round_up(x, m):
    return (x + m - 1) // m * m


# ----------------------------- coordinate glue ----------------------------- #
def _plane_norm_all(p, padding):
    """normalize_coordinate (same formula for every plane) applied to all 3
    coords; returns values in [-1, 1], shape (B, T, 3)."""
    pn = p / (1.0 + padding + 10e-6) + 0.5
    pn = jnp.clip(pn, 0.0, 1.0 - 10e-6)   # elementwise form of the outlier fixup
    return 2.0 * pn - 1.0


def _grid_norm_all(p, padding):
    """normalize_3d_coordinate; values in [-1, 1], shape (B, T, 3)."""
    pn = p / (1.0 + padding + 10e-4) + 0.5
    pn = jnp.clip(pn, 0.0, 1.0 - 10e-4)
    return 2.0 * pn - 1.0


def _plane_grid_coords(p, plane, padding):
    a0, a1 = _PLANE_AXES[plane]
    v = _plane_norm_all(p, padding)
    return v[..., a0], v[..., a1]          # (gx -> W axis, gy -> H axis)


def _grid_coords_3d(p, padding):
    v = _grid_norm_all(p, padding)
    return v[..., 0], v[..., 1], v[..., 2]  # (x->W, y->H, z->D)


def _axis_weight(coord, size):
    """Compact per-axis interpolation weights (align_corners=True, border pad).
    coord: (B, T) in [-1, 1]  ->  (B, T, size) with 2 nonzeros per row."""
    idx = (coord + 1.0) * 0.5 * (size - 1)
    idx = jnp.clip(idx, 0.0, float(size - 1))
    i0f = jnp.floor(idx)
    w1 = idx - i0f
    w0 = 1.0 - w1
    i0 = i0f.astype(jnp.int32)
    i1 = jnp.minimum(i0 + 1, size - 1)
    oh0 = jax.nn.one_hot(i0, size, dtype=jnp.float32)
    oh1 = jax.nn.one_hot(i1, size, dtype=jnp.float32)
    return w0[..., None] * oh0 + w1[..., None] * oh1


def _expand_3d_cube(G):
    """Static 0/1 expansion matrices: axis index -> flat (d*G+h)*G+w."""
    s = jnp.arange(G * G * G)
    ez = (s[:, None] // (G * G) == jnp.arange(G)[None, :]).astype(jnp.float32)
    ey = ((s[:, None] // G) % G == jnp.arange(G)[None, :]).astype(jnp.float32)
    ex = (s[:, None] % G == jnp.arange(G)[None, :]).astype(jnp.float32)
    return ez, ey, ex


def _expand_2d(R):
    s = jnp.arange(R * R)
    ey = (s[:, None] // R == jnp.arange(R)[None, :]).astype(jnp.float32)
    ex = (s[:, None] % R == jnp.arange(R)[None, :]).astype(jnp.float32)
    return ey, ex


# ------------------------------ Pallas wrapper ------------------------------ #
def fc_decoder_forward(p, c_plane, fc_w, fc_b, padding=0.1,
                       sample_mode="bilinear", t_tile=128):
    # TODO(synk): sample_mode='nearest' branch not implemented (bilinear only).
    assert sample_mode == "bilinear"
    B, T, dim = p.shape
    cg = c_plane["grid"]
    C = cg.shape[1]
    G = cg.shape[2]
    assert cg.shape[2] == cg.shape[3] == cg.shape[4], "conv-onet grid is cubic"
    Sg = G * G * G
    R = c_plane["xz"].shape[2]
    assert c_plane["xz"].shape[2:] == (R, R), "plane features are square"
    assert c_plane["xy"].shape[2:] == (R, R) and c_plane["yz"].shape[2:] == (R, R)
    Sp = R * R
    Stot = Sg + 3 * Sp
    out_dim = fc_w.shape[0]
    assert out_dim == 1   # FCDecoder.forward squeezes(-1) => out_dim == 1

    # ---- pad query-point axis to a lane-friendly tile multiple.
    TT = t_tile
    Tpad = _round_up(max(T, 1), TT)
    p_pad = jnp.pad(p.astype(jnp.float32), ((0, 0), (0, Tpad - T), (0, 0)))

    # ---- compact per-axis interpolation weights, (B, 3, axis, Tpad):
    # T sits on the lane axis inside the kernel.
    vg = _grid_norm_all(p_pad, padding)                   # (B, Tpad, 3)
    wg = jnp.stack([_axis_weight(vg[..., k], G).transpose(0, 2, 1)
                    for k in range(3)], axis=1)           # (B, 3, G, Tpad)  k: x,y,z

    vp = _plane_norm_all(p_pad, padding)                  # shared by all planes
    wpl = jnp.stack([_axis_weight(vp[..., k], R).transpose(0, 2, 1)
                     for k in range(3)], axis=1)          # (B, 3, R, Tpad)  k: x,y,z

    # ---- static expansion matrices (constant block index -> VMEM resident).
    ezg, eyg, exg = _expand_3d_cube(G)                    # (Sg, G) each
    eyp, exp_ = _expand_2d(R)                             # (Sp, R) each

    # ---- all features stacked channel-major: (B, C, Sg + 3*Sp).
    feat = jnp.concatenate(
        [cg.reshape(B, C, Sg),
         c_plane["xz"].reshape(B, C, Sp),
         c_plane["xy"].reshape(B, C, Sp),
         c_plane["yz"].reshape(B, C, Sp)], axis=2).astype(jnp.float32)

    p_t = p_pad.transpose(0, 2, 1)                        # (B, dim, Tpad)

    # fc weight split: fc_w is (1, C + dim), applied to cat([c, p]).
    fcwc = fc_w[0, :C].reshape(C, 1).astype(jnp.float32)
    fcwp = fc_w[0, C:].reshape(dim, 1).astype(jnp.float32)
    fcb = fc_b.reshape(1, 1).astype(jnp.float32)

    f32 = jnp.float32

    def kernel(wg_ref, ezg_ref, eyg_ref, exg_ref, wpl_ref, eyp_ref, exp_ref,
               feat_ref, p_ref, fcwc_ref, fcwp_ref, fcb_ref, out_ref):
        # ---- 3D grid (trilinear): rebuild the (Sg, TT) interpolation tile in
        # VMEM from compact per-axis weights via tiny expansion matmuls.
        wm = jnp.dot(ezg_ref[...], wg_ref[0, 2], preferred_element_type=f32)
        wm = wm * jnp.dot(eyg_ref[...], wg_ref[0, 1], preferred_element_type=f32)
        wm = wm * jnp.dot(exg_ref[...], wg_ref[0, 0], preferred_element_type=f32)
        c_t = jnp.dot(feat_ref[0, :, 0:Sg], wm,
                      preferred_element_type=f32)          # (C, TT)

        # ---- planes (bilinear): per-coordinate expansions shared by planes.
        ex0 = jnp.dot(exp_ref[...], wpl_ref[0, 0], preferred_element_type=f32)
        ex1 = jnp.dot(exp_ref[...], wpl_ref[0, 1], preferred_element_type=f32)
        ey1 = jnp.dot(eyp_ref[...], wpl_ref[0, 1], preferred_element_type=f32)
        ey2 = jnp.dot(eyp_ref[...], wpl_ref[0, 2], preferred_element_type=f32)

        o = Sg
        c_t = c_t + jnp.dot(feat_ref[0, :, o:o + Sp], ey2 * ex0,
                            preferred_element_type=f32)    # xz: rows<-z, cols<-x
        o += Sp
        c_t = c_t + jnp.dot(feat_ref[0, :, o:o + Sp], ey1 * ex0,
                            preferred_element_type=f32)    # xy: rows<-y, cols<-x
        o += Sp
        c_t = c_t + jnp.dot(feat_ref[0, :, o:o + Sp], ey2 * ex1,
                            preferred_element_type=f32)    # yz: rows<-z, cols<-y

        # ---- fc(cat([c, p], -1)), out_dim == 1:
        # VPU broadcast-multiply + sublane reduce -> lane-dense (1, TT) write.
        out = jnp.sum(c_t * fcwc_ref[...], axis=0, keepdims=True)
        out = out + jnp.sum(p_ref[0] * fcwp_ref[...], axis=0, keepdims=True)
        out_ref[0] = out + fcb_ref[...]

    n_t = Tpad // TT
    grid_spec = pltpu.PrefetchScalarGridSpec(
        num_scalar_prefetch=0,
        grid=(B, n_t),
        in_specs=[
            pl.BlockSpec((1, 3, G, TT), lambda b, t: (b, 0, 0, t)),   # grid axis w
            pl.BlockSpec((Sg, G), lambda b, t: (0, 0)),               # ezg
            pl.BlockSpec((Sg, G), lambda b, t: (0, 0)),               # eyg
            pl.BlockSpec((Sg, G), lambda b, t: (0, 0)),               # exg
            pl.BlockSpec((1, 3, R, TT), lambda b, t: (b, 0, 0, t)),   # plane axis w
            pl.BlockSpec((Sp, R), lambda b, t: (0, 0)),               # eyp
            pl.BlockSpec((Sp, R), lambda b, t: (0, 0)),               # exp
            pl.BlockSpec((1, C, Stot), lambda b, t: (b, 0, 0)),       # stacked feats
            pl.BlockSpec((1, dim, TT), lambda b, t: (b, 0, t)),       # p (transposed)
            pl.BlockSpec((C, 1), lambda b, t: (0, 0)),                # fc weight (c)
            pl.BlockSpec((dim, 1), lambda b, t: (0, 0)),              # fc weight (p)
            pl.BlockSpec((1, 1), lambda b, t: (0, 0)),                # fc bias
        ],
        out_specs=pl.BlockSpec((1, 1, TT), lambda b, t: (b, 0, t)),
    )

    out = pl.pallas_call(
        kernel,
        out_shape=jax.ShapeDtypeStruct((B, 1, Tpad), jnp.float32),
        grid_spec=grid_spec,
        compiler_params=pltpu.CompilerParams(
            dimension_semantics=("parallel", "parallel")),
    )(wg, ezg, eyg, exg, wpl, eyp, exp_,
      feat, p_t, fcwc, fcwp, fcb)

    return out[:, 0, :T]   # drop T padding; matches .squeeze(-1), out_dim == 1


# --------------------- independent pure-JAX reference ---------------------- #
def _grid_sample_2d(c, gx, gy):
    B, C, H, W = c.shape
    ix = jnp.clip((gx + 1.0) * 0.5 * (W - 1), 0.0, W - 1)
    iy = jnp.clip((gy + 1.0) * 0.5 * (H - 1), 0.0, H - 1)
    x0f, y0f = jnp.floor(ix), jnp.floor(iy)
    wx1, wy1 = ix - x0f, iy - y0f
    wx0, wy0 = 1.0 - wx1, 1.0 - wy1
    x0 = x0f.astype(jnp.int32); x1 = jnp.minimum(x0 + 1, W - 1)
    y0 = y0f.astype(jnp.int32); y1 = jnp.minimum(y0 + 1, H - 1)
    flat = c.reshape(B, C, H * W)

    def g(yi, xi):
        return jnp.take_along_axis(flat, (yi * W + xi)[:, None, :], axis=2)

    return (g(y0, x0) * (wy0 * wx0)[:, None, :] + g(y0, x1) * (wy0 * wx1)[:, None, :] +
            g(y1, x0) * (wy1 * wx0)[:, None, :] + g(y1, x1) * (wy1 * wx1)[:, None, :])


def _grid_sample_3d(c, gx, gy, gz):
    B, C, D, H, W = c.shape
    ix = jnp.clip((gx + 1.0) * 0.5 * (W - 1), 0.0, W - 1)
    iy = jnp.clip((gy + 1.0) * 0.5 * (H - 1), 0.0, H - 1)
    iz = jnp.clip((gz + 1.0) * 0.5 * (D - 1), 0.0, D - 1)
    x0f, y0f, z0f = jnp.floor(ix), jnp.floor(iy), jnp.floor(iz)
    wx1, wy1, wz1 = ix - x0f, iy - y0f, iz - z0f
    wx0, wy0, wz0 = 1.0 - wx1, 1.0 - wy1, 1.0 - wz1
    x0 = x0f.astype(jnp.int32); x1 = jnp.minimum(x0 + 1, W - 1)
    y0 = y0f.astype(jnp.int32); y1 = jnp.minimum(y0 + 1, H - 1)
    z0 = z0f.astype(jnp.int32); z1 = jnp.minimum(z0 + 1, D - 1)
    flat = c.reshape(B, C, D * H * W)

    def g(zi, yi, xi):
        return jnp.take_along_axis(flat, ((zi * H + yi) * W + xi)[:, None, :], axis=2)

    out = 0.0
    for zi, wz in ((z0, wz0), (z1, wz1)):
        for yi, wy in ((y0, wy0), (y1, wy1)):
            for xi, wx in ((x0, wx0), (x1, wx1)):
                out = out + g(zi, yi, xi) * (wz * wy * wx)[:, None, :]
    return out


def _reference_forward(p, c_plane, fc_w, fc_b, padding=0.1):
    gx, gy, gz = _grid_coords_3d(p, padding)
    c = _grid_sample_3d(c_plane["grid"], gx, gy, gz)
    for plane in ("xz", "xy", "yz"):
        px, py = _plane_grid_coords(p, plane, padding)
        c = c + _grid_sample_2d(c_plane[plane], px, py)
    c = jnp.transpose(c, (0, 2, 1))                       # (B, T, C)
    feat = jnp.concatenate([c, p], axis=-1)
    net = feat @ fc_w.T + fc_b
    return net[..., 0]


# ----------------------------------- main ---------------------------------- #
if __name__ == "__main__":
    key = jax.random.PRNGKey(0)
    B, T = 2, 64
    dim, c_dim, out_dim = 3, 32, 1
    grid_res, plane_res = 8, 16

    ks = jax.random.split(key, 7)
    p = jax.random.uniform(ks[0], (B, T, dim), minval=-0.5, maxval=0.5,
                           dtype=jnp.float32)
    c_plane = {
        "grid": jax.random.normal(ks[1], (B, c_dim, grid_res, grid_res, grid_res),
                                  jnp.float32),
        "xz": jax.random.normal(ks[2], (B, c_dim, plane_res, plane_res), jnp.float32),
        "xy": jax.random.normal(ks[3], (B, c_dim, plane_res, plane_res), jnp.float32),
        "yz": jax.random.normal(ks[4], (B, c_dim, plane_res, plane_res), jnp.float32),
    }
    # nn.Linear(dim + c_dim, out_dim): weight (out_dim, c_dim + dim) applied to [c, p]
    fc_w = 0.05 * jax.random.normal(ks[5], (out_dim, c_dim + dim), jnp.float32)
    fc_b = 0.01 * jax.random.normal(ks[6], (out_dim,), jnp.float32)

    fwd = jax.jit(lambda p_, cp_, w_, b_: fc_decoder_forward(p_, cp_, w_, b_,
                                                             padding=0.1))
    out = fwd(p, c_plane, fc_w, fc_b)
    out = jax.block_until_ready(out)

    ref = _reference_forward(p, c_plane, fc_w, fc_b, padding=0.1)
    assert out.shape == (B, T)
    assert bool(jnp.allclose(out, ref, atol=2e-3, rtol=2e-3))
    print("KERNEL_OK")
</pallas_src>

<mosaic_0001>
module attributes {stable_mosaic.version = 11 : i64} {
  func.func @kernel(%arg0: i32, %arg1: i32, %arg2: memref<1x3x8x128xf32, #tpu.memory_space<vmem>>, %arg3: memref<512x8xf32, #tpu.memory_space<vmem>>, %arg4: memref<512x8xf32, #tpu.memory_space<vmem>>, %arg5: memref<512x8xf32, #tpu.memory_space<vmem>>, %arg6: memref<1x3x16x128xf32, #tpu.memory_space<vmem>>, %arg7: memref<256x16xf32, #tpu.memory_space<vmem>>, %arg8: memref<256x16xf32, #tpu.memory_space<vmem>>, %arg9: memref<1x32x1280xf32, #tpu.memory_space<vmem>>, %arg10: memref<1x3x128xf32, #tpu.memory_space<vmem>>, %arg11: memref<32x1xf32, #tpu.memory_space<vmem>>, %arg12: memref<3x1xf32, #tpu.memory_space<vmem>>, %arg13: memref<1x1xf32, #tpu.memory_space<vmem>>, %arg14: memref<1x1x128xf32, #tpu.memory_space<vmem>>) attributes {dimension_semantics = [#tpu.dimension_semantics<parallel>, #tpu.dimension_semantics<parallel>], iteration_bounds = array<i64: 2, 1>, scalar_prefetch = 0 : i64, scratch_operands = 0 : i64, tpu.core_type = #tpu.core_type<tc>, window_params = [{transform_indices = @transform_0, window_bounds = array<i64: 1, 3, 8, 128>}, {pipeline_mode = #tpu.pipeline_mode<synchronous>, transform_indices = @transform_1, window_bounds = array<i64: 512, 8>}, {pipeline_mode = #tpu.pipeline_mode<synchronous>, transform_indices = @transform_2, window_bounds = array<i64: 512, 8>}, {pipeline_mode = #tpu.pipeline_mode<synchronous>, transform_indices = @transform_3, window_bounds = array<i64: 512, 8>}, {transform_indices = @transform_4, window_bounds = array<i64: 1, 3, 16, 128>}, {pipeline_mode = #tpu.pipeline_mode<synchronous>, transform_indices = @transform_5, window_bounds = array<i64: 256, 16>}, {pipeline_mode = #tpu.pipeline_mode<synchronous>, transform_indices = @transform_6, window_bounds = array<i64: 256, 16>}, {transform_indices = @transform_7, window_bounds = array<i64: 1, 32, 1280>}, {transform_indices = @transform_8, window_bounds = array<i64: 1, 3, 128>}, {pipeline_mode = #tpu.pipeline_mode<synchronous>, transform_indices = @transform_9, window_bounds = array<i64: 32, 1>}, {pipeline_mode = #tpu.pipeline_mode<synchronous>, transform_indices = @transform_10, window_bounds = array<i64: 3, 1>}, {pipeline_mode = #tpu.pipeline_mode<synchronous>, transform_indices = @transform_11, window_bounds = array<i64: 1, 1>}, {transform_indices = @transform_12, window_bounds = array<i64: 1, 1, 128>}]} {
    %c0 = arith.constant 0 : index
    %c0_0 = arith.constant 0 : index
    %0 = vector.load %arg3[%c0, %c0_0] : memref<512x8xf32, #tpu.memory_space<vmem>>, vector<512x8xf32>
    %c0_1 = arith.constant 0 : index
    %c2 = arith.constant 2 : index
    %c0_2 = arith.constant 0 : index
    %c0_3 = arith.constant 0 : index
    %1 = vector.load %arg2[%c0_1, %c2, %c0_2, %c0_3] : memref<1x3x8x128xf32, #tpu.memory_space<vmem>>, vector<1x1x8x128xf32>
    %2 = vector.shape_cast %1 : vector<1x1x8x128xf32> to vector<8x128xf32>
    %cst = arith.constant dense<0.000000e+00> : vector<512x128xf32>
    %3 = tpu.matmul %0, %2, %cst {dimension_numbers = #tpu.dot_dimension_numbers<[1], [0], [0], [1], [0, 0, 1, 1], [], []>} : vector<512x8xf32>, vector<8x128xf32>, vector<512x128xf32> -> vector<512x128xf32>
    %c0_4 = arith.constant 0 : index
    %c0_5 = arith.constant 0 : index
    %4 = vector.load %arg4[%c0_4, %c0_5] : memref<512x8xf32, #tpu.memory_space<vmem>>, vector<512x8xf32>
    %c0_6 = arith.constant 0 : index
    %c1 = arith.constant 1 : index
    %c0_7 = arith.constant 0 : index
    %c0_8 = arith.constant 0 : index
    %5 = vector.load %arg2[%c0_6, %c1, %c0_7, %c0_8] : memref<1x3x8x128xf32, #tpu.memory_space<vmem>>, vector<1x1x8x128xf32>
    %6 = vector.shape_cast %5 : vector<1x1x8x128xf32> to vector<8x128xf32>
    %cst_9 = arith.constant dense<0.000000e+00> : vector<512x128xf32>
    %7 = tpu.matmul %4, %6, %cst_9 {dimension_numbers = #tpu.dot_dimension_numbers<[1], [0], [0], [1], [0, 0, 1, 1], [], []>} : vector<512x8xf32>, vector<8x128xf32>, vector<512x128xf32> -> vector<512x128xf32>
    %8 = arith.mulf %3, %7 : vector<512x128xf32>
    %c0_10 = arith.constant 0 : index
    %c0_11 = arith.constant 0 : index
    %9 = vector.load %arg5[%c0_10, %c0_11] : memref<512x8xf32, #tpu.memory_space<vmem>>, vector<512x8xf32>
    %c0_12 = arith.constant 0 : index
    %c0_13 = arith.constant 0 : index
    %c0_14 = arith.constant 0 : index
    %c0_15 = arith.constant 0 : index
    %10 = vector.load %arg2[%c0_12, %c0_13, %c0_14, %c0_15] : memref<1x3x8x128xf32, #tpu.memory_space<vmem>>, vector<1x1x8x128xf32>
    %11 = vector.shape_cast %10 : vector<1x1x8x128xf32> to vector<8x128xf32>
    %cst_16 = arith.constant dense<0.000000e+00> : vector<512x128xf32>
    %12 = tpu.matmul %9, %11, %cst_16 {dimension_numbers = #tpu.dot_dimension_numbers<[1], [0], [0], [1], [0, 0, 1, 1], [], []>} : vector<512x8xf32>, vector<8x128xf32>, vector<512x128xf32> -> vector<512x128xf32>
    %13 = arith.mulf %8, %12 : vector<512x128xf32>
    %c0_17 = arith.constant 0 : index
    %c0_18 = arith.constant 0 : index
    %c0_19 = arith.constant 0 : index
    %14 = vector.load %arg9[%c0_17, %c0_18, %c0_19] : memref<1x32x1280xf32, #tpu.memory_space<vmem>>, vector<1x32x512xf32>
    %15 = vector.shape_cast %14 : vector<1x32x512xf32> to vector<32x512xf32>
    %cst_20 = arith.constant dense<0.000000e+00> : vector<32x128xf32>
    %16 = tpu.matmul %15, %13, %cst_20 {dimension_numbers = #tpu.dot_dimension_numbers<[1], [0], [0], [1], [0, 0, 1, 1], [], []>} : vector<32x512xf32>, vector<512x128xf32>, vector<32x128xf32> -> vector<32x128xf32>
    %c0_21 = arith.constant 0 : index
    %c0_22 = arith.constant 0 : index
    %17 = vector.load %arg8[%c0_21, %c0_22] : memref<256x16xf32, #tpu.memory_space<vmem>>, vector<256x16xf32>
    %c0_23 = arith.constant 0 : index
    %c0_24 = arith.constant 0 : index
    %c0_25 = arith.constant 0 : index
    %c0_26 = arith.constant 0 : index
    %18 = vector.load %arg6[%c0_23, %c0_24, %c0_25, %c0_26] : memref<1x3x16x128xf32, #tpu.memory_space<vmem>>, vector<1x1x16x128xf32>
    %19 = vector.shape_cast %18 : vector<1x1x16x128xf32> to vector<16x128xf32>
    %cst_27 = arith.constant dense<0.000000e+00> : vector<256x128xf32>
    %20 = tpu.matmul %17, %19, %cst_27 {dimension_numbers = #tpu.dot_dimension_numbers<[1], [0], [0], [1], [0, 0, 1, 1], [], []>} : vector<256x16xf32>, vector<16x128xf32>, vector<256x128xf32> -> vector<256x128xf32>
    %c0_28 = arith.constant 0 : index
    %c0_29 = arith.constant 0 : index
    %21 = vector.load %arg8[%c0_28, %c0_29] : memref<256x16xf32, #tpu.memory_space<vmem>>, vector<256x16xf32>
    %c0_30 = arith.constant 0 : index
    %c1_31 = arith.constant 1 : index
    %c0_32 = arith.constant 0 : index
    %c0_33 = arith.constant 0 : index
    %22 = vector.load %arg6[%c0_30, %c1_31, %c0_32, %c0_33] : memref<1x3x16x128xf32, #tpu.memory_space<vmem>>, vector<1x1x16x128xf32>
    %23 = vector.shape_cast %22 : vector<1x1x16x128xf32> to vector<16x128xf32>
    %cst_34 = arith.constant dense<0.000000e+00> : vector<256x128xf32>
    %24 = tpu.matmul %21, %23, %cst_34 {dimension_numbers = #tpu.dot_dimension_numbers<[1], [0], [0], [1], [0, 0, 1, 1], [], []>} : vector<256x16xf32>, vector<16x128xf32>, vector<256x128xf32> -> vector<256x128xf32>
    %c0_35 = arith.constant 0 : index
    %c0_36 = arith.constant 0 : index
    %25 = vector.load %arg7[%c0_35, %c0_36] : memref<256x16xf32, #tpu.memory_space<vmem>>, vector<256x16xf32>
    %c0_37 = arith.constant 0 : index
    %c1_38 = arith.constant 1 : index
    %c0_39 = arith.constant 0 : index
    %c0_40 = arith.constant 0 : index
    %26 = vector.load %arg6[%c0_37, %c1_38, %c0_39, %c0_40] : memref<1x3x16x128xf32, #tpu.memory_space<vmem>>, vector<1x1x16x128xf32>
    %27 = vector.shape_cast %26 : vector<1x1x16x128xf32> to vector<16x128xf32>
    %cst_41 = arith.constant dense<0.000000e+00> : vector<256x128xf32>
    %28 = tpu.matmul %25, %27, %cst_41 {dimension_numbers = #tpu.dot_dimension_numbers<[1], [0], [0], [1], [0, 0, 1, 1], [], []>} : vector<256x16xf32>, vector<16x128xf32>, vector<256x128xf32> -> vector<256x128xf32>
    %c0_42 = arith.constant 0 : index
    %c0_43 = arith.constant 0 : index
    %29 = vector.load %arg7[%c0_42, %c0_43] : memref<256x16xf32, #tpu.memory_space<vmem>>, vector<256x16xf32>
    %c0_44 = arith.constant 0 : index
    %c2_45 = arith.constant 2 : index
    %c0_46 = arith.constant 0 : index
    %c0_47 = arith.constant 0 : index
    %30 = vector.load %arg6[%c0_44, %c2_45, %c0_46, %c0_47] : memref<1x3x16x128xf32, #tpu.memory_space<vmem>>, vector<1x1x16x128xf32>
    %31 = vector.shape_cast %30 : vector<1x1x16x128xf32> to vector<16x128xf32>
    %cst_48 = arith.constant dense<0.000000e+00> : vector<256x128xf32>
    %32 = tpu.matmul %29, %31, %cst_48 {dimension_numbers = #tpu.dot_dimension_numbers<[1], [0], [0], [1], [0, 0, 1, 1], [], []>} : vector<256x16xf32>, vector<16x128xf32>, vector<256x128xf32> -> vector<256x128xf32>
    %c0_49 = arith.constant 0 : index
    %c0_50 = arith.constant 0 : index
    %c512 = arith.constant 512 : index
    %33 = vector.load %arg9[%c0_49, %c0_50, %c512] : memref<1x32x1280xf32, #tpu.memory_space<vmem>>, vector<1x32x256xf32>
    %34 = vector.shape_cast %33 : vector<1x32x256xf32> to vector<32x256xf32>
    %35 = arith.mulf %32, %20 : vector<256x128xf32>
    %cst_51 = arith.constant dense<0.000000e+00> : vector<32x128xf32>
    %36 = tpu.matmul %34, %35, %cst_51 {dimension_numbers = #tpu.dot_dimension_numbers<[1], [0], [0], [1], [0, 0, 1, 1], [], []>} : vector<32x256xf32>, vector<256x128xf32>, vector<32x128xf32> -> vector<32x128xf32>
    %37 = arith.addf %16, %36 : vector<32x128xf32>
    %c0_52 = arith.constant 0 : index
    %c0_53 = arith.constant 0 : index
    %c768 = arith.constant 768 : index
    %38 = vector.load %arg9[%c0_52, %c0_53, %c768] : memref<1x32x1280xf32, #tpu.memory_space<vmem>>, vector<1x32x256xf32>
    %39 = vector.shape_cast %38 : vector<1x32x256xf32> to vector<32x256xf32>
    %40 = arith.mulf %28, %20 : vector<256x128xf32>
    %cst_54 = arith.constant dense<0.000000e+00> : vector<32x128xf32>
    %41 = tpu.matmul %39, %40, %cst_54 {dimension_numbers = #tpu.dot_dimension_numbers<[1], [0], [0], [1], [0, 0, 1, 1], [], []>} : vector<32x256xf32>, vector<256x128xf32>, vector<32x128xf32> -> vector<32x128xf32>
    %42 = arith.addf %37, %41 : vector<32x128xf32>
    %c0_55 = arith.constant 0 : index
    %c0_56 = arith.constant 0 : index
    %c1024 = arith.constant 1024 : index
    %43 = vector.load %arg9[%c0_55, %c0_56, %c1024] : memref<1x32x1280xf32, #tpu.memory_space<vmem>>, vector<1x32x256xf32>
    %44 = vector.shape_cast %43 : vector<1x32x256xf32> to vector<32x256xf32>
    %45 = arith.mulf %32, %24 : vector<256x128xf32>
    %cst_57 = arith.constant dense<0.000000e+00> : vector<32x128xf32>
    %46 = tpu.matmul %44, %45, %cst_57 {dimension_numbers = #tpu.dot_dimension_numbers<[1], [0], [0], [1], [0, 0, 1, 1], [], []>} : vector<32x256xf32>, vector<256x128xf32>, vector<32x128xf32> -> vector<32x128xf32>
    %47 = arith.addf %42, %46 : vector<32x128xf32>
    %c0_58 = arith.constant 0 : index
    %c0_59 = arith.constant 0 : index
    %48 = vector.load %arg11[%c0_58, %c0_59] : memref<32x1xf32, #tpu.memory_space<vmem>>, vector<32x1xf32>
    %49 = vector.broadcast %48 : vector<32x1xf32> to vector<32x128xf32>
    %50 = arith.mulf %47, %49 : vector<32x128xf32>
    %cst_60 = arith.constant dense<0.000000e+00> : vector<128xf32>
    %51 = vector.multi_reduction <add>, %50, %cst_60 [0] : vector<32x128xf32> to vector<128xf32>
    %52 = vector.shape_cast %51 : vector<128xf32> to vector<1x128xf32>
    %c0_61 = arith.constant 0 : index
    %c0_62 = arith.constant 0 : index
    %c0_63 = arith.constant 0 : index
    %53 = vector.load %arg10[%c0_61, %c0_62, %c0_63] : memref<1x3x128xf32, #tpu.memory_space<vmem>>, vector<1x3x128xf32>
    %54 = vector.shape_cast %53 : vector<1x3x128xf32> to vector<3x128xf32>
    %c0_64 = arith.constant 0 : index
    %c0_65 = arith.constant 0 : index
    %55 = vector.load %arg12[%c0_64, %c0_65] : memref<3x1xf32, #tpu.memory_space<vmem>>, vector<3x1xf32>
    %56 = vector.broadcast %55 : vector<3x1xf32> to vector<3x128xf32>
    %57 = arith.mulf %54, %56 : vector<3x128xf32>
    %cst_66 = arith.constant dense<0.000000e+00> : vector<128xf32>
    %58 = vector.multi_reduction <add>, %57, %cst_66 [0] : vector<3x128xf32> to vector<128xf32>
    %59 = vector.shape_cast %58 : vector<128xf32> to vector<1x128xf32>
    %60 = arith.addf %52, %59 : vector<1x128xf32>
    %c0_67 = arith.constant 0 : index
    %c0_68 = arith.constant 0 : index
    %61 = vector.load %arg13[%c0_67, %c0_68] : memref<1x1xf32, #tpu.memory_space<vmem>>, vector<1x1xf32>
    %62 = vector.broadcast %61 : vector<1x1xf32> to vector<1x128xf32>
    %63 = arith.addf %60, %62 : vector<1x128xf32>
    %c0_69 = arith.constant 0 : index
    %c0_70 = arith.constant 0 : index
    %c0_71 = arith.constant 0 : index
    %64 = vector.load %arg14[%c0_69, %c0_70, %c0_71] : memref<1x1x128xf32, #tpu.memory_space<vmem>>, vector<1x1x128xf32>
    %65 = vector.shape_cast %64 : vector<1x1x128xf32> to vector<1x128xf32>
    %66 = vector.shape_cast %63 : vector<1x128xf32> to vector<1x1x128xf32>
    tpu.vector_store %arg14[%c0_69, %c0_70, %c0_71], %66 {strides = array<i32>} : memref<1x1x128xf32, #tpu.memory_space<vmem>>, vector<1x1x128xf32>,
    return
  }
  func.func @transform_0(%arg0: i32, %arg1: i32) -> (i32, i32, i32, i32) {
    %c0_i32 = arith.constant 0 : i32
    %c0_i32_0 = arith.constant 0 : i32
    %c0_i32_1 = arith.constant 0 : i32
    return %arg0, %c0_i32, %c0_i32_0, %arg1 : i32, i32, i32, i32
  }
  func.func @transform_1(%arg0: i32, %arg1: i32) -> (i32, i32) {
    %c0_i32 = arith.constant 0 : i32
    %c0_i32_0 = arith.constant 0 : i32
    %c0_i32_1 = arith.constant 0 : i32
    return %c0_i32, %c0_i32_0 : i32, i32
  }
  func.func @transform_2(%arg0: i32, %arg1: i32) -> (i32, i32) {
    %c0_i32 = arith.constant 0 : i32
    %c0_i32_0 = arith.constant 0 : i32
    %c0_i32_1 = arith.constant 0 : i32
    return %c0_i32, %c0_i32_0 : i32, i32
  }
  func.func @transform_3(%arg0: i32, %arg1: i32) -> (i32, i32) {
    %c0_i32 = arith.constant 0 : i32
    %c0_i32_0 = arith.constant 0 : i32
    %c0_i32_1 = arith.constant 0 : i32
    return %c0_i32, %c0_i32_0 : i32, i32
  }
  func.func @transform_4(%arg0: i32, %arg1: i32) -> (i32, i32, i32, i32) {
    %c0_i32 = arith.constant 0 : i32
    %c0_i32_0 = arith.constant 0 : i32
    %c0_i32_1 = arith.constant 0 : i32
    return %arg0, %c0_i32, %c0_i32_0, %arg1 : i32, i32, i32, i32
  }
  func.func @transform_5(%arg0: i32, %arg1: i32) -> (i32, i32) {
    %c0_i32 = arith.constant 0 : i32
    %c0_i32_0 = arith.constant 0 : i32
    %c0_i32_1 = arith.constant 0 : i32
    return %c0_i32, %c0_i32_0 : i32, i32
  }
  func.func @transform_6(%arg0: i32, %arg1: i32) -> (i32, i32) {
    %c0_i32 = arith.constant 0 : i32
    %c0_i32_0 = arith.constant 0 : i32
    %c0_i32_1 = arith.constant 0 : i32
    return %c0_i32, %c0_i32_0 : i32, i32
  }
  func.func @transform_7(%arg0: i32, %arg1: i32) -> (i32, i32, i32) {
    %c0_i32 = arith.constant 0 : i32
    %c0_i32_0 = arith.constant 0 : i32
    %c0_i32_1 = arith.constant 0 : i32
    return %arg0, %c0_i32, %c0_i32_0 : i32, i32, i32
  }
  func.func @transform_8(%arg0: i32, %arg1: i32) -> (i32, i32, i32) {
    %c0_i32 = arith.constant 0 : i32
    %c0_i32_0 = arith.constant 0 : i32
    return %arg0, %c0_i32, %arg1 : i32, i32, i32
  }
  func.func @transform_9(%arg0: i32, %arg1: i32) -> (i32, i32) {
    %c0_i32 = arith.constant 0 : i32
    %c0_i32_0 = arith.constant 0 : i32
    %c0_i32_1 = arith.constant 0 : i32
    return %c0_i32, %c0_i32_0 : i32, i32
  }
  func.func @transform_10(%arg0: i32, %arg1: i32) -> (i32, i32) {
    %c0_i32 = arith.constant 0 : i32
    %c0_i32_0 = arith.constant 0 : i32
    %c0_i32_1 = arith.constant 0 : i32
    return %c0_i32, %c0_i32_0 : i32, i32
  }
  func.func @transform_11(%arg0: i32, %arg1: i32) -> (i32, i32) {
    %c0_i32 = arith.constant 0 : i32
    %c0_i32_0 = arith.constant 0 : i32
    %c0_i32_1 = arith.constant 0 : i32
    return %c0_i32, %c0_i32_0 : i32, i32
  }
  func.func @transform_12(%arg0: i32, %arg1: i32) -> (i32, i32, i32) {
    %c0_i32 = arith.constant 0 : i32
    %c0_i32_0 = arith.constant 0 : i32
    return %arg0, %c0_i32, %arg1 : i32, i32, i32
  }
}

</mosaic_0001>

<llo_original>
// kernel: _lambda_.1
$region0: #{_lambda_.1}
  #allocation0 [shape = 'u32[]', space=smem, size = 0x4, offset = 0x4, fixed_abs, tag = 'smem constant byte address 0x4 - core index']
  #allocation1 [shape = 'u32[144,128]{1,0:T(1,128)}', space=vmem, size = 0x12000, scoped, tag = 'internal scratch']
  #allocation2 [shape = 'f32[1,1]{1,0:T(1,128)S(1)}', space=vmem, size = 0x200, scoped, tag = 'scoped memory for _lambda_.1']
  %s0 = inlined_call_operand.vmem [shape: f32[2,3,8,128], index: 0, kind: input, shape index: {}]
  %s1 = inlined_call_operand.vmem [shape: f32[512,8], index: 1, kind: input, shape index: {}]
  %s2 = inlined_call_operand.vmem [shape: f32[512,8], index: 2, kind: input, shape index: {}]
  %s3 = inlined_call_operand.vmem [shape: f32[512,8], index: 3, kind: input, shape index: {}]
  %s4 = inlined_call_operand.vmem [shape: f32[2,3,16,128], index: 4, kind: input, shape index: {}]
  %s5 = inlined_call_operand.vmem [shape: f32[256,16], index: 5, kind: input, shape index: {}]
  %s6 = inlined_call_operand.vmem [shape: f32[256,16], index: 6, kind: input, shape index: {}]
  %s7 = inlined_call_operand.vmem [shape: f32[2,32,1280], index: 7, kind: input, shape index: {}]
  %s8 = inlined_call_operand.vmem [shape: f32[2,3,128], index: 8, kind: input, shape index: {}]
  %s9 = inlined_call_operand.vmem [shape: f32[32,1], index: 9, kind: input, shape index: {}]
  %s10 = inlined_call_operand.vmem [shape: f32[3,1], index: 10, kind: input, shape index: {}]
  %s11 = inlined_call_operand.<no memory space> [shape: f32[1,1], index: 11, kind: input, shape index: {}]
  %s12 = inlined_call_operand.hbm [shape: f32[2,1,128], index: 12, kind: output, shape index: {}]
  %s13 = sld [smem:[#allocation0]]
  $region81: #{_lambda_.1} parent=0
    _
  %s15 = ssub.s32 1, %s13
  %s16 = scalar_select 0, %s15, %s13
  %v17 = vstv %s11
  %18 = vst [vmem:[#allocation2] sm:$0x1] %v17
  $region1: #{_lambda_.1} parent=0
    #allocation3 [shape = 'u8[1024]{0}', space=vmem, size = 0x400, scoped, tag = 'output window, operand 0']
    #allocation4 [shape = 's32[2]{0}', space=sflag, size = 0x8, scoped, tag = 'scoped memory for _lambda_.1']
    %19 = vsyncpa [#allocation4], 0
    %s20 = scalar_lea.sflag [#allocation4], 1
    %21 = vsyncpa %s20, 0
    loop: start=0, step=1, limit=4
    $region2: #{_lambda_.1} parent=1 // loop_pre_header
      _
    $region3: #{_lambda_.1} parent=1 // loop_header
      %s23 = sphi 0, %s27
      %p24 = scmp.ge.s32.totalorder %s23, 4
      %s30 = sphi 0, %s42
      %s31 = sphi 0, %s38
      %s32 = sphi 0, %s30
      %s33 = sphi 0, %s31
      %s34 = sphi 0, %s32
      %s35 = sphi 0, %s33
      %s47 = sphi 0, %s49
      %s50 = sphi 0, %s47
      %s51 = sphi 0, %s50
      %s67 = sphi 0, %s51
      %s71 = sphi 0, %s71
      %s73 = sphi 0, %s71
      %s74 = sphi 0, %s73
      %s88 = sphi 0, %s74
      %s92 = sphi 0, %s92
      %s94 = sphi 0, %s92
      %s95 = sphi 0, %s94
      %s109 = sphi 0, %s95
      %s113 = sphi 0, %s113
      %s115 = sphi 0, %s113
      %s116 = sphi 0, %s115
      %s130 = sphi 0, %s116
      %s138 = sphi 0, %s140
      %s141 = sphi 0, %s138
      %s142 = sphi 0, %s141
      %s158 = sphi 0, %s142
      %s162 = sphi 0, %s162
      %s164 = sphi 0, %s162
      %s165 = sphi 0, %s164
      %s179 = sphi 0, %s165
      %s183 = sphi 0, %s183
      %s185 = sphi 0, %s183
      %s186 = sphi 0, %s185
      %s200 = sphi 0, %s186
      %s206 = sphi 0, %s208
      %s209 = sphi 0, %s206
      %s210 = sphi 0, %s209
      %s226 = sphi 0, %s210
      %s234 = sphi 0, %s236
      %s237 = sphi 0, %s234
      %s238 = sphi 0, %s237
      %s254 = sphi 0, %s238
      %s258 = sphi 0, %s258
      %s260 = sphi 0, %s258
      %s261 = sphi 0, %s260
      %s275 = sphi 0, %s261
      %s279 = sphi 0, %s279
      %s281 = sphi 0, %s279
      %s282 = sphi 0, %s281
      %s296 = sphi 0, %s282
      %s300 = sphi 0, %s300
      %s302 = sphi 0, %s300
      %s303 = sphi 0, %s302
      %s317 = sphi 0, %s303
      %s325 = sphi 0, %s327
      %s328 = sphi 0, %s325
      %s329 = sphi 0, %s328
      %s345 = sphi 0, %s329
    $region4: #{_lambda_.1} parent=1 // loop_header_branch
      %26 = sbr.rel (%p24) target = $region8
    $region5: #{_lambda_.1} parent=1 // loop_body
      %s28 = ssub.s32 %s23, 1
      %s29 = ssub.s32 %s23, 2
      %s36 = sadd.s32 1, %s31
      %p37 = scmp.ge.s32.totalorder %s36, 1
      %s38 = scalar_select %p37, 0, %s36
      %s39 = sadd.s32 1, %s30
      %s40 = scalar_select %p37, %s39, %s30
      %p41 = scmp.ge.s32.totalorder %s40, 2
      %s42 = scalar_select %p41, 0, %s40
      %s43 = ssub.s32 %s30, %s42
      %s44 = ssub.s32 %s31, %s38
      %s45 = sor.u32 %s43, %s44
      %p46 = scmp.eq.s32.totalorder %s45, 0
      %s48 = sadd.s32 %s47, 1
      %s49 = scalar_select %p46, %s47, %s48
      %p52 = pneg %p46
      %p53 = scmp.eq.s32.totalorder %s23, 1
      %p54 = por %p52, %p53
      %p55 = scmp.ne.s32.totalorder %s47, %s50
      %p56 = scmp.eq.s32.totalorder %s23, 0
      %p57 = por %p55, %p56
      %p58 = scmp.ne.s32.totalorder %s47, %s50
      %p59 = scmp.eq.s32.totalorder %s28, 1
      %p60 = por %p58, %p59
      %p61 = scmp.ne.s32.totalorder %s50, %s51
      %p62 = scmp.eq.s32.totalorder %s28, 0
      %p63 = por %p61, %p62
      %p64 = scmp.ne.s32.totalorder %s50, %s51
      %p65 = scmp.eq.s32.totalorder %s29, 1
      %p66 = por %p64, %p65
      %p68 = scmp.ne.s32.totalorder %s51, %s67
      %p69 = scmp.eq.s32.totalorder %s29, 0
      %p70 = por %p68, %p69
      %s72 = sadd.s32 %s71, 1
      %p75 = scmp.eq.s32.totalorder %s23, 1
      %p76 = scmp.ne.s32.totalorder %s71, %s73
      %p77 = scmp.eq.s32.totalorder %s23, 0
      %p78 = por %p76, %p77
      %p79 = scmp.ne.s32.totalorder %s71, %s73
      %p80 = scmp.eq.s32.totalorder %s28, 1
      %p81 = por %p79, %p80
      %p82 = scmp.ne.s32.totalorder %s73, %s74
      %p83 = scmp.eq.s32.totalorder %s28, 0
      %p84 = por %p82, %p83
      %p85 = scmp.ne.s32.totalorder %s73, %s74
      %p86 = scmp.eq.s32.totalorder %s29, 1
      %p87 = por %p85, %p86
      %p89 = scmp.ne.s32.totalorder %s74, %s88
      %p90 = scmp.eq.s32.totalorder %s29, 0
      %p91 = por %p89, %p90
      %s93 = sadd.s32 %s92, 1
      %p96 = scmp.eq.s32.totalorder %s23, 1
      %p97 = scmp.ne.s32.totalorder %s92, %s94
      %p98 = scmp.eq.s32.totalorder %s23, 0
      %p99 = por %p97, %p98
      %p100 = scmp.ne.s32.totalorder %s92, %s94
      %p101 = scmp.eq.s32.totalorder %s28, 1
      %p102 = por %p100, %p101
      %p103 = scmp.ne.s32.totalorder %s94, %s95
      %p104 = scmp.eq.s32.totalorder %s28, 0
      %p105 = por %p103, %p104
      %p106 = scmp.ne.s32.totalorder %s94, %s95
      %p107 = scmp.eq.s32.totalorder %s29, 1
      %p108 = por %p106, %p107
      %p110 = scmp.ne.s32.totalorder %s95, %s109
      %p111 = scmp.eq.s32.totalorder %s29, 0
      %p112 = por %p110, %p111
      %s114 = sadd.s32 %s113, 1
      %p117 = scmp.eq.s32.totalorder %s23, 1
      %p118 = scmp.ne.s32.totalorder %s113, %s115
      %p119 = scmp.eq.s32.totalorder %s23, 0
      %p120 = por %p118, %p119
      %p121 = scmp.ne.s32.totalorder %s113, %s115
      %p122 = scmp.eq.s32.totalorder %s28, 1
      %p123 = por %p121, %p122
      %p124 = scmp.ne.s32.totalorder %s115, %s116
      %p125 = scmp.eq.s32.totalorder %s28, 0
      %p126 = por %p124, %p125
      %p127 = scmp.ne.s32.totalorder %s115, %s116
      %p128 = scmp.eq.s32.totalorder %s29, 1
      %p129 = por %p127, %p128
      %p131 = scmp.ne.s32.totalorder %s116, %s130
      %p132 = scmp.eq.s32.totalorder %s29, 0
      %p133 = por %p131, %p132
      %s134 = ssub.s32 %s30, %s42
      %s135 = ssub.s32 %s31, %s38
      %s136 = sor.u32 %s134, %s135
      %p137 = scmp.eq.s32.totalorder %s136, 0
      %s139 = sadd.s32 %s138, 1
      %s140 = scalar_select %p137, %s138, %s139
      %p143 = pneg %p137
      %p144 = scmp.eq.s32.totalorder %s23, 1
      %p145 = por %p143, %p144
      %p146 = scmp.ne.s32.totalorder %s138, %s141
      %p147 = scmp.eq.s32.totalorder %s23, 0
      %p148 = por %p146, %p147
      %p149 = scmp.ne.s32.totalorder %s138, %s141
      %p150 = scmp.eq.s32.totalorder %s28, 1
      %p151 = por %p149, %p150
      %p152 = scmp.ne.s32.totalorder %s141, %s142
      %p153 = scmp.eq.s32.totalorder %s28, 0
      %p154 = por %p152, %p153
      %p155 = scmp.ne.s32.totalorder %s141, %s142
      %p156 = scmp.eq.s32.totalorder %s29, 1
      %p157 = por %p155, %p156
      %p159 = scmp.ne.s32.totalorder %s142, %s158
      %p160 = scmp.eq.s32.totalorder %s29, 0
      %p161 = por %p159, %p160
      %s163 = sadd.s32 %s162, 1
      %p166 = scmp.eq.s32.totalorder %s23, 1
      %p167 = scmp.ne.s32.totalorder %s162, %s164
      %p168 = scmp.eq.s32.totalorder %s23, 0
      %p169 = por %p167, %p168
      %p170 = scmp.ne.s32.totalorder %s162, %s164
      %p171 = scmp.eq.s32.totalorder %s28, 1
      %p172 = por %p170, %p171
      %p173 = scmp.ne.s32.totalorder %s164, %s165
      %p174 = scmp.eq.s32.totalorder %s28, 0
      %p175 = por %p173, %p174
      %p176 = scmp.ne.s32.totalorder %s164, %s165
      %p177 = scmp.eq.s32.totalorder %s29, 1
      %p178 = por %p176, %p177
      %p180 = scmp.ne.s32.totalorder %s165, %s179
      %p181 = scmp.eq.s32.totalorder %s29, 0
      %p182 = por %p180, %p181
      %s184 = sadd.s32 %s183, 1
      %p187 = scmp.eq.s32.totalorder %s23, 1
      %p188 = scmp.ne.s32.totalorder %s183, %s185
      %p189 = scmp.eq.s32.totalorder %s23, 0
      %p190 = por %p188, %p189
      %p191 = scmp.ne.s32.totalorder %s183, %s185
      %p192 = scmp.eq.s32.totalorder %s28, 1
      %p193 = por %p191, %p192
      %p194 = scmp.ne.s32.totalorder %s185, %s186
      %p195 = scmp.eq.s32.totalorder %s28, 0
      %p196 = por %p194, %p195
      %p197 = scmp.ne.s32.totalorder %s185, %s186
      %p198 = scmp.eq.s32.totalorder %s29, 1
      %p199 = por %p197, %p198
      %p201 = scmp.ne.s32.totalorder %s186, %s200
      %p202 = scmp.eq.s32.totalorder %s29, 0
      %p203 = por %p201, %p202
      %s204 = ssub.s32 %s30, %s42
      %p205 = scmp.eq.s32.totalorder %s204, 0
      %s207 = sadd.s32 %s206, 1
      %s208 = scalar_select %p205, %s206, %s207
      %p211 = pneg %p205
      %p212 = scmp.eq.s32.totalorder %s23, 1
      %p213 = por %p211, %p212
      %p214 = scmp.ne.s32.totalorder %s206, %s209
      %p215 = scmp.eq.s32.totalorder %s23, 0
      %p216 = por %p214, %p215
      %p217 = scmp.ne.s32.totalorder %s206, %s209
      %p218 = scmp.eq.s32.totalorder %s28, 1
      %p219 = por %p217, %p218
      %p220 = scmp.ne.s32.totalorder %s209, %s210
      %p221 = scmp.eq.s32.totalorder %s28, 0
      %p222 = por %p220, %p221
      %p223 = scmp.ne.s32.totalorder %s209, %s210
      %p224 = scmp.eq.s32.totalorder %s29, 1
      %p225 = por %p223, %p224
      %p227 = scmp.ne.s32.totalorder %s210, %s226
      %p228 = scmp.eq.s32.totalorder %s29, 0
      %p229 = por %p227, %p228
      %s230 = ssub.s32 %s30, %s42
      %s231 = ssub.s32 %s31, %s38
      %s232 = sor.u32 %s230, %s231
      %p233 = scmp.eq.s32.totalorder %s232, 0
      %s235 = sadd.s32 %s234, 1
      %s236 = scalar_select %p233, %s234, %s235
      %p239 = pneg %p233
      %p240 = scmp.eq.s32.totalorder %s23, 1
      %p241 = por %p239, %p240
      %p242 = scmp.ne.s32.totalorder %s234, %s237
      %p243 = scmp.eq.s32.totalorder %s23, 0
      %p244 = por %p242, %p243
      %p245 = scmp.ne.s32.totalorder %s234, %s237
      %p246 = scmp.eq.s32.totalorder %s28, 1
      %p247 = por %p245, %p246
      %p248 = scmp.ne.s32.totalorder %s237, %s238
      %p249 = scmp.eq.s32.totalorder %s28, 0
      %p250 = por %p248, %p249
      %p251 = scmp.ne.s32.totalorder %s237, %s238
      %p252 = scmp.eq.s32.totalorder %s29, 1
      %p253 = por %p251, %p252
      %p255 = scmp.ne.s32.totalorder %s238, %s254
      %p256 = scmp.eq.s32.totalorder %s29, 0
      %p257 = por %p255, %p256
      %s259 = sadd.s32 %s258, 1
      %p262 = scmp.eq.s32.totalorder %s23, 1
      %p263 = scmp.ne.s32.totalorder %s258, %s260
      %p264 = scmp.eq.s32.totalorder %s23, 0
      %p265 = por %p263, %p264
      %p266 = scmp.ne.s32.totalorder %s258, %s260
      %p267 = scmp.eq.s32.totalorder %s28, 1
      %p268 = por %p266, %p267
      %p269 = scmp.ne.s32.totalorder %s260, %s261
      %p270 = scmp.eq.s32.totalorder %s28, 0
      %p271 = por %p269, %p270
      %p272 = scmp.ne.s32.totalorder %s260, %s261
      %p273 = scmp.eq.s32.totalorder %s29, 1
      %p274 = por %p272, %p273
      %p276 = scmp.ne.s32.totalorder %s261, %s275
      %p277 = scmp.eq.s32.totalorder %s29, 0
      %p278 = por %p276, %p277
      %s280 = sadd.s32 %s279, 1
      %p283 = scmp.eq.s32.totalorder %s23, 1
      %p284 = scmp.ne.s32.totalorder %s279, %s281
      %p285 = scmp.eq.s32.totalorder %s23, 0
      %p286 = por %p284, %p285
      %p287 = scmp.ne.s32.totalorder %s279, %s281
      %p288 = scmp.eq.s32.totalorder %s28, 1
      %p289 = por %p287, %p288
      %p290 = scmp.ne.s32.totalorder %s281, %s282
      %p291 = scmp.eq.s32.totalorder %s28, 0
      %p292 = por %p290, %p291
      %p293 = scmp.ne.s32.totalorder %s281, %s282
      %p294 = scmp.eq.s32.totalorder %s29, 1
      %p295 = por %p293, %p294
      %p297 = scmp.ne.s32.totalorder %s282, %s296
      %p298 = scmp.eq.s32.totalorder %s29, 0
      %p299 = por %p297, %p298
      %s301 = sadd.s32 %s300, 1
      %p304 = scmp.eq.s32.totalorder %s23, 1
      %p305 = scmp.ne.s32.totalorder %s300, %s302
      %p306 = scmp.eq.s32.totalorder %s23, 0
      %p307 = por %p305, %p306
      %p308 = scmp.ne.s32.totalorder %s300, %s302
      %p309 = scmp.eq.s32.totalorder %s28, 1
      %p310 = por %p308, %p309
      %p311 = scmp.ne.s32.totalorder %s302, %s303
      %p312 = scmp.eq.s32.totalorder %s28, 0
      %p313 = por %p311, %p312
      %p314 = scmp.ne.s32.totalorder %s302, %s303
      %p315 = scmp.eq.s32.totalorder %s29, 1
      %p316 = por %p314, %p315
      %p318 = scmp.ne.s32.totalorder %s303, %s317
      %p319 = scmp.eq.s32.totalorder %s29, 0
      %p320 = por %p318, %p319
      %s321 = ssub.s32 %s30, %s42
      %s322 = ssub.s32 %s31, %s38
      %s323 = sor.u32 %s321, %s322
      %p324 = scmp.eq.s32.totalorder %s323, 0
      %s326 = sadd.s32 %s325, 1
      %s327 = scalar_select %p324, %s325, %s326
      %p330 = pneg %p324
      %p331 = scmp.eq.s32.totalorder %s23, 1
      %p332 = por %p330, %p331
      %p333 = scmp.ne.s32.totalorder %s325, %s328
      %p334 = scmp.eq.s32.totalorder %s23, 0
      %p335 = por %p333, %p334
      %p336 = scmp.ne.s32.totalorder %s325, %s328
      %p337 = scmp.eq.s32.totalorder %s28, 1
      %p338 = por %p336, %p337
      %p339 = scmp.ne.s32.totalorder %s328, %s329
      %p340 = scmp.eq.s32.totalorder %s28, 0
      %p341 = por %p339, %p340
      %p342 = scmp.ne.s32.totalorder %s328, %s329
      %p343 = scmp.eq.s32.totalorder %s29, 1
      %p344 = por %p342, %p343
      %p346 = scmp.ne.s32.totalorder %s329, %s345
      %p347 = scmp.eq.s32.totalorder %s29, 0
      %p348 = por %p346, %p347
      %p349 = scmp.le.s32.totalorder 1, %s23
      %p350 = scmp.lt.s32.totalorder %s23, 3
      %p351 = pnand %p349, %p350
      %p352 = pneg %p351
      // Predicated region
      $region9: #{_lambda_.1} parent=5 // pred_check
        _
      $region10: #{_lambda_.1} parent=5 // pred_check_branch
        %354 = sbr.rel (%p351) target = $region12
      $region11: #{_lambda_.1} parent=5 // pred_region
        %s355 = ssub.s32 %s23, 1
        // Predicated region
        $region13: #{_lambda_.1} parent=11 // pred_check
          %p356 = pneg %p84
        $region14: #{_lambda_.1} parent=11 // pred_check_branch
          %358 = sbr.rel (%p356) target = $region16
        $region15: #{_lambda_.1} parent=11 // pred_region
          _
        $region16: #{_lambda_.1} parent=11 // pred_fallthru
          _
        // Predicated region
        $region17: #{_lambda_.1} parent=11 // pred_check
          %p359 = pneg %p105
        $region18: #{_lambda_.1} parent=11 // pred_check_branch
          %361 = sbr.rel (%p359) target = $region20
        $region19: #{_lambda_.1} parent=11 // pred_region
          _
        $region20: #{_lambda_.1} parent=11 // pred_fallthru
          _
        // Predicated region
        $region21: #{_lambda_.1} parent=11 // pred_check
          %p362 = pneg %p126
        $region22: #{_lambda_.1} parent=11 // pred_check_branch
          %364 = sbr.rel (%p362) target = $region24
        $region23: #{_lambda_.1} parent=11 // pred_region
          _
        $region24: #{_lambda_.1} parent=11 // pred_fallthru
          _
        // Predicated region
        $region25: #{_lambda_.1} parent=11 // pred_check
          %p365 = pneg %p175
        $region26: #{_lambda_.1} parent=11 // pred_check_branch
          %367 = sbr.rel (%p365) target = $region28
        $region27: #{_lambda_.1} parent=11 // pred_region
          _
        $region28: #{_lambda_.1} parent=11 // pred_fallthru
          _
        // Predicated region
        $region29: #{_lambda_.1} parent=11 // pred_check
          %p368 = pneg %p196
        $region30: #{_lambda_.1} parent=11 // pred_check_branch
          %370 = sbr.rel (%p368) target = $region32
        $region31: #{_lambda_.1} parent=11 // pred_region
          _
        $region32: #{_lambda_.1} parent=11 // pred_fallthru
          _
        // Predicated region
        $region33: #{_lambda_.1} parent=11 // pred_check
          %p371 = pneg %p271
        $region34: #{_lambda_.1} parent=11 // pred_check_branch
          %373 = sbr.rel (%p371) target = $region36
        $region35: #{_lambda_.1} parent=11 // pred_region
          _
        $region36: #{_lambda_.1} parent=11 // pred_fallthru
          _
        // Predicated region
        $region37: #{_lambda_.1} parent=11 // pred_check
          %p374 = pneg %p292
        $region38: #{_lambda_.1} parent=11 // pred_check_branch
          %376 = sbr.rel (%p374) target = $region40
        $region39: #{_lambda_.1} parent=11 // pred_region
          _
        $region40: #{_lambda_.1} parent=11 // pred_fallthru
          _
        // Predicated region
        $region41: #{_lambda_.1} parent=11 // pred_check
          %p377 = pneg %p313
        $region42: #{_lambda_.1} parent=11 // pred_check_branch
          %379 = sbr.rel (%p377) target = $region44
        $region43: #{_lambda_.1} parent=11 // pred_region
          _
        $region44: #{_lambda_.1} parent=11 // pred_fallthru
          _
      $region12: #{_lambda_.1} parent=5 // pred_fallthru
        _
      %p380 = scmp.lt.s32.totalorder %s23, 2
      // Predicated region
      $region45: #{_lambda_.1} parent=5 // pred_check
        %p381 = pneg %p380
      $region46: #{_lambda_.1} parent=5 // pred_check_branch
        %383 = sbr.rel (%p381) target = $region48
      $region47: #{_lambda_.1} parent=5 // pred_region
        // Predicated region
        $region49: #{_lambda_.1} parent=47 // pred_check
          %p384 = pneg %p57
        $region50: #{_lambda_.1} parent=47 // pred_check_branch
          %386 = sbr.rel (%p384) target = $region52
        $region51: #{_lambda_.1} parent=47 // pred_region
          %p387 = scmp.lt.s32.totalorder %s30, 1
          %s388 = scalar_select %p387, %s30, 1
          %p389 = scmp.lt.s32.totalorder %s31, 0
          %s390 = scalar_select %p389, %s31, 0
          %s391 = smul.addr %s388, 3
          %s392 = sadd.s32 %s390, %s391
          %s393 = smul.addr %s392, 8
          %s394 = scalar_lea.vmem %s0, %s393
        $region52: #{_lambda_.1} parent=47 // pred_fallthru
          _
        // Predicated region
        $region53: #{_lambda_.1} parent=47 // pred_check
          %p395 = pneg %p148
        $region54: #{_lambda_.1} parent=47 // pred_check_branch
          %397 = sbr.rel (%p395) target = $region56
        $region55: #{_lambda_.1} parent=47 // pred_region
          %p398 = scmp.lt.s32.totalorder %s30, 1
          %s399 = scalar_select %p398, %s30, 1
          %p400 = scmp.lt.s32.totalorder %s31, 0
          %s401 = scalar_select %p400, %s31, 0
          %s402 = smul.addr %s399, 6
          %s403 = sadd.s32 %s401, %s402
          %s404 = smul.addr %s403, 8
          %s405 = scalar_lea.vmem %s4, %s404
        $region56: #{_lambda_.1} parent=47 // pred_fallthru
          _
        // Predicated region
        $region57: #{_lambda_.1} parent=47 // pred_check
          %p406 = pneg %p216
        $region58: #{_lambda_.1} parent=47 // pred_check_branch
          %408 = sbr.rel (%p406) target = $region60
        $region59: #{_lambda_.1} parent=47 // pred_region
          %p409 = scmp.lt.s32.totalorder %s30, 1
          %s410 = scalar_select %p409, %s30, 1
          %s411 = smul.addr %s410, 40
          %s412 = smul.addr %s411, 8
          %s413 = scalar_lea.vmem %s7, %s412
        $region60: #{_lambda_.1} parent=47 // pred_fallthru
          _
        // Predicated region
        $region61: #{_lambda_.1} parent=47 // pred_check
          %p414 = pneg %p244
        $region62: #{_lambda_.1} parent=47 // pred_check_branch
          %416 = sbr.rel (%p414) target = $region64
        $region63: #{_lambda_.1} parent=47 // pred_region
          %p417 = scmp.lt.s32.totalorder %s30, 1
          %s418 = scalar_select %p417, %s30, 1
          %p419 = scmp.lt.s32.totalorder %s31, 0
          %s420 = scalar_select %p419, %s31, 0
          %s421 = sadd.s32 %s420, %s418
          %s422 = smul.addr %s421, 4
          %s423 = scalar_lea.vmem %s8, %s422
        $region64: #{_lambda_.1} parent=47 // pred_fallthru
          _
      $region48: #{_lambda_.1} parent=5 // pred_fallthru
        _
      %p424 = scmp.le.s32.totalorder 1, %s23
      %p425 = scmp.lt.s32.totalorder %s23, 3
      %p426 = pnand %p424, %p425
      %p427 = pneg %p426
      // Predicated region
      $region65: #{_lambda_.1} parent=5 // pred_check
        _
      $region66: #{_lambda_.1} parent=5 // pred_check_branch
        %429 = sbr.rel (%p426) target = $region68
      $region67: #{_lambda_.1} parent=5 // pred_region
        %s430 = ssub.s32 %s23, 1
        %p431 = scmp.lt.s32.totalorder %s32, 1
        %s432 = scalar_select %p431, %s32, 1
        %p433 = scmp.lt.s32.totalorder %s33, 0
        %s434 = scalar_select %p433, %s33, 0
        %s435 = smul.addr %s432, 3
        %s436 = sadd.s32 %s434, %s435
        %s437 = smul.addr %s436, 8
        %s438 = scalar_lea.vmem %s0, %s437
        %p439 = pneg %p63
        %p440 = pneg %p60
        %p441 = pneg %p84
        %p442 = pneg %p81
        %p443 = pneg %p105
        %p444 = pneg %p102
        %p445 = pneg %p126
        %p446 = pneg %p123
        %p447 = scmp.lt.s32.totalorder %s32, 1
        %s448 = scalar_select %p447, %s32, 1
        %p449 = scmp.lt.s32.totalorder %s33, 0
        %s450 = scalar_select %p449, %s33, 0
        %s451 = smul.addr %s448, 6
        %s452 = sadd.s32 %s450, %s451
        %s453 = smul.addr %s452, 8
        %s454 = scalar_lea.vmem %s4, %s453
        %p455 = pneg %p154
        %p456 = pneg %p151
        %p457 = pneg %p175
        %p458 = pneg %p172
        %p459 = pneg %p196
        %p460 = pneg %p193
        %p461 = scmp.lt.s32.totalorder %s32, 1
        %s462 = scalar_select %p461, %s32, 1
        %s463 = smul.addr %s462, 40
        %s464 = smul.addr %s463, 8
        %s465 = scalar_lea.vmem %s7, %s464
        %p466 = pneg %p222
        %p467 = pneg %p219
        %p468 = scmp.lt.s32.totalorder %s32, 1
        %s469 = scalar_select %p468, %s32, 1
        %p470 = scmp.lt.s32.totalorder %s33, 0
        %s471 = scalar_select %p470, %s33, 0
        %s472 = sadd.s32 %s471, %s469
        %s473 = smul.addr %s472, 4
        %s474 = scalar_lea.vmem %s8, %s473
        %p475 = pneg %p250
        %p476 = pneg %p247
        %p477 = pneg %p271
        %p478 = pneg %p268
        %p479 = pneg %p292
        %p480 = pneg %p289
        %p481 = pneg %p313
        %p482 = pneg %p310
        %p483 = pneg %p341
        %p484 = pneg %p338
        %s485 = sand.u32 %s328, 1
        %s486 = scalar_lea.sflag [#allocation4], %s485
        %s487 = sand.u32 %s328, 1
        %s488 = scalar_lea.vmem [#allocation3], %s487
        %p489 = scmp.lt.s32.totalorder %s32, 1
        %s490 = scalar_select %p489, %s32, 1
        %p491 = scmp.lt.s32.totalorder %s33, 0
        %s492 = scalar_select %p491, %s33, 0
        %s493 = smul.addr %s490, 3
        %s494 = sadd.s32 %s492, %s493
        %s495 = smul.addr %s494, 8
        %s496 = scalar_lea.vmem %s0, %s495
        %p497 = scmp.lt.s32.totalorder %s32, 1
        %s498 = scalar_select %p497, %s32, 1
        %p499 = scmp.lt.s32.totalorder %s33, 0
        %s500 = scalar_select %p499, %s33, 0
        %s501 = smul.addr %s498, 6
        %s502 = sadd.s32 %s500, %s501
        %s503 = smul.addr %s502, 8
        %s504 = scalar_lea.vmem %s4, %s503
        %p505 = scmp.lt.s32.totalorder %s32, 1
        %s506 = scalar_select %p505, %s32, 1
        %s507 = smul.addr %s506, 40
        %s508 = smul.addr %s507, 8
        %s509 = scalar_lea.vmem %s7, %s508
        %p510 = scmp.lt.s32.totalorder %s32, 1
        %s511 = scalar_select %p510, %s32, 1
        %p512 = scmp.lt.s32.totalorder %s33, 0
        %s513 = scalar_select %p512, %s33, 0
        %s514 = sadd.s32 %s513, %s511
        %s515 = smul.addr %s514, 4
        %s516 = scalar_lea.vmem %s8, %s515
        %v517 = vld [vmem:[%s1] sm:$0xff]
        %v518 = vld [vmem:[%s1 + $0x8] sm:$0xff]
        %v519 = vld [vmem:[%s1 + $0x10] sm:$0xff]
        %v520 = vld [vmem:[%s1 + $0x18] sm:$0xff]
        %v521 = vld [vmem:[%s1 + $0x20] sm:$0xff]
        %v522 = vld [vmem:[%s1 + $0x28] sm:$0xff]
        %v523 = vld [vmem:[%s1 + $0x30] sm:$0xff]
        %v524 = vld [vmem:[%s1 + $0x38] sm:$0xff]
        %v525 = vld [vmem:[%s1 + $0x40] sm:$0xff]
        %v526 = vld [vmem:[%s1 + $0x48] sm:$0xff]
        %v527 = vld [vmem:[%s1 + $0x50] sm:$0xff]
        %v528 = vld [vmem:[%s1 + $0x58] sm:$0xff]
        %v529 = vld [vmem:[%s1 + $0x60] sm:$0xff]
        %v530 = vld [vmem:[%s1 + $0x68] sm:$0xff]
        %v531 = vld [vmem:[%s1 + $0x70] sm:$0xff]
        %v532 = vld [vmem:[%s1 + $0x78] sm:$0xff]
        %v533 = vld [vmem:[%s1 + $0x80] sm:$0xff]
        %v534 = vld [vmem:[%s1 + $0x88] sm:$0xff]
        %v535 = vld [vmem:[%s1 + $0x90] sm:$0xff]
        %v536 = vld [vmem:[%s1 + $0x98] sm:$0xff]
        %v537 = vld [vmem:[%s1 + $0xa0] sm:$0xff]
        %v538 = vld [vmem:[%s1 + $0xa8] sm:$0xff]
        %v539 = vld [vmem:[%s1 + $0xb0] sm:$0xff]
        %v540 = vld [vmem:[%s1 + $0xb8] sm:$0xff]
        %v541 = vld [vmem:[%s1 + $0xc0] sm:$0xff]
        %v542 = vld [vmem:[%s1 + $0xc8] sm:$0xff]
        %v543 = vld [vmem:[%s1 + $0xd0] sm:$0xff]
        %v544 = vld [vmem:[%s1 + $0xd8] sm:$0xff]
        %v545 = vld [vmem:[%s1 + $0xe0] sm:$0xff]
        %v546 = vld [vmem:[%s1 + $0xe8] sm:$0xff]
        %v547 = vld [vmem:[%s1 + $0xf0] sm:$0xff]
        %v548 = vld [vmem:[%s1 + $0xf8] sm:$0xff]
        %v549 = vld [vmem:[%s1 + $0x100] sm:$0xff]
        %v550 = vld [vmem:[%s1 + $0x108] sm:$0xff]
        %v551 = vld [vmem:[%s1 + $0x110] sm:$0xff]
        %v552 = vld [vmem:[%s1 + $0x118] sm:$0xff]
        %v553 = vld [vmem:[%s1 + $0x120] sm:$0xff]
        %v554 = vld [vmem:[%s1 + $0x128] sm:$0xff]
        %v555 = vld [vmem:[%s1 + $0x130] sm:$0xff]
        %v556 = vld [vmem:[%s1 + $0x138] sm:$0xff]
        %v557 = vld [vmem:[%s1 + $0x140] sm:$0xff]
        %v558 = vld [vmem:[%s1 + $0x148] sm:$0xff]
        %v559 = vld [vmem:[%s1 + $0x150] sm:$0xff]
        %v560 = vld [vmem:[%s1 + $0x158] sm:$0xff]
        %v561 = vld [vmem:[%s1 + $0x160] sm:$0xff]
        %v562 = vld [vmem:[%s1 + $0x168] sm:$0xff]
        %v563 = vld [vmem:[%s1 + $0x170] sm:$0xff]
        %v564 = vld [vmem:[%s1 + $0x178] sm:$0xff]
        %v565 = vld [vmem:[%s1 + $0x180] sm:$0xff]
        %v566 = vld [vmem:[%s1 + $0x188] sm:$0xff]
        %v567 = vld [vmem:[%s1 + $0x190] sm:$0xff]
        %v568 = vld [vmem:[%s1 + $0x198] sm:$0xff]
        %v569 = vld [vmem:[%s1 + $0x1a0] sm:$0xff]
        %v570 = vld [vmem:[%s1 + $0x1a8] sm:$0xff]
        %v571 = vld [vmem:[%s1 + $0x1b0] sm:$0xff]
        %v572 = vld [vmem:[%s1 + $0x1b8] sm:$0xff]
        %v573 = vld [vmem:[%s1 + $0x1c0] sm:$0xff]
        %v574 = vld [vmem:[%s1 + $0x1c8] sm:$0xff]
        %v575 = vld [vmem:[%s1 + $0x1d0] sm:$0xff]
        %v576 = vld [vmem:[%s1 + $0x1d8] sm:$0xff]
        %v577 = vld [vmem:[%s1 + $0x1e0] sm:$0xff]
        %v578 = vld [vmem:[%s1 + $0x1e8] sm:$0xff]
        %v579 = vld [vmem:[%s1 + $0x1f0] sm:$0xff]
        %v580 = vld [vmem:[%s1 + $0x1f8] sm:$0xff]
        %s581 = scalar_lea.vmem %s496, 16
        %v582 = vld [vmem:[%s581] sm:$0xff]
        %vm583 = vcmask 64512
        %v585 = vsel %vm583, %v517, 0
        %v588 = vsel %vm583, %v518, 0
        %v591 = vsel %vm583, %v519, 0
        %v594 = vsel %vm583, %v520, 0
        %v597 = vsel %vm583, %v521, 0
        %v600 = vsel %vm583, %v522, 0
        %v603 = vsel %vm583, %v523, 0
        %v606 = vsel %vm583, %v524, 0
        %v609 = vsel %vm583, %v525, 0
        %v612 = vsel %vm583, %v526, 0
        %v615 = vsel %vm583, %v527, 0
        %v618 = vsel %vm583, %v528, 0
        %v621 = vsel %vm583, %v529, 0
        %v624 = vsel %vm583, %v530, 0
        %v627 = vsel %vm583, %v531, 0
        %v630 = vsel %vm583, %v532, 0
        %v633 = vsel %vm583, %v533, 0
        %v636 = vsel %vm583, %v534, 0
        %v639 = vsel %vm583, %v535, 0
        %v642 = vsel %vm583, %v536, 0
        %v645 = vsel %vm583, %v537, 0
        %v648 = vsel %vm583, %v538, 0
        %v651 = vsel %vm583, %v539, 0
        %v654 = vsel %vm583, %v540, 0
        %v657 = vsel %vm583, %v541, 0
        %v660 = vsel %vm583, %v542, 0
        %v663 = vsel %vm583, %v543, 0
        %v666 = vsel %vm583, %v544, 0
        %v669 = vsel %vm583, %v545, 0
        %v672 = vsel %vm583, %v546, 0
        %v675 = vsel %vm583, %v547, 0
        %v678 = vsel %vm583, %v548, 0
        %v681 = vsel %vm583, %v549, 0
        %v684 = vsel %vm583, %v550, 0
        %v687 = vsel %vm583, %v551, 0
        %v690 = vsel %vm583, %v552, 0
        %v693 = vsel %vm583, %v553, 0
        %v696 = vsel %vm583, %v554, 0
        %v699 = vsel %vm583, %v555, 0
        %v702 = vsel %vm583, %v556, 0
        %v705 = vsel %vm583, %v557, 0
        %v708 = vsel %vm583, %v558, 0
        %v711 = vsel %vm583, %v559, 0
        %v714 = vsel %vm583, %v560, 0
        %v717 = vsel %vm583, %v561, 0
        %v720 = vsel %vm583, %v562, 0
        %v723 = vsel %vm583, %v563, 0
        %v726 = vsel %vm583, %v564, 0
        %v729 = vsel %vm583, %v565, 0
        %v732 = vsel %vm583, %v566, 0
        %v735 = vsel %vm583, %v567, 0
        %v738 = vsel %vm583, %v568, 0
        %v741 = vsel %vm583, %v569, 0
        %v744 = vsel %vm583, %v570, 0
        %v747 = vsel %vm583, %v571, 0
        %v750 = vsel %vm583, %v572, 0
        %v753 = vsel %vm583, %v573, 0
        %v756 = vsel %vm583, %v574, 0
        %v759 = vsel %vm583, %v575, 0
        %v762 = vsel %vm583, %v576, 0
        %v765 = vsel %vm583, %v577, 0
        %v768 = vsel %vm583, %v578, 0
        %v771 = vsel %vm583, %v579, 0
        %v774 = vsel %vm583, %v580, 0
        %776 = vmatprep.subr.mxu0 0.0
        %777 = vmatpush1.msra.mxu0 %v582
        %778 = vmatprep.subr.mxu0 0.0
        %779 = vmatpush1.msra.mxu0 0.0
        %780 = vmatprep.subr.mxu0 0.0
        %781 = vmatpush1.msra.mxu0 0.0
        %782 = vmatprep.subr.mxu0 0.0
        %783 = vmatpush1.msra.mxu0 0.0
        %784 = vmatprep.subr.mxu0 0.0
        %785 = vmatpush1.msra.mxu0 0.0
        %786 = vmatprep.subr.mxu0 0.0
        %787 = vmatpush1.msra.mxu0 0.0
        %788 = vmatprep.subr.mxu0 0.0
        %789 = vmatpush1.msra.mxu0 0.0
        %790 = vmatprep.subr.mxu0 0.0
        %791 = vmatpush1.msra.mxu0 0.0
        %792 = vmatprep.subr.mxu0 0.0
        %793 = vmatpush1.msra.mxu0 0.0
        %794 = vmatprep.subr.mxu0 0.0
        %795 = vmatpush1.msra.mxu0 0.0
        %796 = vmatprep.subr.mxu0 0.0
        %797 = vmatpush1.msra.mxu0 0.0
        %798 = vmatprep.subr.mxu0 0.0
        %799 = vmatpush1.msra.mxu0 0.0
        %800 = vmatprep.subr.mxu0 0.0
        %801 = vmatpush1.msra.mxu0 0.0
        %802 = vmatprep.subr.mxu0 0.0
        %803 = vmatpush1.msra.mxu0 0.0
        %804 = vmatprep.subr.mxu0 0.0
        %805 = vmatpush1.msra.mxu0 0.0
        %806 = vmatprep.subr.mxu0 0.0
        %807 = vmatpush1.msra.mxu0 0.0
        %808 = vmatprep.subr.mxu0 0.0
        %809 = vmatpush1.msra.mxu0 0.0
        %810 = vmatprep.subr.mxu0 0.0
        %811 = vmatpush1.msra.mxu0 0.0
        %812 = vmatprep.subr.mxu0 0.0
        %813 = vmatpush1.msra.mxu0 0.0
        %814 = vmatprep.subr.mxu0 0.0
        %815 = vmatpush1.msra.mxu0 0.0
        %816 = vmatprep.subr.mxu0 0.0
        %817 = vmatpush1.msra.mxu0 0.0
        %818 = vmatprep.subr.mxu0 0.0
        %819 = vmatpush1.msra.mxu0 0.0
        %820 = vmatprep.subr.mxu0 0.0
        %821 = vmatpush1.msra.mxu0 0.0
        %822 = vmatprep.subr.mxu0 0.0
        %823 = vmatpush1.msra.mxu0 0.0
        %824 = vmatprep.subr.mxu0 0.0
        %825 = vmatpush1.msra.mxu0 0.0
        %826 = vmatprep.subr.mxu0 0.0
        %827 = vmatpush1.msra.mxu0 0.0
        %828 = vmatprep.subr.mxu0 0.0
        %829 = vmatpush1.msra.mxu0 0.0
        %830 = vmatprep.subr.mxu0 0.0
        %831 = vmatpush1.msra.mxu0 0.0
        %832 = vmatprep.subr.mxu0 0.0
        %833 = vmatpush1.msra.mxu0 0.0
        %834 = vmatprep.subr.mxu0 0.0
        %835 = vmatpush1.msra.mxu0 0.0
        %836 = vmatprep.subr.mxu0 0.0
        %837 = vmatpush1.msra.mxu0 0.0
        %838 = vmatprep.subr.mxu0 0.0
        %839 = vmatpush1.msra.mxu0 0.0
        %840 = vmatprep.mubr.f32.mxu0 0.0
        %841 = vmatmul.mubr.f32.gmra.mrb[0].mxu0 %v585
        %v842 = vpop.f32.mrb[0].mxu0
        %v843 = vadd.f32 0.0, %v842
        %v844 = vpop.f32.mrb[0].mxu0
        %845 = vmatprep.mubr.f32.mxu0 0.0
        %846 = vmatmul.mubr.f32.gmra.mrb[0].mxu0 %v588
        %v847 = vpop.f32.mrb[0].mxu0
        %v848 = vadd.f32 0.0, %v847
        %v849 = vpop.f32.mrb[0].mxu0
        %850 = vmatprep.mubr.f32.mxu0 0.0
        %851 = vmatmul.mubr.f32.gmra.mrb[0].mxu0 %v591
        %v852 = vpop.f32.mrb[0].mxu0
        %v853 = vadd.f32 0.0, %v852
        %v854 = vpop.f32.mrb[0].mxu0
        %855 = vmatprep.mubr.f32.mxu0 0.0
        %856 = vmatmul.mubr.f32.gmra.mrb[0].mxu0 %v594
        %v857 = vpop.f32.mrb[0].mxu0
        %v858 = vadd.f32 0.0, %v857
        %v859 = vpop.f32.mrb[0].mxu0
        %860 = vmatprep.mubr.f32.mxu0 0.0
        %861 = vmatmul.mubr.f32.gmra.mrb[0].mxu0 %v597
        %v862 = vpop.f32.mrb[0].mxu0
        %v863 = vadd.f32 0.0, %v862
        %v864 = vpop.f32.mrb[0].mxu0
        %865 = vmatprep.mubr.f32.mxu0 0.0
        %866 = vmatmul.mubr.f32.gmra.mrb[0].mxu0 %v600
        %v867 = vpop.f32.mrb[0].mxu0
        %v868 = vadd.f32 0.0, %v867
        %v869 = vpop.f32.mrb[0].mxu0
        %870 = vmatprep.mubr.f32.mxu0 0.0
        %871 = vmatmul.mubr.f32.gmra.mrb[0].mxu0 %v603
        %v872 = vpop.f32.mrb[0].mxu0
        %v873 = vadd.f32 0.0, %v872
        %v874 = vpop.f32.mrb[0].mxu0
        %875 = vmatprep.mubr.f32.mxu0 0.0
        %876 = vmatmul.mubr.f32.gmra.mrb[0].mxu0 %v606
        %v877 = vpop.f32.mrb[0].mxu0
        %v878 = vadd.f32 0.0, %v877
        %v879 = vpop.f32.mrb[0].mxu0
        %880 = vmatprep.mubr.f32.mxu0 0.0
        %881 = vmatmul.mubr.f32.gmra.mrb[0].mxu0 %v609
        %v882 = vpop.f32.mrb[0].mxu0
        %v883 = vadd.f32 0.0, %v882
        %v884 = vpop.f32.mrb[0].mxu0
        %885 = vmatprep.mubr.f32.mxu0 0.0
        %886 = vmatmul.mubr.f32.gmra.mrb[0].mxu0 %v612
        %v887 = vpop.f32.mrb[0].mxu0
        %v888 = vadd.f32 0.0, %v887
        %v889 = vpop.f32.mrb[0].mxu0
        %890 = vmatprep.mubr.f32.mxu0 0.0
        %891 = vmatmul.mubr.f32.gmra.mrb[0].mxu0 %v615
        %v892 = vpop.f32.mrb[0].mxu0
        %v893 = vadd.f32 0.0, %v892
        %v894 = vpop.f32.mrb[0].mxu0
        %895 = vmatprep.mubr.f32.mxu0 0.0
        %896 = vmatmul.mubr.f32.gmra.mrb[0].mxu0 %v618
        %v897 = vpop.f32.mrb[0].mxu0
        %v898 = vadd.f32 0.0, %v897
        %v899 = vpop.f32.mrb[0].mxu0
        %900 = vmatprep.mubr.f32.mxu0 0.0
        %901 = vmatmul.mubr.f32.gmra.mrb[0].mxu0 %v621
        %v902 = vpop.f32.mrb[0].mxu0
        %v903 = vadd.f32 0.0, %v902
        %v904 = vpop.f32.mrb[0].mxu0
        %905 = vmatprep.mubr.f32.mxu0 0.0
        %906 = vmatmul.mubr.f32.gmra.mrb[0].mxu0 %v624
        %v907 = vpop.f32.mrb[0].mxu0
        %v908 = vadd.f32 0.0, %v907
        %v909 = vpop.f32.mrb[0].mxu0
        %910 = vmatprep.mubr.f32.mxu0 0.0
        %911 = vmatmul.mubr.f32.gmra.mrb[0].mxu0 %v627
        %v912 = vpop.f32.mrb[0].mxu0
        %v913 = vadd.f32 0.0, %v912
        %v914 = vpop.f32.mrb[0].mxu0
        %915 = vmatprep.mubr.f32.mxu0 0.0
        %916 = vmatmul.mubr.f32.gmra.mrb[0].mxu0 %v630
        %v917 = vpop.f32.mrb[0].mxu0
        %v918 = vadd.f32 0.0, %v917
        %v919 = vpop.f32.mrb[0].mxu0
        %920 = vmatprep.mubr.f32.mxu0 0.0
        %921 = vmatmul.mubr.f32.gmra.mrb[0].mxu0 %v633
        %v922 = vpop.f32.mrb[0].mxu0
        %v923 = vadd.f32 0.0, %v922
        %v924 = vpop.f32.mrb[0].mxu0
        %925 = vmatprep.mubr.f32.mxu0 0.0
        %926 = vmatmul.mubr.f32.gmra.mrb[0].mxu0 %v636
        %v927 = vpop.f32.mrb[0].mxu0
        %v928 = vadd.f32 0.0, %v927
        %v929 = vpop.f32.mrb[0].mxu0
        %930 = vmatprep.mubr.f32.mxu0 0.0
        %931 = vmatmul.mubr.f32.gmra.mrb[0].mxu0 %v639
        %v932 = vpop.f32.mrb[0].mxu0
        %v933 = vadd.f32 0.0, %v932
        %v934 = vpop.f32.mrb[0].mxu0
        %935 = vmatprep.mubr.f32.mxu0 0.0
        %936 = vmatmul.mubr.f32.gmra.mrb[0].mxu0 %v642
        %v937 = vpop.f32.mrb[0].mxu0
        %v938 = vadd.f32 0.0, %v937
        %v939 = vpop.f32.mrb[0].mxu0
        %940 = vmatprep.mubr.f32.mxu0 0.0
        %941 = vmatmul.mubr.f32.gmra.mrb[0].mxu0 %v645
        %v942 = vpop.f32.mrb[0].mxu0
        %v943 = vadd.f32 0.0, %v942
        %v944 = vpop.f32.mrb[0].mxu0
        %945 = vmatprep.mubr.f32.mxu0 0.0
        %946 = vmatmul.mubr.f32.gmra.mrb[0].mxu0 %v648
        %v947 = vpop.f32.mrb[0].mxu0
        %v948 = vadd.f32 0.0, %v947
        %v949 = vpop.f32.mrb[0].mxu0
        %950 = vmatprep.mubr.f32.mxu0 0.0
        %951 = vmatmul.mubr.f32.gmra.mrb[0].mxu0 %v651
        %v952 = vpop.f32.mrb[0].mxu0
        %v953 = vadd.f32 0.0, %v952
        %v954 = vpop.f32.mrb[0].mxu0
        %955 = vmatprep.mubr.f32.mxu0 0.0
        %956 = vmatmul.mubr.f32.gmra.mrb[0].mxu0 %v654
        %v957 = vpop.f32.mrb[0].mxu0
        %v958 = vadd.f32 0.0, %v957
        %v959 = vpop.f32.mrb[0].mxu0
        %960 = vmatprep.mubr.f32.mxu0 0.0
        %961 = vmatmul.mubr.f32.gmra.mrb[0].mxu0 %v657
        %v962 = vpop.f32.mrb[0].mxu0
        %v963 = vadd.f32 0.0, %v962
        %v964 = vpop.f32.mrb[0].mxu0
        %965 = vmatprep.mubr.f32.mxu0 0.0
        %966 = vmatmul.mubr.f32.gmra.mrb[0].mxu0 %v660
        %v967 = vpop.f32.mrb[0].mxu0
        %v968 = vadd.f32 0.0, %v967
        %v969 = vpop.f32.mrb[0].mxu0
        %970 = vmatprep.mubr.f32.mxu0 0.0
        %971 = vmatmul.mubr.f32.gmra.mrb[0].mxu0 %v663
        %v972 = vpop.f32.mrb[0].mxu0
        %v973 = vadd.f32 0.0, %v972
        %v974 = vpop.f32.mrb[0].mxu0
        %975 = vmatprep.mubr.f32.mxu0 0.0
        %976 = vmatmul.mubr.f32.gmra.mrb[0].mxu0 %v666
        %v977 = vpop.f32.mrb[0].mxu0
        %v978 = vadd.f32 0.0, %v977
        %v979 = vpop.f32.mrb[0].mxu0
        %980 = vmatprep.mubr.f32.mxu0 0.0
        %981 = vmatmul.mubr.f32.gmra.mrb[0].mxu0 %v669
        %v982 = vpop.f32.mrb[0].mxu0
        %v983 = vadd.f32 0.0, %v982
        %v984 = vpop.f32.mrb[0].mxu0
        %985 = vmatprep.mubr.f32.mxu0 0.0
        %986 = vmatmul.mubr.f32.gmra.mrb[0].mxu0 %v672
        %v987 = vpop.f32.mrb[0].mxu0
        %v988 = vadd.f32 0.0, %v987
        %v989 = vpop.f32.mrb[0].mxu0
        %990 = vmatprep.mubr.f32.mxu0 0.0
        %991 = vmatmul.mubr.f32.gmra.mrb[0].mxu0 %v675
        %v992 = vpop.f32.mrb[0].mxu0
        %v993 = vadd.f32 0.0, %v992
        %v994 = vpop.f32.mrb[0].mxu0
        %995 = vmatprep.mubr.f32.mxu0 0.0
        %996 = vmatmul.mubr.f32.gmra.mrb[0].mxu0 %v678
        %v997 = vpop.f32.mrb[0].mxu0
        %v998 = vadd.f32 0.0, %v997
        %v999 = vpop.f32.mrb[0].mxu0
        %1000 = vmatprep.mubr.f32.mxu0 0.0
        %1001 = vmatmul.mubr.f32.gmra.mrb[0].mxu0 %v681
        %v1002 = vpop.f32.mrb[0].mxu0
        %v1003 = vadd.f32 0.0, %v1002
        %v1004 = vpop.f32.mrb[0].mxu0
        %1005 = vmatprep.mubr.f32.mxu0 0.0
        %1006 = vmatmul.mubr.f32.gmra.mrb[0].mxu0 %v684
        %v1007 = vpop.f32.mrb[0].mxu0
        %v1008 = vadd.f32 0.0, %v1007
        %v1009 = vpop.f32.mrb[0].mxu0
        %1010 = vmatprep.mubr.f32.mxu0 0.0
        %1011 = vmatmul.mubr.f32.gmra.mrb[0].mxu0 %v687
        %v1012 = vpop.f32.mrb[0].mxu0
        %v1013 = vadd.f32 0.0, %v1012
        %v1014 = vpop.f32.mrb[0].mxu0
        %1015 = vmatprep.mubr.f32.mxu0 0.0
        %1016 = vmatmul.mubr.f32.gmra.mrb[0].mxu0 %v690
        %v1017 = vpop.f32.mrb[0].mxu0
        %v1018 = vadd.f32 0.0, %v1017
        %v1019 = vpop.f32.mrb[0].mxu0
        %1020 = vmatprep.mubr.f32.mxu0 0.0
        %1021 = vmatmul.mubr.f32.gmra.mrb[0].mxu0 %v693
        %v1022 = vpop.f32.mrb[0].mxu0
        %v1023 = vadd.f32 0.0, %v1022
        %v1024 = vpop.f32.mrb[0].mxu0
        %1025 = vmatprep.mubr.f32.mxu0 0.0
        %1026 = vmatmul.mubr.f32.gmra.mrb[0].mxu0 %v696
        %v1027 = vpop.f32.mrb[0].mxu0
        %v1028 = vadd.f32 0.0, %v1027
        %v1029 = vpop.f32.mrb[0].mxu0
        %1030 = vmatprep.mubr.f32.mxu0 0.0
        %1031 = vmatmul.mubr.f32.gmra.mrb[0].mxu0 %v699
        %v1032 = vpop.f32.mrb[0].mxu0
        %v1033 = vadd.f32 0.0, %v1032
        %v1034 = vpop.f32.mrb[0].mxu0
        %1035 = vmatprep.mubr.f32.mxu0 0.0
        %1036 = vmatmul.mubr.f32.gmra.mrb[0].mxu0 %v702
        %v1037 = vpop.f32.mrb[0].mxu0
        %v1038 = vadd.f32 0.0, %v1037
        %v1039 = vpop.f32.mrb[0].mxu0
        %1040 = vmatprep.mubr.f32.mxu0 0.0
        %1041 = vmatmul.mubr.f32.gmra.mrb[0].mxu0 %v705
        %v1042 = vpop.f32.mrb[0].mxu0
        %v1043 = vadd.f32 0.0, %v1042
        %v1044 = vpop.f32.mrb[0].mxu0
        %1045 = vmatprep.mubr.f32.mxu0 0.0
        %1046 = vmatmul.mubr.f32.gmra.mrb[0].mxu0 %v708
        %v1047 = vpop.f32.mrb[0].mxu0
        %v1048 = vadd.f32 0.0, %v1047
        %v1049 = vpop.f32.mrb[0].mxu0
        %1050 = vmatprep.mubr.f32.mxu0 0.0
        %1051 = vmatmul.mubr.f32.gmra.mrb[0].mxu0 %v711
        %v1052 = vpop.f32.mrb[0].mxu0
        %v1053 = vadd.f32 0.0, %v1052
        %v1054 = vpop.f32.mrb[0].mxu0
        %1055 = vmatprep.mubr.f32.mxu0 0.0
        %1056 = vmatmul.mubr.f32.gmra.mrb[0].mxu0 %v714
        %v1057 = vpop.f32.mrb[0].mxu0
        %v1058 = vadd.f32 0.0, %v1057
        %v1059 = vpop.f32.mrb[0].mxu0
        %1060 = vmatprep.mubr.f32.mxu0 0.0
        %1061 = vmatmul.mubr.f32.gmra.mrb[0].mxu0 %v717
        %v1062 = vpop.f32.mrb[0].mxu0
        %v1063 = vadd.f32 0.0, %v1062
        %v1064 = vpop.f32.mrb[0].mxu0
        %1065 = vmatprep.mubr.f32.mxu0 0.0
        %1066 = vmatmul.mubr.f32.gmra.mrb[0].mxu0 %v720
        %v1067 = vpop.f32.mrb[0].mxu0
        %v1068 = vadd.f32 0.0, %v1067
        %v1069 = vpop.f32.mrb[0].mxu0
        %1070 = vmatprep.mubr.f32.mxu0 0.0
        %1071 = vmatmul.mubr.f32.gmra.mrb[0].mxu0 %v723
        %v1072 = vpop.f32.mrb[0].mxu0
        %v1073 = vadd.f32 0.0, %v1072
        %v1074 = vpop.f32.mrb[0].mxu0
        %1075 = vmatprep.mubr.f32.mxu0 0.0
        %1076 = vmatmul.mubr.f32.gmra.mrb[0].mxu0 %v726
        %v1077 = vpop.f32.mrb[0].mxu0
        %v1078 = vadd.f32 0.0, %v1077
        %v1079 = vpop.f32.mrb[0].mxu0
        %1080 = vmatprep.mubr.f32.mxu0 0.0
        %1081 = vmatmul.mubr.f32.gmra.mrb[0].mxu0 %v729
        %v1082 = vpop.f32.mrb[0].mxu0
        %v1083 = vadd.f32 0.0, %v1082
        %v1084 = vpop.f32.mrb[0].mxu0
        %1085 = vmatprep.mubr.f32.mxu0 0.0
        %1086 = vmatmul.mubr.f32.gmra.mrb[0].mxu0 %v732
        %v1087 = vpop.f32.mrb[0].mxu0
        %v1088 = vadd.f32 0.0, %v1087
        %v1089 = vpop.f32.mrb[0].mxu0
        %1090 = vmatprep.mubr.f32.mxu0 0.0
        %1091 = vmatmul.mubr.f32.gmra.mrb[0].mxu0 %v735
        %v1092 = vpop.f32.mrb[0].mxu0
        %v1093 = vadd.f32 0.0, %v1092
        %v1094 = vpop.f32.mrb[0].mxu0
        %1095 = vmatprep.mubr.f32.mxu0 0.0
        %1096 = vmatmul.mubr.f32.gmra.mrb[0].mxu0 %v738
        %v1097 = vpop.f32.mrb[0].mxu0
        %v1098 = vadd.f32 0.0, %v1097
        %v1099 = vpop.f32.mrb[0].mxu0
        %1100 = vmatprep.mubr.f32.mxu0 0.0
        %1101 = vmatmul.mubr.f32.gmra.mrb[0].mxu0 %v741
        %v1102 = vpop.f32.mrb[0].mxu0
        %v1103 = vadd.f32 0.0, %v1102
        %v1104 = vpop.f32.mrb[0].mxu0
        %1105 = vmatprep.mubr.f32.mxu0 0.0
        %1106 = vmatmul.mubr.f32.gmra.mrb[0].mxu0 %v744
        %v1107 = vpop.f32.mrb[0].mxu0
        %v1108 = vadd.f32 0.0, %v1107
        %v1109 = vpop.f32.mrb[0].mxu0
        %1110 = vmatprep.mubr.f32.mxu0 0.0
        %1111 = vmatmul.mubr.f32.gmra.mrb[0].mxu0 %v747
        %v1112 = vpop.f32.mrb[0].mxu0
        %v1113 = vadd.f32 0.0, %v1112
        %v1114 = vpop.f32.mrb[0].mxu0
        %1115 = vmatprep.mubr.f32.mxu0 0.0
        %1116 = vmatmul.mubr.f32.gmra.mrb[0].mxu0 %v750
        %v1117 = vpop.f32.mrb[0].mxu0
        %v1118 = vadd.f32 0.0, %v1117
        %v1119 = vpop.f32.mrb[0].mxu0
        %1120 = vmatprep.mubr.f32.mxu0 0.0
        %1121 = vmatmul.mubr.f32.gmra.mrb[0].mxu0 %v753
        %v1122 = vpop.f32.mrb[0].mxu0
        %v1123 = vadd.f32 0.0, %v1122
        %v1124 = vpop.f32.mrb[0].mxu0
        %1125 = vmatprep.mubr.f32.mxu0 0.0
        %1126 = vmatmul.mubr.f32.gmra.mrb[0].mxu0 %v756
        %v1127 = vpop.f32.mrb[0].mxu0
        %v1128 = vadd.f32 0.0, %v1127
        %v1129 = vpop.f32.mrb[0].mxu0
        %1130 = vmatprep.mubr.f32.mxu0 0.0
        %1131 = vmatmul.mubr.f32.gmra.mrb[0].mxu0 %v759
        %v1132 = vpop.f32.mrb[0].mxu0
        %v1133 = vadd.f32 0.0, %v1132
        %v1134 = vpop.f32.mrb[0].mxu0
        %1135 = vmatprep.mubr.f32.mxu0 0.0
        %1136 = vmatmul.mubr.f32.gmra.mrb[0].mxu0 %v762
        %v1137 = vpop.f32.mrb[0].mxu0
        %v1138 = vadd.f32 0.0, %v1137
        %v1139 = vpop.f32.mrb[0].mxu0
        %1140 = vmatprep.mubr.f32.mxu0 0.0
        %1141 = vmatmul.mubr.f32.gmra.mrb[0].mxu0 %v765
        %v1142 = vpop.f32.mrb[0].mxu0
        %v1143 = vadd.f32 0.0, %v1142
        %v1144 = vpop.f32.mrb[0].mxu0
        %1145 = vmatprep.mubr.f32.mxu0 0.0
        %1146 = vmatmul.mubr.f32.gmra.mrb[0].mxu0 %v768
        %v1147 = vpop.f32.mrb[0].mxu0
        %v1148 = vadd.f32 0.0, %v1147
        %v1149 = vpop.f32.mrb[0].mxu0
        %1150 = vmatprep.mubr.f32.mxu0 0.0
        %1151 = vmatmul.mubr.f32.gmra.mrb[0].mxu0 %v771
        %v1152 = vpop.f32.mrb[0].mxu0
        %v1153 = vadd.f32 0.0, %v1152
        %v1154 = vpop.f32.mrb[0].mxu0
        %1155 = vmatprep.mubr.f32.mxu0 0.0
        %1156 = vmatmul.mubr.f32.gmra.mrb[0].mxu0 %v774
        %v1157 = vpop.f32.mrb[0].mxu0
        %v1158 = vadd.f32 0.0, %v1157
        %v1159 = vpop.f32.mrb[0].mxu0
        %1160 = vdwg.mxu0
        %v1161 = vld [vmem:[%s2] sm:$0xff]
        %v1162 = vld [vmem:[%s2 + $0x8] sm:$0xff]
        %v1163 = vld [vmem:[%s2 + $0x10] sm:$0xff]
        %v1164 = vld [vmem:[%s2 + $0x18] sm:$0xff]
        %v1165 = vld [vmem:[%s2 + $0x20] sm:$0xff]
        %v1166 = vld [vmem:[%s2 + $0x28] sm:$0xff]
        %v1167 = vld [vmem:[%s2 + $0x30] sm:$0xff]
        %v1168 = vld [vmem:[%s2 + $0x38] sm:$0xff]
        %v1169 = vld [vmem:[%s2 + $0x40] sm:$0xff]
        %v1170 = vld [vmem:[%s2 + $0x48] sm:$0xff]
        %v1171 = vld [vmem:[%s2 + $0x50] sm:$0xff]
        %v1172 = vld [vmem:[%s2 + $0x58] sm:$0xff]
        %v1173 = vld [vmem:[%s2 + $0x60] sm:$0xff]
        %v1174 = vld [vmem:[%s2 + $0x68] sm:$0xff]
        %v1175 = vld [vmem:[%s2 + $0x70] sm:$0xff]
        %v1176 = vld [vmem:[%s2 + $0x78] sm:$0xff]
        %v1177 = vld [vmem:[%s2 + $0x80] sm:$0xff]
        %v1178 = vld [vmem:[%s2 + $0x88] sm:$0xff]
        %v1179 = vld [vmem:[%s2 + $0x90] sm:$0xff]
        %v1180 = vld [vmem:[%s2 + $0x98] sm:$0xff]
        %v1181 = vld [vmem:[%s2 + $0xa0] sm:$0xff]
        %v1182 = vld [vmem:[%s2 + $0xa8] sm:$0xff]
        %v1183 = vld [vmem:[%s2 + $0xb0] sm:$0xff]
        %v1184 = vld [vmem:[%s2 + $0xb8] sm:$0xff]
        %v1185 = vld [vmem:[%s2 + $0xc0] sm:$0xff]
        %v1186 = vld [vmem:[%s2 + $0xc8] sm:$0xff]
        %v1187 = vld [vmem:[%s2 + $0xd0] sm:$0xff]
        %v1188 = vld [vmem:[%s2 + $0xd8] sm:$0xff]
        %v1189 = vld [vmem:[%s2 + $0xe0] sm:$0xff]
        %v1190 = vld [vmem:[%s2 + $0xe8] sm:$0xff]
        %v1191 = vld [vmem:[%s2 + $0xf0] sm:$0xff]
        %v1192 = vld [vmem:[%s2 + $0xf8] sm:$0xff]
        %v1193 = vld [vmem:[%s2 + $0x100] sm:$0xff]
        %v1194 = vld [vmem:[%s2 + $0x108] sm:$0xff]
        %v1195 = vld [vmem:[%s2 + $0x110] sm:$0xff]
        %v1196 = vld [vmem:[%s2 + $0x118] sm:$0xff]
        %v1197 = vld [vmem:[%s2 + $0x120] sm:$0xff]
        %v1198 = vld [vmem:[%s2 + $0x128] sm:$0xff]
        %v1199 = vld [vmem:[%s2 + $0x130] sm:$0xff]
        %v1200 = vld [vmem:[%s2 + $0x138] sm:$0xff]
        %v1201 = vld [vmem:[%s2 + $0x140] sm:$0xff]
        %v1202 = vld [vmem:[%s2 + $0x148] sm:$0xff]
        %v1203 = vld [vmem:[%s2 + $0x150] sm:$0xff]
        %v1204 = vld [vmem:[%s2 + $0x158] sm:$0xff]
        %v1205 = vld [vmem:[%s2 + $0x160] sm:$0xff]
        %v1206 = vld [vmem:[%s2 + $0x168] sm:$0xff]
        %v1207 = vld [vmem:[%s2 + $0x170] sm:$0xff]
        %v1208 = vld [vmem:[%s2 + $0x178] sm:$0xff]
        %v1209 = vld [vmem:[%s2 + $0x180] sm:$0xff]
        %v1210 = vld [vmem:[%s2 + $0x188] sm:$0xff]
        %v1211 = vld [vmem:[%s2 + $0x190] sm:$0xff]
        %v1212 = vld [vmem:[%s2 + $0x198] sm:$0xff]
        %v1213 = vld [vmem:[%s2 + $0x1a0] sm:$0xff]
        %v1214 = vld [vmem:[%s2 + $0x1a8] sm:$0xff]
        %v1215 = vld [vmem:[%s2 + $0x1b0] sm:$0xff]
        %v1216 = vld [vmem:[%s2 + $0x1b8] sm:$0xff]
        %v1217 = vld [vmem:[%s2 + $0x1c0] sm:$0xff]
        %v1218 = vld [vmem:[%s2 + $0x1c8] sm:$0xff]
        %v1219 = vld [vmem:[%s2 + $0x1d0] sm:$0xff]
        %v1220 = vld [vmem:[%s2 + $0x1d8] sm:$0xff]
        %v1221 = vld [vmem:[%s2 + $0x1e0] sm:$0xff]
        %v1222 = vld [vmem:[%s2 + $0x1e8] sm:$0xff]
        %v1223 = vld [vmem:[%s2 + $0x1f0] sm:$0xff]
        %v1224 = vld [vmem:[%s2 + $0x1f8] sm:$0xff]
        %s1225 = scalar_lea.vmem %s496, 8
        %v1226 = vld [vmem:[%s1225] sm:$0xff]
        %v1228 = vsel %vm583, %v1161, 0
        %v1231 = vsel %vm583, %v1162, 0
        %v1234 = vsel %vm583, %v1163, 0
        %v1237 = vsel %vm583, %v1164, 0
        %v1240 = vsel %vm583, %v1165, 0
        %v1243 = vsel %vm583, %v1166, 0
        %v1246 = vsel %vm583, %v1167, 0
        %v1249 = vsel %vm583, %v1168, 0
        %v1252 = vsel %vm583, %v1169, 0
        %v1255 = vsel %vm583, %v1170, 0
        %v1258 = vsel %vm583, %v1171, 0
        %v1261 = vsel %vm583, %v1172, 0
        %v1264 = vsel %vm583, %v1173, 0
        %v1267 = vsel %vm583, %v1174, 0
        %v1270 = vsel %vm583, %v1175, 0
        %v1273 = vsel %vm583, %v1176, 0
        %v1276 = vsel %vm583, %v1177, 0
        %v1279 = vsel %vm583, %v1178, 0
        %v1282 = vsel %vm583, %v1179, 0
        %v1285 = vsel %vm583, %v1180, 0
        %v1288 = vsel %vm583, %v1181, 0
        %v1291 = vsel %vm583, %v1182, 0
        %v1294 = vsel %vm583, %v1183, 0
        %v1297 = vsel %vm583, %v1184, 0
        %v1300 = vsel %vm583, %v1185, 0
        %v1303 = vsel %vm583, %v1186, 0
        %v1306 = vsel %vm583, %v1187, 0
        %v1309 = vsel %vm583, %v1188, 0
        %v1312 = vsel %vm583, %v1189, 0
        %v1315 = vsel %vm583, %v1190, 0
        %v1318 = vsel %vm583, %v1191, 0
        %v1321 = vsel %vm583, %v1192, 0
        %v1324 = vsel %vm583, %v1193, 0
        %v1327 = vsel %vm583, %v1194, 0
        %v1330 = vsel %vm583, %v1195, 0
        %v1333 = vsel %vm583, %v1196, 0
        %v1336 = vsel %vm583, %v1197, 0
        %v1339 = vsel %vm583, %v1198, 0
        %v1342 = vsel %vm583, %v1199, 0
        %v1345 = vsel %vm583, %v1200, 0
        %v1348 = vsel %vm583, %v1201, 0
        %v1351 = vsel %vm583, %v1202, 0
        %v1354 = vsel %vm583, %v1203, 0
        %v1357 = vsel %vm583, %v1204, 0
        %v1360 = vsel %vm583, %v1205, 0
        %v1363 = vsel %vm583, %v1206, 0
        %v1366 = vsel %vm583, %v1207, 0
        %v1369 = vsel %vm583, %v1208, 0
        %v1372 = vsel %vm583, %v1209, 0
        %v1375 = vsel %vm583, %v1210, 0
        %v1378 = vsel %vm583, %v1211, 0
        %v1381 = vsel %vm583, %v1212, 0
        %v1384 = vsel %vm583, %v1213, 0
        %v1387 = vsel %vm583, %v1214, 0
        %v1390 = vsel %vm583, %v1215, 0
        %v1393 = vsel %vm583, %v1216, 0
        %v1396 = vsel %vm583, %v1217, 0
        %v1399 = vsel %vm583, %v1218, 0
        %v1402 = vsel %vm583, %v1219, 0
        %v1405 = vsel %vm583, %v1220, 0
        %v1408 = vsel %vm583, %v1221, 0
        %v1411 = vsel %vm583, %v1222, 0
        %v1414 = vsel %vm583, %v1223, 0
        %v1417 = vsel %vm583, %v1224, 0
        %1419 = vmatprep.subr.mxu0 0.0
        %1420 = vmatpush1.msra.mxu0 %v1226
        %1421 = vmatprep.subr.mxu0 0.0
        %1422 = vmatpush1.msra.mxu0 0.0
        %1423 = vmatprep.subr.mxu0 0.0
        %1424 = vmatpush1.msra.mxu0 0.0
        %1425 = vmatprep.subr.mxu0 0.0
        %1426 = vmatpush1.msra.mxu0 0.0
        %1427 = vmatprep.subr.mxu0 0.0
        %1428 = vmatpush1.msra.mxu0 0.0
        %1429 = vmatprep.subr.mxu0 0.0
        %1430 = vmatpush1.msra.mxu0 0.0
        %1431 = vmatprep.subr.mxu0 0.0
        %1432 = vmatpush1.msra.mxu0 0.0
        %1433 = vmatprep.subr.mxu0 0.0
        %1434 = vmatpush1.msra.mxu0 0.0
        %1435 = vmatprep.subr.mxu0 0.0
        %1436 = vmatpush1.msra.mxu0 0.0
        %1437 = vmatprep.subr.mxu0 0.0
        %1438 = vmatpush1.msra.mxu0 0.0
        %1439 = vmatprep.subr.mxu0 0.0
        %1440 = vmatpush1.msra.mxu0 0.0
        %1441 = vmatprep.subr.mxu0 0.0
        %1442 = vmatpush1.msra.mxu0 0.0
        %1443 = vmatprep.subr.mxu0 0.0
        %1444 = vmatpush1.msra.mxu0 0.0
        %1445 = vmatprep.subr.mxu0 0.0
        %1446 = vmatpush1.msra.mxu0 0.0
        %1447 = vmatprep.subr.mxu0 0.0
        %1448 = vmatpush1.msra.mxu0 0.0
        %1449 = vmatprep.subr.mxu0 0.0
        %1450 = vmatpush1.msra.mxu0 0.0
        %1451 = vmatprep.subr.mxu0 0.0
        %1452 = vmatpush1.msra.mxu0 0.0
        %1453 = vmatprep.subr.mxu0 0.0
        %1454 = vmatpush1.msra.mxu0 0.0
        %1455 = vmatprep.subr.mxu0 0.0
        %1456 = vmatpush1.msra.mxu0 0.0
        %1457 = vmatprep.subr.mxu0 0.0
        %1458 = vmatpush1.msra.mxu0 0.0
        %1459 = vmatprep.subr.mxu0 0.0
        %1460 = vmatpush1.msra.mxu0 0.0
        %1461 = vmatprep.subr.mxu0 0.0
        %1462 = vmatpush1.msra.mxu0 0.0
        %1463 = vmatprep.subr.mxu0 0.0
        %1464 = vmatpush1.msra.mxu0 0.0
        %1465 = vmatprep.subr.mxu0 0.0
        %1466 = vmatpush1.msra.mxu0 0.0
        %1467 = vmatprep.subr.mxu0 0.0
        %1468 = vmatpush1.msra.mxu0 0.0
        %1469 = vmatprep.subr.mxu0 0.0
        %1470 = vmatpush1.msra.mxu0 0.0
        %1471 = vmatprep.subr.mxu0 0.0
        %1472 = vmatpush1.msra.mxu0 0.0
        %1473 = vmatprep.subr.mxu0 0.0
        %1474 = vmatpush1.msra.mxu0 0.0
        %1475 = vmatprep.subr.mxu0 0.0
        %1476 = vmatpush1.msra.mxu0 0.0
        %1477 = vmatprep.subr.mxu0 0.0
        %1478 = vmatpush1.msra.mxu0 0.0
        %1479 = vmatprep.subr.mxu0 0.0
        %1480 = vmatpush1.msra.mxu0 0.0
        %1481 = vmatprep.subr.mxu0 0.0
        %1482 = vmatpush1.msra.mxu0 0.0
        %1483 = vmatprep.mubr.f32.mxu0 0.0
        %1484 = vmatmul.mubr.f32.gmra.mrb[0].mxu0 %v1228
        %v1485 = vpop.f32.mrb[0].mxu0
        %v1486 = vadd.f32 0.0, %v1485
        %v1487 = vpop.f32.mrb[0].mxu0
        %1488 = vmatprep.mubr.f32.mxu0 0.0
        %1489 = vmatmul.mubr.f32.gmra.mrb[0].mxu0 %v1231
        %v1490 = vpop.f32.mrb[0].mxu0
        %v1491 = vadd.f32 0.0, %v1490
        %v1492 = vpop.f32.mrb[0].mxu0
        %1493 = vmatprep.mubr.f32.mxu0 0.0
        %1494 = vmatmul.mubr.f32.gmra.mrb[0].mxu0 %v1234
        %v1495 = vpop.f32.mrb[0].mxu0
        %v1496 = vadd.f32 0.0, %v1495
        %v1497 = vpop.f32.mrb[0].mxu0
        %1498 = vmatprep.mubr.f32.mxu0 0.0
        %1499 = vmatmul.mubr.f32.gmra.mrb[0].mxu0 %v1237
        %v1500 = vpop.f32.mrb[0].mxu0
        %v1501 = vadd.f32 0.0, %v1500
        %v1502 = vpop.f32.mrb[0].mxu0
        %1503 = vmatprep.mubr.f32.mxu0 0.0
        %1504 = vmatmul.mubr.f32.gmra.mrb[0].mxu0 %v1240
        %v1505 = vpop.f32.mrb[0].mxu0
        %v1506 = vadd.f32 0.0, %v1505
        %v1507 = vpop.f32.mrb[0].mxu0
        %1508 = vmatprep.mubr.f32.mxu0 0.0
        %1509 = vmatmul.mubr.f32.gmra.mrb[0].mxu0 %v1243
        %v1510 = vpop.f32.mrb[0].mxu0
        %v1511 = vadd.f32 0.0, %v1510
        %v1512 = vpop.f32.mrb[0].mxu0
        %1513 = vmatprep.mubr.f32.mxu0 0.0
        %1514 = vmatmul.mubr.f32.gmra.mrb[0].mxu0 %v1246
        %v1515 = vpop.f32.mrb[0].mxu0
        %v1516 = vadd.f32 0.0, %v1515
        %v1517 = vpop.f32.mrb[0].mxu0
        %1518 = vmatprep.mubr.f32.mxu0 0.0
        %1519 = vmatmul.mubr.f32.gmra.mrb[0].mxu0 %v1249
        %v1520 = vpop.f32.mrb[0].mxu0
        %v1521 = vadd.f32 0.0, %v1520
        %v1522 = vpop.f32.mrb[0].mxu0
        %1523 = vmatprep.mubr.f32.mxu0 0.0
        %1524 = vmatmul.mubr.f32.gmra.mrb[0].mxu0 %v1252
        %v1525 = vpop.f32.mrb[0].mxu0
        %v1526 = vadd.f32 0.0, %v1525
        %v1527 = vpop.f32.mrb[0].mxu0
        %1528 = vmatprep.mubr.f32.mxu0 0.0
        %1529 = vmatmul.mubr.f32.gmra.mrb[0].mxu0 %v1255
        %v1530 = vpop.f32.mrb[0].mxu0
        %v1531 = vadd.f32 0.0, %v1530
        %v1532 = vpop.f32.mrb[0].mxu0
        %1533 = vmatprep.mubr.f32.mxu0 0.0
        %1534 = vmatmul.mubr.f32.gmra.mrb[0].mxu0 %v1258
        %v1535 = vpop.f32.mrb[0].mxu0
        %v1536 = vadd.f32 0.0, %v1535
        %v1537 = vpop.f32.mrb[0].mxu0
        %1538 = vmatprep.mubr.f32.mxu0 0.0
        %1539 = vmatmul.mubr.f32.gmra.mrb[0].mxu0 %v1261
        %v1540 = vpop.f32.mrb[0].mxu0
        %v1541 = vadd.f32 0.0, %v1540
        %v1542 = vpop.f32.mrb[0].mxu0
        %1543 = vmatprep.mubr.f32.mxu0 0.0
        %1544 = vmatmul.mubr.f32.gmra.mrb[0].mxu0 %v1264
        %v1545 = vpop.f32.mrb[0].mxu0
        %v1546 = vadd.f32 0.0, %v1545
        %v1547 = vpop.f32.mrb[0].mxu0
        %1548 = vmatprep.mubr.f32.mxu0 0.0
        %1549 = vmatmul.mubr.f32.gmra.mrb[0].mxu0 %v1267
        %v1550 = vpop.f32.mrb[0].mxu0
        %v1551 = vadd.f32 0.0, %v1550
        %v1552 = vpop.f32.mrb[0].mxu0
        %1553 = vmatprep.mubr.f32.mxu0 0.0
        %1554 = vmatmul.mubr.f32.gmra.mrb[0].mxu0 %v1270
        %v1555 = vpop.f32.mrb[0].mxu0
        %v1556 = vadd.f32 0.0, %v1555
        %v1557 = vpop.f32.mrb[0].mxu0
        %1558 = vmatprep.mubr.f32.mxu0 0.0
        %1559 = vmatmul.mubr.f32.gmra.mrb[0].mxu0 %v1273
        %v1560 = vpop.f32.mrb[0].mxu0
        %v1561 = vadd.f32 0.0, %v1560
        %v1562 = vpop.f32.mrb[0].mxu0
        %1563 = vmatprep.mubr.f32.mxu0 0.0
        %1564 = vmatmul.mubr.f32.gmra.mrb[0].mxu0 %v1276
        %v1565 = vpop.f32.mrb[0].mxu0
        %v1566 = vadd.f32 0.0, %v1565
        %v1567 = vpop.f32.mrb[0].mxu0
        %1568 = vmatprep.mubr.f32.mxu0 0.0
        %1569 = vmatmul.mubr.f32.gmra.mrb[0].mxu0 %v1279
        %v1570 = vpop.f32.mrb[0].mxu0
        %v1571 = vadd.f32 0.0, %v1570
        %v1572 = vpop.f32.mrb[0].mxu0
        %1573 = vmatprep.mubr.f32.mxu0 0.0
        %1574 = vmatmul.mubr.f32.gmra.mrb[0].mxu0 %v1282
        %v1575 = vpop.f32.mrb[0].mxu0
        %v1576 = vadd.f32 0.0, %v1575
        %v1577 = vpop.f32.mrb[0].mxu0
        %1578 = vmatprep.mubr.f32.mxu0 0.0
        %1579 = vmatmul.mubr.f32.gmra.mrb[0].mxu0 %v1285
        %v1580 = vpop.f32.mrb[0].mxu0
        %v1581 = vadd.f32 0.0, %v1580
        %v1582 = vpop.f32.mrb[0].mxu0
        %1583 = vmatprep.mubr.f32.mxu0 0.0
        %1584 = vmatmul.mubr.f32.gmra.mrb[0].mxu0 %v1288
        %v1585 = vpop.f32.mrb[0].mxu0
        %v1586 = vadd.f32 0.0, %v1585
        %v1587 = vpop.f32.mrb[0].mxu0
        %1588 = vmatprep.mubr.f32.mxu0 0.0
        %1589 = vmatmul.mubr.f32.gmra.mrb[0].mxu0 %v1291
        %v1590 = vpop.f32.mrb[0].mxu0
        %v1591 = vadd.f32 0.0, %v1590
        %v1592 = vpop.f32.mrb[0].mxu0
        %1593 = vmatprep.mubr.f32.mxu0 0.0
        %1594 = vmatmul.mubr.f32.gmra.mrb[0].mxu0 %v1294
        %v1595 = vpop.f32.mrb[0].mxu0
        %v1596 = vadd.f32 0.0, %v1595
        %v1597 = vpop.f32.mrb[0].mxu0
        %1598 = vmatprep.mubr.f32.mxu0 0.0
        %1599 = vmatmul.mubr.f32.gmra.mrb[0].mxu0 %v1297
        %v1600 = vpop.f32.mrb[0].mxu0
        %v1601 = vadd.f32 0.0, %v1600
        %v1602 = vpop.f32.mrb[0].mxu0
        %1603 = vmatprep.mubr.f32.mxu0 0.0
        %1604 = vmatmul.mubr.f32.gmra.mrb[0].mxu0 %v1300
        %v1605 = vpop.f32.mrb[0].mxu0
        %v1606 = vadd.f32 0.0, %v1605
        %v1607 = vpop.f32.mrb[0].mxu0
        %1608 = vmatprep.mubr.f32.mxu0 0.0
        %1609 = vmatmul.mubr.f32.gmra.mrb[0].mxu0 %v1303
        %v1610 = vpop.f32.mrb[0].mxu0
        %v1611 = vadd.f32 0.0, %v1610
        %v1612 = vpop.f32.mrb[0].mxu0
        %1613 = vmatprep.mubr.f32.mxu0 0.0
        %1614 = vmatmul.mubr.f32.gmra.mrb[0].mxu0 %v1306
        %v1615 = vpop.f32.mrb[0].mxu0
        %v1616 = vadd.f32 0.0, %v1615
        %v1617 = vpop.f32.mrb[0].mxu0
        %1618 = vmatprep.mubr.f32.mxu0 0.0
        %1619 = vmatmul.mubr.f32.gmra.mrb[0].mxu0 %v1309
        %v1620 = vpop.f32.mrb[0].mxu0
        %v1621 = vadd.f32 0.0, %v1620
        %v1622 = vpop.f32.mrb[0].mxu0
        %1623 = vmatprep.mubr.f32.mxu0 0.0
        %1624 = vmatmul.mubr.f32.gmra.mrb[0].mxu0 %v1312
        %v1625 = vpop.f32.mrb[0].mxu0
        %v1626 = vadd.f32 0.0, %v1625
        %v1627 = vpop.f32.mrb[0].mxu0
        %1628 = vmatprep.mubr.f32.mxu0 0.0
        %1629 = vmatmul.mubr.f32.gmra.mrb[0].mxu0 %v1315
        %v1630 = vpop.f32.mrb[0].mxu0
        %v1631 = vadd.f32 0.0, %v1630
        %v1632 = vpop.f32.mrb[0].mxu0
        %1633 = vmatprep.mubr.f32.mxu0 0.0
        %1634 = vmatmul.mubr.f32.gmra.mrb[0].mxu0 %v1318
        %v1635 = vpop.f32.mrb[0].mxu0
        %v1636 = vadd.f32 0.0, %v1635
        %v1637 = vpop.f32.mrb[0].mxu0
        %1638 = vmatprep.mubr.f32.mxu0 0.0
        %1639 = vmatmul.mubr.f32.gmra.mrb[0].mxu0 %v1321
        %v1640 = vpop.f32.mrb[0].mxu0
        %v1641 = vadd.f32 0.0, %v1640
        %v1642 = vpop.f32.mrb[0].mxu0
        %1643 = vmatprep.mubr.f32.mxu0 0.0
        %1644 = vmatmul.mubr.f32.gmra.mrb[0].mxu0 %v1324
        %v1645 = vpop.f32.mrb[0].mxu0
        %v1646 = vadd.f32 0.0, %v1645
        %v1647 = vpop.f32.mrb[0].mxu0
        %1648 = vmatprep.mubr.f32.mxu0 0.0
        %1649 = vmatmul.mubr.f32.gmra.mrb[0].mxu0 %v1327
        %v1650 = vpop.f32.mrb[0].mxu0
        %v1651 = vadd.f32 0.0, %v1650
        %v1652 = vpop.f32.mrb[0].mxu0
        %1653 = vmatprep.mubr.f32.mxu0 0.0
        %1654 = vmatmul.mubr.f32.gmra.mrb[0].mxu0 %v1330
        %v1655 = vpop.f32.mrb[0].mxu0
        %v1656 = vadd.f32 0.0, %v1655
        %v1657 = vpop.f32.mrb[0].mxu0
        %1658 = vmatprep.mubr.f32.mxu0 0.0
        %1659 = vmatmul.mubr.f32.gmra.mrb[0].mxu0 %v1333
        %v1660 = vpop.f32.mrb[0].mxu0
        %v1661 = vadd.f32 0.0, %v1660
        %v1662 = vpop.f32.mrb[0].mxu0
        %1663 = vmatprep.mubr.f32.mxu0 0.0
        %1664 = vmatmul.mubr.f32.gmra.mrb[0].mxu0 %v1336
        %v1665 = vpop.f32.mrb[0].mxu0
        %v1666 = vadd.f32 0.0, %v1665
        %v1667 = vpop.f32.mrb[0].mxu0
        %1668 = vmatprep.mubr.f32.mxu0 0.0
        %1669 = vmatmul.mubr.f32.gmra.mrb[0].mxu0 %v1339
        %v1670 = vpop.f32.mrb[0].mxu0
        %v1671 = vadd.f32 0.0, %v1670
        %v1672 = vpop.f32.mrb[0].mxu0
        %1673 = vmatprep.mubr.f32.mxu0 0.0
        %1674 = vmatmul.mubr.f32.gmra.mrb[0].mxu0 %v1342
        %v1675 = vpop.f32.mrb[0].mxu0
        %v1676 = vadd.f32 0.0, %v1675
        %v1677 = vpop.f32.mrb[0].mxu0
        %1678 = vmatprep.mubr.f32.mxu0 0.0
        %1679 = vmatmul.mubr.f32.gmra.mrb[0].mxu0 %v1345
        %v1680 = vpop.f32.mrb[0].mxu0
        %v1681 = vadd.f32 0.0, %v1680
        %v1682 = vpop.f32.mrb[0].mxu0
        %1683 = vmatprep.mubr.f32.mxu0 0.0
        %1684 = vmatmul.mubr.f32.gmra.mrb[0].mxu0 %v1348
        %v1685 = vpop.f32.mrb[0].mxu0
        %v1686 = vadd.f32 0.0, %v1685
        %v1687 = vpop.f32.mrb[0].mxu0
        %1688 = vmatprep.mubr.f32.mxu0 0.0
        %1689 = vmatmul.mubr.f32.gmra.mrb[0].mxu0 %v1351
        %v1690 = vpop.f32.mrb[0].mxu0
        %v1691 = vadd.f32 0.0, %v1690
        %v1692 = vpop.f32.mrb[0].mxu0
        %1693 = vmatprep.mubr.f32.mxu0 0.0
        %1694 = vmatmul.mubr.f32.gmra.mrb[0].mxu0 %v1354
        %v1695 = vpop.f32.mrb[0].mxu0
        %v1696 = vadd.f32 0.0, %v1695
        %v1697 = vpop.f32.mrb[0].mxu0
        %1698 = vmatprep.mubr.f32.mxu0 0.0
        %1699 = vmatmul.mubr.f32.gmra.mrb[0].mxu0 %v1357
        %v1700 = vpop.f32.mrb[0].mxu0
        %v1701 = vadd.f32 0.0, %v1700
        %v1702 = vpop.f32.mrb[0].mxu0
        %1703 = vmatprep.mubr.f32.mxu0 0.0
        %1704 = vmatmul.mubr.f32.gmra.mrb[0].mxu0 %v1360
        %v1705 = vpop.f32.mrb[0].mxu0
        %v1706 = vadd.f32 0.0, %v1705
        %v1707 = vpop.f32.mrb[0].mxu0
        %1708 = vmatprep.mubr.f32.mxu0 0.0
        %1709 = vmatmul.mubr.f32.gmra.mrb[0].mxu0 %v1363
        %v1710 = vpop.f32.mrb[0].mxu0
        %v1711 = vadd.f32 0.0, %v1710
        %v1712 = vpop.f32.mrb[0].mxu0
        %1713 = vmatprep.mubr.f32.mxu0 0.0
        %1714 = vmatmul.mubr.f32.gmra.mrb[0].mxu0 %v1366
        %v1715 = vpop.f32.mrb[0].mxu0
        %v1716 = vadd.f32 0.0, %v1715
        %v1717 = vpop.f32.mrb[0].mxu0
        %1718 = vmatprep.mubr.f32.mxu0 0.0
        %1719 = vmatmul.mubr.f32.gmra.mrb[0].mxu0 %v1369
        %v1720 = vpop.f32.mrb[0].mxu0
        %v1721 = vadd.f32 0.0, %v1720
        %v1722 = vpop.f32.mrb[0].mxu0
        %1723 = vmatprep.mubr.f32.mxu0 0.0
        %1724 = vmatmul.mubr.f32.gmra.mrb[0].mxu0 %v1372
        %v1725 = vpop.f32.mrb[0].mxu0
        %v1726 = vadd.f32 0.0, %v1725
        %v1727 = vpop.f32.mrb[0].mxu0
        %1728 = vmatprep.mubr.f32.mxu0 0.0
        %1729 = vmatmul.mubr.f32.gmra.mrb[0].mxu0 %v1375
        %v1730 = vpop.f32.mrb[0].mxu0
        %v1731 = vadd.f32 0.0, %v1730
        %v1732 = vpop.f32.mrb[0].mxu0
        %1733 = vmatprep.mubr.f32.mxu0 0.0
        %1734 = vmatmul.mubr.f32.gmra.mrb[0].mxu0 %v1378
        %v1735 = vpop.f32.mrb[0].mxu0
        %v1736 = vadd.f32 0.0, %v1735
        %v1737 = vpop.f32.mrb[0].mxu0
        %1738 = vmatprep.mubr.f32.mxu0 0.0
        %1739 = vmatmul.mubr.f32.gmra.mrb[0].mxu0 %v1381
        %v1740 = vpop.f32.mrb[0].mxu0
        %v1741 = vadd.f32 0.0, %v1740
        %v1742 = vpop.f32.mrb[0].mxu0
        %1743 = vmatprep.mubr.f32.mxu0 0.0
        %1744 = vmatmul.mubr.f32.gmra.mrb[0].mxu0 %v1384
        %v1745 = vpop.f32.mrb[0].mxu0
        %v1746 = vadd.f32 0.0, %v1745
        %v1747 = vpop.f32.mrb[0].mxu0
        %1748 = vmatprep.mubr.f32.mxu0 0.0
        %1749 = vmatmul.mubr.f32.gmra.mrb[0].mxu0 %v1387
        %v1750 = vpop.f32.mrb[0].mxu0
        %v1751 = vadd.f32 0.0, %v1750
        %v1752 = vpop.f32.mrb[0].mxu0
        %1753 = vmatprep.mubr.f32.mxu0 0.0
        %1754 = vmatmul.mubr.f32.gmra.mrb[0].mxu0 %v1390
        %v1755 = vpop.f32.mrb[0].mxu0
        %v1756 = vadd.f32 0.0, %v1755
        %v1757 = vpop.f32.mrb[0].mxu0
        %1758 = vmatprep.mubr.f32.mxu0 0.0
        %1759 = vmatmul.mubr.f32.gmra.mrb[0].mxu0 %v1393
        %v1760 = vpop.f32.mrb[0].mxu0
        %v1761 = vadd.f32 0.0, %v1760
        %v1762 = vpop.f32.mrb[0].mxu0
        %1763 = vmatprep.mubr.f32.mxu0 0.0
        %1764 = vmatmul.mubr.f32.gmra.mrb[0].mxu0 %v1396
        %v1765 = vpop.f32.mrb[0].mxu0
        %v1766 = vadd.f32 0.0, %v1765
        %v1767 = vpop.f32.mrb[0].mxu0
        %1768 = vmatprep.mubr.f32.mxu0 0.0
        %1769 = vmatmul.mubr.f32.gmra.mrb[0].mxu0 %v1399
        %v1770 = vpop.f32.mrb[0].mxu0
        %v1771 = vadd.f32 0.0, %v1770
        %v1772 = vpop.f32.mrb[0].mxu0
        %1773 = vmatprep.mubr.f32.mxu0 0.0
        %1774 = vmatmul.mubr.f32.gmra.mrb[0].mxu0 %v1402
        %v1775 = vpop.f32.mrb[0].mxu0
        %v1776 = vadd.f32 0.0, %v1775
        %v1777 = vpop.f32.mrb[0].mxu0
        %1778 = vmatprep.mubr.f32.mxu0 0.0
        %1779 = vmatmul.mubr.f32.gmra.mrb[0].mxu0 %v1405
        %v1780 = vpop.f32.mrb[0].mxu0
        %v1781 = vadd.f32 0.0, %v1780
        %v1782 = vpop.f32.mrb[0].mxu0
        %1783 = vmatprep.mubr.f32.mxu0 0.0
        %1784 = vmatmul.mubr.f32.gmra.mrb[0].mxu0 %v1408
        %v1785 = vpop.f32.mrb[0].mxu0
        %v1786 = vadd.f32 0.0, %v1785
        %v1787 = vpop.f32.mrb[0].mxu0
        %1788 = vmatprep.mubr.f32.mxu0 0.0
        %1789 = vmatmul.mubr.f32.gmra.mrb[0].mxu0 %v1411
        %v1790 = vpop.f32.mrb[0].mxu0
        %v1791 = vadd.f32 0.0, %v1790
        %v1792 = vpop.f32.mrb[0].mxu0
        %1793 = vmatprep.mubr.f32.mxu0 0.0
        %1794 = vmatmul.mubr.f32.gmra.mrb[0].mxu0 %v1414
        %v1795 = vpop.f32.mrb[0].mxu0
        %v1796 = vadd.f32 0.0, %v1795
        %v1797 = vpop.f32.mrb[0].mxu0
        %1798 = vmatprep.mubr.f32.mxu0 0.0
        %1799 = vmatmul.mubr.f32.gmra.mrb[0].mxu0 %v1417
        %v1800 = vpop.f32.mrb[0].mxu0
        %v1801 = vadd.f32 0.0, %v1800
        %v1802 = vpop.f32.mrb[0].mxu0
        %1803 = vdwg.mxu0
        %v1804 = vmul.f32 %v843, %v1486
        %v1805 = vmul.f32 %v848, %v1491
        %v1806 = vmul.f32 %v853, %v1496
        %v1807 = vmul.f32 %v858, %v1501
        %v1808 = vmul.f32 %v863, %v1506
        %v1809 = vmul.f32 %v868, %v1511
        %v1810 = vmul.f32 %v873, %v1516
        %v1811 = vmul.f32 %v878, %v1521
        %v1812 = vmul.f32 %v883, %v1526
        %v1813 = vmul.f32 %v888, %v1531
        %v1814 = vmul.f32 %v893, %v1536
        %v1815 = vmul.f32 %v898, %v1541
        %v1816 = vmul.f32 %v903, %v1546
        %v1817 = vmul.f32 %v908, %v1551
        %v1818 = vmul.f32 %v913, %v1556
        %v1819 = vmul.f32 %v918, %v1561
        %v1820 = vmul.f32 %v923, %v1566
        %v1821 = vmul.f32 %v928, %v1571
        %v1822 = vmul.f32 %v933, %v1576
        %v1823 = vmul.f32 %v938, %v1581
        %v1824 = vmul.f32 %v943, %v1586
        %v1825 = vmul.f32 %v948, %v1591
        %v1826 = vmul.f32 %v953, %v1596
        %v1827 = vmul.f32 %v958, %v1601
        %v1828 = vmul.f32 %v963, %v1606
        %v1829 = vmul.f32 %v968, %v1611
        %v1830 = vmul.f32 %v973, %v1616
        %v1831 = vmul.f32 %v978, %v1621
        %v1832 = vmul.f32 %v983, %v1626
        %v1833 = vmul.f32 %v988, %v1631
        %v1834 = vmul.f32 %v993, %v1636
        %v1835 = vmul.f32 %v998, %v1641
        %v1836 = vmul.f32 %v1003, %v1646
        %v1837 = vmul.f32 %v1008, %v1651
        %v1838 = vmul.f32 %v1013, %v1656
        %v1839 = vmul.f32 %v1018, %v1661
        %v1840 = vmul.f32 %v1023, %v1666
        %v1841 = vmul.f32 %v1028, %v1671
        %v1842 = vmul.f32 %v1033, %v1676
        %v1843 = vmul.f32 %v1038, %v1681
        %v1844 = vmul.f32 %v1043, %v1686
        %v1845 = vmul.f32 %v1048, %v1691
        %v1846 = vmul.f32 %v1053, %v1696
        %v1847 = vmul.f32 %v1058, %v1701
        %v1848 = vmul.f32 %v1063, %v1706
        %v1849 = vmul.f32 %v1068, %v1711
        %v1850 = vmul.f32 %v1073, %v1716
        %v1851 = vmul.f32 %v1078, %v1721
        %v1852 = vmul.f32 %v1083, %v1726
        %v1853 = vmul.f32 %v1088, %v1731
        %v1854 = vmul.f32 %v1093, %v1736
        %v1855 = vmul.f32 %v1098, %v1741
        %v1856 = vmul.f32 %v1103, %v1746
        %v1857 = vmul.f32 %v1108, %v1751
        %v1858 = vmul.f32 %v1113, %v1756
        %v1859 = vmul.f32 %v1118, %v1761
        %v1860 = vmul.f32 %v1123, %v1766
        %v1861 = vmul.f32 %v1128, %v1771
        %v1862 = vmul.f32 %v1133, %v1776
        %v1863 = vmul.f32 %v1138, %v1781
        %v1864 = vmul.f32 %v1143, %v1786
        %v1865 = vmul.f32 %v1148, %v1791
        %v1866 = vmul.f32 %v1153, %v1796
        %v1867 = vmul.f32 %v1158, %v1801
        %v1868 = vld [vmem:[%s3] sm:$0xff]
        %v1869 = vld [vmem:[%s3 + $0x8] sm:$0xff]
        %v1870 = vld [vmem:[%s3 + $0x10] sm:$0xff]
        %v1871 = vld [vmem:[%s3 + $0x18] sm:$0xff]
        %v1872 = vld [vmem:[%s3 + $0x20] sm:$0xff]
        %v1873 = vld [vmem:[%s3 + $0x28] sm:$0xff]
        %v1874 = vld [vmem:[%s3 + $0x30] sm:$0xff]
        %v1875 = vld [vmem:[%s3 + $0x38] sm:$0xff]
        %v1876 = vld [vmem:[%s3 + $0x40] sm:$0xff]
        %v1877 = vld [vmem:[%s3 + $0x48] sm:$0xff]
        %v1878 = vld [vmem:[%s3 + $0x50] sm:$0xff]
        %v1879 = vld [vmem:[%s3 + $0x58] sm:$0xff]
        %v1880 = vld [vmem:[%s3 + $0x60] sm:$0xff]
        %v1881 = vld [vmem:[%s3 + $0x68] sm:$0xff]
        %v1882 = vld [vmem:[%s3 + $0x70] sm:$0xff]
        %v1883 = vld [vmem:[%s3 + $0x78] sm:$0xff]
        %v1884 = vld [vmem:[%s3 + $0x80] sm:$0xff]
        %v1885 = vld [vmem:[%s3 + $0x88] sm:$0xff]
        %v1886 = vld [vmem:[%s3 + $0x90] sm:$0xff]
        %v1887 = vld [vmem:[%s3 + $0x98] sm:$0xff]
        %v1888 = vld [vmem:[%s3 + $0xa0] sm:$0xff]
        %v1889 = vld [vmem:[%s3 + $0xa8] sm:$0xff]
        %v1890 = vld [vmem:[%s3 + $0xb0] sm:$0xff]
        %v1891 = vld [vmem:[%s3 + $0xb8] sm:$0xff]
        %v1892 = vld [vmem:[%s3 + $0xc0] sm:$0xff]
        %v1893 = vld [vmem:[%s3 + $0xc8] sm:$0xff]
        %v1894 = vld [vmem:[%s3 + $0xd0] sm:$0xff]
        %v1895 = vld [vmem:[%s3 + $0xd8] sm:$0xff]
        %v1896 = vld [vmem:[%s3 + $0xe0] sm:$0xff]
        %v1897 = vld [vmem:[%s3 + $0xe8] sm:$0xff]
        %v1898 = vld [vmem:[%s3 + $0xf0] sm:$0xff]
        %v1899 = vld [vmem:[%s3 + $0xf8] sm:$0xff]
        %v1900 = vld [vmem:[%s3 + $0x100] sm:$0xff]
        %v1901 = vld [vmem:[%s3 + $0x108] sm:$0xff]
        %v1902 = vld [vmem:[%s3 + $0x110] sm:$0xff]
        %v1903 = vld [vmem:[%s3 + $0x118] sm:$0xff]
        %v1904 = vld [vmem:[%s3 + $0x120] sm:$0xff]
        %v1905 = vld [vmem:[%s3 + $0x128] sm:$0xff]
        %v1906 = vld [vmem:[%s3 + $0x130] sm:$0xff]
        %v1907 = vld [vmem:[%s3 + $0x138] sm:$0xff]
        %v1908 = vld [vmem:[%s3 + $0x140] sm:$0xff]
        %v1909 = vld [vmem:[%s3 + $0x148] sm:$0xff]
        %v1910 = vld [vmem:[%s3 + $0x150] sm:$0xff]
        %v1911 = vld [vmem:[%s3 + $0x158] sm:$0xff]
        %v1912 = vld [vmem:[%s3 + $0x160] sm:$0xff]
        %v1913 = vld [vmem:[%s3 + $0x168] sm:$0xff]
        %v1914 = vld [vmem:[%s3 + $0x170] sm:$0xff]
        %v1915 = vld [vmem:[%s3 + $0x178] sm:$0xff]
        %v1916 = vld [vmem:[%s3 + $0x180] sm:$0xff]
        %v1917 = vld [vmem:[%s3 + $0x188] sm:$0xff]
        %v1918 = vld [vmem:[%s3 + $0x190] sm:$0xff]
        %v1919 = vld [vmem:[%s3 + $0x198] sm:$0xff]
        %v1920 = vld [vmem:[%s3 + $0x1a0] sm:$0xff]
        %v1921 = vld [vmem:[%s3 + $0x1a8] sm:$0xff]
        %v1922 = vld [vmem:[%s3 + $0x1b0] sm:$0xff]
        %v1923 = vld [vmem:[%s3 + $0x1b8] sm:$0xff]
        %v1924 = vld [vmem:[%s3 + $0x1c0] sm:$0xff]
        %v1925 = vld [vmem:[%s3 + $0x1c8] sm:$0xff]
        %v1926 = vld [vmem:[%s3 + $0x1d0] sm:$0xff]
        %v1927 = vld [vmem:[%s3 + $0x1d8] sm:$0xff]
        %v1928 = vld [vmem:[%s3 + $0x1e0] sm:$0xff]
        %v1929 = vld [vmem:[%s3 + $0x1e8] sm:$0xff]
        %v1930 = vld [vmem:[%s3 + $0x1f0] sm:$0xff]
        %v1931 = vld [vmem:[%s3 + $0x1f8] sm:$0xff]
        %v1932 = vld [vmem:[%s496] sm:$0xff]
        %v1934 = vsel %vm583, %v1868, 0
        %v1937 = vsel %vm583, %v1869, 0
        %v1940 = vsel %vm583, %v1870, 0
        %v1943 = vsel %vm583, %v1871, 0
        %v1946 = vsel %vm583, %v1872, 0
        %v1949 = vsel %vm583, %v1873, 0
        %v1952 = vsel %vm583, %v1874, 0
        %v1955 = vsel %vm583, %v1875, 0
        %v1958 = vsel %vm583, %v1876, 0
        %v1961 = vsel %vm583, %v1877, 0
        %v1964 = vsel %vm583, %v1878, 0
        %v1967 = vsel %vm583, %v1879, 0
        %v1970 = vsel %vm583, %v1880, 0
        %v1973 = vsel %vm583, %v1881, 0
        %v1976 = vsel %vm583, %v1882, 0
        %v1979 = vsel %vm583, %v1883, 0
        %v1982 = vsel %vm583, %v1884, 0
        %v1985 = vsel %vm583, %v1885, 0
        %v1988 = vsel %vm583, %v1886, 0
        %v1991 = vsel %vm583, %v1887, 0
        %v1994 = vsel %vm583, %v1888, 0
        %v1997 = vsel %vm583, %v1889, 0
        %v2000 = vsel %vm583, %v1890, 0
        %v2003 = vsel %vm583, %v1891, 0
        %v2006 = vsel %vm583, %v1892, 0
        %v2009 = vsel %vm583, %v1893, 0
        %v2012 = vsel %vm583, %v1894, 0
        %v2015 = vsel %vm583, %v1895, 0
        %v2018 = vsel %vm583, %v1896, 0
        %v2021 = vsel %vm583, %v1897, 0
        %v2024 = vsel %vm583, %v1898, 0
        %v2027 = vsel %vm583, %v1899, 0
        %v2030 = vsel %vm583, %v1900, 0
        %v2033 = vsel %vm583, %v1901, 0
        %v2036 = vsel %vm583, %v1902, 0
        %v2039 = vsel %vm583, %v1903, 0
        %v2042 = vsel %vm583, %v1904, 0
        %v2045 = vsel %vm583, %v1905, 0
        %v2048 = vsel %vm583, %v1906, 0
        %v2051 = vsel %vm583, %v1907, 0
        %v2054 = vsel %vm583, %v1908, 0
        %v2057 = vsel %vm583, %v1909, 0
        %v2060 = vsel %vm583, %v1910, 0
        %v2063 = vsel %vm583, %v1911, 0
        %v2066 = vsel %vm583, %v1912, 0
        %v2069 = vsel %vm583, %v1913, 0
        %v2072 = vsel %vm583, %v1914, 0
        %v2075 = vsel %vm583, %v1915, 0
        %v2078 = vsel %vm583, %v1916, 0
        %v2081 = vsel %vm583, %v1917, 0
        %v2084 = vsel %vm583, %v1918, 0
        %v2087 = vsel %vm583, %v1919, 0
        %v2090 = vsel %vm583, %v1920, 0
        %v2093 = vsel %vm583, %v1921, 0
        %v2096 = vsel %vm583, %v1922, 0
        %v2099 = vsel %vm583, %v1923, 0
        %v2102 = vsel %vm583, %v1924, 0
        %v2105 = vsel %vm583, %v1925, 0
        %v2108 = vsel %vm583, %v1926, 0
        %v2111 = vsel %vm583, %v1927, 0
        %v2114 = vsel %vm583, %v1928, 0
        %v2117 = vsel %vm583, %v1929, 0
        %v2120 = vsel %vm583, %v1930, 0
        %v2123 = vsel %vm583, %v1931, 0
        %2125 = vmatprep.subr.mxu0 0.0
        %2126 = vmatpush1.msra.mxu0 %v1932
        %2127 = vmatprep.subr.mxu0 0.0
        %2128 = vmatpush1.msra.mxu0 0.0
        %2129 = vmatprep.subr.mxu0 0.0
        %2130 = vmatpush1.msra.mxu0 0.0
        %2131 = vmatprep.subr.mxu0 0.0
        %2132 = vmatpush1.msra.mxu0 0.0
        %2133 = vmatprep.subr.mxu0 0.0
        %2134 = vmatpush1.msra.mxu0 0.0
        %2135 = vmatprep.subr.mxu0 0.0
        %2136 = vmatpush1.msra.mxu0 0.0
        %2137 = vmatprep.subr.mxu0 0.0
        %2138 = vmatpush1.msra.mxu0 0.0
        %2139 = vmatprep.subr.mxu0 0.0
        %2140 = vmatpush1.msra.mxu0 0.0
        %2141 = vmatprep.subr.mxu0 0.0
        %2142 = vmatpush1.msra.mxu0 0.0
        %2143 = vmatprep.subr.mxu0 0.0
        %2144 = vmatpush1.msra.mxu0 0.0
        %2145 = vmatprep.subr.mxu0 0.0
        %2146 = vmatpush1.msra.mxu0 0.0
        %2147 = vmatprep.subr.mxu0 0.0
        %2148 = vmatpush1.msra.mxu0 0.0
        %2149 = vmatprep.subr.mxu0 0.0
        %2150 = vmatpush1.msra.mxu0 0.0
        %2151 = vmatprep.subr.mxu0 0.0
        %2152 = vmatpush1.msra.mxu0 0.0
        %2153 = vmatprep.subr.mxu0 0.0
        %2154 = vmatpush1.msra.mxu0 0.0
        %2155 = vmatprep.subr.mxu0 0.0
        %2156 = vmatpush1.msra.mxu0 0.0
        %2157 = vmatprep.subr.mxu0 0.0
        %2158 = vmatpush1.msra.mxu0 0.0
        %2159 = vmatprep.subr.mxu0 0.0
        %2160 = vmatpush1.msra.mxu0 0.0
        %2161 = vmatprep.subr.mxu0 0.0
        %2162 = vmatpush1.msra.mxu0 0.0
        %2163 = vmatprep.subr.mxu0 0.0
        %2164 = vmatpush1.msra.mxu0 0.0
        %2165 = vmatprep.subr.mxu0 0.0
        %2166 = vmatpush1.msra.mxu0 0.0
        %2167 = vmatprep.subr.mxu0 0.0
        %2168 = vmatpush1.msra.mxu0 0.0
        %2169 = vmatprep.subr.mxu0 0.0
        %2170 = vmatpush1.msra.mxu0 0.0
        %2171 = vmatprep.subr.mxu0 0.0
        %2172 = vmatpush1.msra.mxu0 0.0
        %2173 = vmatprep.subr.mxu0 0.0
        %2174 = vmatpush1.msra.mxu0 0.0
        %2175 = vmatprep.subr.mxu0 0.0
        %2176 = vmatpush1.msra.mxu0 0.0
        %2177 = vmatprep.subr.mxu0 0.0
        %2178 = vmatpush1.msra.mxu0 0.0
        %2179 = vmatprep.subr.mxu0 0.0
        %2180 = vmatpush1.msra.mxu0 0.0
        %2181 = vmatprep.subr.mxu0 0.0
        %2182 = vmatpush1.msra.mxu0 0.0
        %2183 = vmatprep.subr.mxu0 0.0
        %2184 = vmatpush1.msra.mxu0 0.0
        %2185 = vmatprep.subr.mxu0 0.0
        %2186 = vmatpush1.msra.mxu0 0.0
        %2187 = vmatprep.subr.mxu0 0.0
        %2188 = vmatpush1.msra.mxu0 0.0
        %2189 = vmatprep.mubr.f32.mxu0 0.0
        %2190 = vmatmul.mubr.f32.gmra.mrb[0].mxu0 %v1934
        %v2191 = vpop.f32.mrb[0].mxu0
        %v2192 = vadd.f32 0.0, %v2191
        %v2193 = vpop.f32.mrb[0].mxu0
        %2194 = vmatprep.mubr.f32.mxu0 0.0
        %2195 = vmatmul.mubr.f32.gmra.mrb[0].mxu0 %v1937
        %v2196 = vpop.f32.mrb[0].mxu0
        %v2197 = vadd.f32 0.0, %v2196
        %v2198 = vpop.f32.mrb[0].mxu0
        %2199 = vmatprep.mubr.f32.mxu0 0.0
        %2200 = vmatmul.mubr.f32.gmra.mrb[0].mxu0 %v1940
        %v2201 = vpop.f32.mrb[0].mxu0
        %v2202 = vadd.f32 0.0, %v2201
        %v2203 = vpop.f32.mrb[0].mxu0
        %2204 = vmatprep.mubr.f32.mxu0 0.0
        %2205 = vmatmul.mubr.f32.gmra.mrb[0].mxu0 %v1943
        %v2206 = vpop.f32.mrb[0].mxu0
        %v2207 = vadd.f32 0.0, %v2206
        %v2208 = vpop.f32.mrb[0].mxu0
        %2209 = vmatprep.mubr.f32.mxu0 0.0
        %2210 = vmatmul.mubr.f32.gmra.mrb[0].mxu0 %v1946
        %v2211 = vpop.f32.mrb[0].mxu0
        %v2212 = vadd.f32 0.0, %v2211
        %v2213 = vpop.f32.mrb[0].mxu0
        %2214 = vmatprep.mubr.f32.mxu0 0.0
        %2215 = vmatmul.mubr.f32.gmra.mrb[0].mxu0 %v1949
        %v2216 = vpop.f32.mrb[0].mxu0
        %v2217 = vadd.f32 0.0, %v2216
        %v2218 = vpop.f32.mrb[0].mxu0
        %2219 = vmatprep.mubr.f32.mxu0 0.0
        %2220 = vmatmul.mubr.f32.gmra.mrb[0].mxu0 %v1952
        %v2221 = vpop.f32.mrb[0].mxu0
        %v2222 = vadd.f32 0.0, %v2221
        %v2223 = vpop.f32.mrb[0].mxu0
        %2224 = vmatprep.mubr.f32.mxu0 0.0
        %2225 = vmatmul.mubr.f32.gmra.mrb[0].mxu0 %v1955
        %v2226 = vpop.f32.mrb[0].mxu0
        %v2227 = vadd.f32 0.0, %v2226
        %v2228 = vpop.f32.mrb[0].mxu0
        %2229 = vmatprep.mubr.f32.mxu0 0.0
        %2230 = vmatmul.mubr.f32.gmra.mrb[0].mxu0 %v1958
        %v2231 = vpop.f32.mrb[0].mxu0
        %v2232 = vadd.f32 0.0, %v2231
        %v2233 = vpop.f32.mrb[0].mxu0
        %2234 = vmatprep.mubr.f32.mxu0 0.0
        %2235 = vmatmul.mubr.f32.gmra.mrb[0].mxu0 %v1961
        %v2236 = vpop.f32.mrb[0].mxu0
        %v2237 = vadd.f32 0.0, %v2236
        %v2238 = vpop.f32.mrb[0].mxu0
        %2239 = vmatprep.mubr.f32.mxu0 0.0
        %2240 = vmatmul.mubr.f32.gmra.mrb[0].mxu0 %v1964
        %v2241 = vpop.f32.mrb[0].mxu0
        %v2242 = vadd.f32 0.0, %v2241
        %v2243 = vpop.f32.mrb[0].mxu0
        %2244 = vmatprep.mubr.f32.mxu0 0.0
        %2245 = vmatmul.mubr.f32.gmra.mrb[0].mxu0 %v1967
        %v2246 = vpop.f32.mrb[0].mxu0
        %v2247 = vadd.f32 0.0, %v2246
        %v2248 = vpop.f32.mrb[0].mxu0
        %2249 = vmatprep.mubr.f32.mxu0 0.0
        %2250 = vmatmul.mubr.f32.gmra.mrb[0].mxu0 %v1970
        %v2251 = vpop.f32.mrb[0].mxu0
        %v2252 = vadd.f32 0.0, %v2251
        %v2253 = vpop.f32.mrb[0].mxu0
        %2254 = vmatprep.mubr.f32.mxu0 0.0
        %2255 = vmatmul.mubr.f32.gmra.mrb[0].mxu0 %v1973
        %v2256 = vpop.f32.mrb[0].mxu0
        %v2257 = vadd.f32 0.0, %v2256
        %v2258 = vpop.f32.mrb[0].mxu0
        %2259 = vmatprep.mubr.f32.mxu0 0.0
        %2260 = vmatmul.mubr.f32.gmra.mrb[0].mxu0 %v1976
        %v2261 = vpop.f32.mrb[0].mxu0
        %v2262 = vadd.f32 0.0, %v2261
        %v2263 = vpop.f32.mrb[0].mxu0
        %2264 = vmatprep.mubr.f32.mxu0 0.0
        %2265 = vmatmul.mubr.f32.gmra.mrb[0].mxu0 %v1979
        %v2266 = vpop.f32.mrb[0].mxu0
        %v2267 = vadd.f32 0.0, %v2266
        %v2268 = vpop.f32.mrb[0].mxu0
        %2269 = vmatprep.mubr.f32.mxu0 0.0
        %2270 = vmatmul.mubr.f32.gmra.mrb[0].mxu0 %v1982
        %v2271 = vpop.f32.mrb[0].mxu0
        %v2272 = vadd.f32 0.0, %v2271
        %v2273 = vpop.f32.mrb[0].mxu0
        %2274 = vmatprep.mubr.f32.mxu0 0.0
        %2275 = vmatmul.mubr.f32.gmra.mrb[0].mxu0 %v1985
        %v2276 = vpop.f32.mrb[0].mxu0
        %v2277 = vadd.f32 0.0, %v2276
        %v2278 = vpop.f32.mrb[0].mxu0
        %2279 = vmatprep.mubr.f32.mxu0 0.0
        %2280 = vmatmul.mubr.f32.gmra.mrb[0].mxu0 %v1988
        %v2281 = vpop.f32.mrb[0].mxu0
        %v2282 = vadd.f32 0.0, %v2281
        %v2283 = vpop.f32.mrb[0].mxu0
        %2284 = vmatprep.mubr.f32.mxu0 0.0
        %2285 = vmatmul.mubr.f32.gmra.mrb[0].mxu0 %v1991
        %v2286 = vpop.f32.mrb[0].mxu0
        %v2287 = vadd.f32 0.0, %v2286
        %v2288 = vpop.f32.mrb[0].mxu0
        %2289 = vmatprep.mubr.f32.mxu0 0.0
        %2290 = vmatmul.mubr.f32.gmra.mrb[0].mxu0 %v1994
        %v2291 = vpop.f32.mrb[0].mxu0
        %v2292 = vadd.f32 0.0, %v2291
        %v2293 = vpop.f32.mrb[0].mxu0
        %2294 = vmatprep.mubr.f32.mxu0 0.0
        %2295 = vmatmul.mubr.f32.gmra.mrb[0].mxu0 %v1997
        %v2296 = vpop.f32.mrb[0].mxu0
        %v2297 = vadd.f32 0.0, %v2296
        %v2298 = vpop.f32.mrb[0].mxu0
        %2299 = vmatprep.mubr.f32.mxu0 0.0
        %2300 = vmatmul.mubr.f32.gmra.mrb[0].mxu0 %v2000
        %v2301 = vpop.f32.mrb[0].mxu0
        %v2302 = vadd.f32 0.0, %v2301
        %v2303 = vpop.f32.mrb[0].mxu0
        %2304 = vmatprep.mubr.f32.mxu0 0.0
        %2305 = vmatmul.mubr.f32.gmra.mrb[0].mxu0 %v2003
        %v2306 = vpop.f32.mrb[0].mxu0
        %v2307 = vadd.f32 0.0, %v2306
        %v2308 = vpop.f32.mrb[0].mxu0
        %2309 = vmatprep.mubr.f32.mxu0 0.0
        %2310 = vmatmul.mubr.f32.gmra.mrb[0].mxu0 %v2006
        %v2311 = vpop.f32.mrb[0].mxu0
        %v2312 = vadd.f32 0.0, %v2311
        %v2313 = vpop.f32.mrb[0].mxu0
        %2314 = vmatprep.mubr.f32.mxu0 0.0
        %2315 = vmatmul.mubr.f32.gmra.mrb[0].mxu0 %v2009
        %v2316 = vpop.f32.mrb[0].mxu0
        %v2317 = vadd.f32 0.0, %v2316
        %v2318 = vpop.f32.mrb[0].mxu0
        %2319 = vmatprep.mubr.f32.mxu0 0.0
        %2320 = vmatmul.mubr.f32.gmra.mrb[0].mxu0 %v2012
        %v2321 = vpop.f32.mrb[0].mxu0
        %v2322 = vadd.f32 0.0, %v2321
        %v2323 = vpop.f32.mrb[0].mxu0
        %2324 = vmatprep.mubr.f32.mxu0 0.0
        %2325 = vmatmul.mubr.f32.gmra.mrb[0].mxu0 %v2015
        %v2326 = vpop.f32.mrb[0].mxu0
        %v2327 = vadd.f32 0.0, %v2326
        %v2328 = vpop.f32.mrb[0].mxu0
        %2329 = vmatprep.mubr.f32.mxu0 0.0
        %2330 = vmatmul.mubr.f32.gmra.mrb[0].mxu0 %v2018
        %v2331 = vpop.f32.mrb[0].mxu0
        %v2332 = vadd.f32 0.0, %v2331
        %v2333 = vpop.f32.mrb[0].mxu0
        %2334 = vmatprep.mubr.f32.mxu0 0.0
        %2335 = vmatmul.mubr.f32.gmra.mrb[0].mxu0 %v2021
        %v2336 = vpop.f32.mrb[0].mxu0
        %v2337 = vadd.f32 0.0, %v2336
        %v2338 = vpop.f32.mrb[0].mxu0
        %2339 = vmatprep.mubr.f32.mxu0 0.0
        %2340 = vmatmul.mubr.f32.gmra.mrb[0].mxu0 %v2024
        %v2341 = vpop.f32.mrb[0].mxu0
        %v2342 = vadd.f32 0.0, %v2341
        %v2343 = vpop.f32.mrb[0].mxu0
        %2344 = vmatprep.mubr.f32.mxu0 0.0
        %2345 = vmatmul.mubr.f32.gmra.mrb[0].mxu0 %v2027
        %v2346 = vpop.f32.mrb[0].mxu0
        %v2347 = vadd.f32 0.0, %v2346
        %v2348 = vpop.f32.mrb[0].mxu0
        %2349 = vmatprep.mubr.f32.mxu0 0.0
        %2350 = vmatmul.mubr.f32.gmra.mrb[0].mxu0 %v2030
        %v2351 = vpop.f32.mrb[0].mxu0
        %v2352 = vadd.f32 0.0, %v2351
        %v2353 = vpop.f32.mrb[0].mxu0
        %2354 = vmatprep.mubr.f32.mxu0 0.0
        %2355 = vmatmul.mubr.f32.gmra.mrb[0].mxu0 %v2033
        %v2356 = vpop.f32.mrb[0].mxu0
        %v2357 = vadd.f32 0.0, %v2356
        %v2358 = vpop.f32.mrb[0].mxu0
        %2359 = vmatprep.mubr.f32.mxu0 0.0
        %2360 = vmatmul.mubr.f32.gmra.mrb[0].mxu0 %v2036
        %v2361 = vpop.f32.mrb[0].mxu0
        %v2362 = vadd.f32 0.0, %v2361
        %v2363 = vpop.f32.mrb[0].mxu0
        %2364 = vmatprep.mubr.f32.mxu0 0.0
        %2365 = vmatmul.mubr.f32.gmra.mrb[0].mxu0 %v2039
        %v2366 = vpop.f32.mrb[0].mxu0
        %v2367 = vadd.f32 0.0, %v2366
        %v2368 = vpop.f32.mrb[0].mxu0
        %2369 = vmatprep.mubr.f32.mxu0 0.0
        %2370 = vmatmul.mubr.f32.gmra.mrb[0].mxu0 %v2042
        %v2371 = vpop.f32.mrb[0].mxu0
        %v2372 = vadd.f32 0.0, %v2371
        %v2373 = vpop.f32.mrb[0].mxu0
        %2374 = vmatprep.mubr.f32.mxu0 0.0
        %2375 = vmatmul.mubr.f32.gmra.mrb[0].mxu0 %v2045
        %v2376 = vpop.f32.mrb[0].mxu0
        %v2377 = vadd.f32 0.0, %v2376
        %v2378 = vpop.f32.mrb[0].mxu0
        %2379 = vmatprep.mubr.f32.mxu0 0.0
        %2380 = vmatmul.mubr.f32.gmra.mrb[0].mxu0 %v2048
        %v2381 = vpop.f32.mrb[0].mxu0
        %v2382 = vadd.f32 0.0, %v2381
        %v2383 = vpop.f32.mrb[0].mxu0
        %2384 = vmatprep.mubr.f32.mxu0 0.0
        %2385 = vmatmul.mubr.f32.gmra.mrb[0].mxu0 %v2051
        %v2386 = vpop.f32.mrb[0].mxu0
        %v2387 = vadd.f32 0.0, %v2386
        %v2388 = vpop.f32.mrb[0].mxu0
        %2389 = vmatprep.mubr.f32.mxu0 0.0
        %2390 = vmatmul.mubr.f32.gmra.mrb[0].mxu0 %v2054
        %v2391 = vpop.f32.mrb[0].mxu0
        %v2392 = vadd.f32 0.0, %v2391
        %v2393 = vpop.f32.mrb[0].mxu0
        %2394 = vmatprep.mubr.f32.mxu0 0.0
        %2395 = vmatmul.mubr.f32.gmra.mrb[0].mxu0 %v2057
        %v2396 = vpop.f32.mrb[0].mxu0
        %v2397 = vadd.f32 0.0, %v2396
        %v2398 = vpop.f32.mrb[0].mxu0
        %2399 = vmatprep.mubr.f32.mxu0 0.0
        %2400 = vmatmul.mubr.f32.gmra.mrb[0].mxu0 %v2060
        %v2401 = vpop.f32.mrb[0].mxu0
        %v2402 = vadd.f32 0.0, %v2401
        %v2403 = vpop.f32.mrb[0].mxu0
        %2404 = vmatprep.mubr.f32.mxu0 0.0
        %2405 = vmatmul.mubr.f32.gmra.mrb[0].mxu0 %v2063
        %v2406 = vpop.f32.mrb[0].mxu0
        %v2407 = vadd.f32 0.0, %v2406
        %v2408 = vpop.f32.mrb[0].mxu0
        %2409 = vmatprep.mubr.f32.mxu0 0.0
        %2410 = vmatmul.mubr.f32.gmra.mrb[0].mxu0 %v2066
        %v2411 = vpop.f32.mrb[0].mxu0
        %v2412 = vadd.f32 0.0, %v2411
        %v2413 = vpop.f32.mrb[0].mxu0
        %2414 = vmatprep.mubr.f32.mxu0 0.0
        %2415 = vmatmul.mubr.f32.gmra.mrb[0].mxu0 %v2069
        %v2416 = vpop.f32.mrb[0].mxu0
        %v2417 = vadd.f32 0.0, %v2416
        %v2418 = vpop.f32.mrb[0].mxu0
        %2419 = vmatprep.mubr.f32.mxu0 0.0
        %2420 = vmatmul.mubr.f32.gmra.mrb[0].mxu0 %v2072
        %v2421 = vpop.f32.mrb[0].mxu0
        %v2422 = vadd.f32 0.0, %v2421
        %v2423 = vpop.f32.mrb[0].mxu0
        %2424 = vmatprep.mubr.f32.mxu0 0.0
        %2425 = vmatmul.mubr.f32.gmra.mrb[0].mxu0 %v2075
        %v2426 = vpop.f32.mrb[0].mxu0
        %v2427 = vadd.f32 0.0, %v2426
        %v2428 = vpop.f32.mrb[0].mxu0
        %2429 = vmatprep.mubr.f32.mxu0 0.0
        %2430 = vmatmul.mubr.f32.gmra.mrb[0].mxu0 %v2078
        %v2431 = vpop.f32.mrb[0].mxu0
        %v2432 = vadd.f32 0.0, %v2431
        %v2433 = vpop.f32.mrb[0].mxu0
        %2434 = vmatprep.mubr.f32.mxu0 0.0
        %2435 = vmatmul.mubr.f32.gmra.mrb[0].mxu0 %v2081
        %v2436 = vpop.f32.mrb[0].mxu0
        %v2437 = vadd.f32 0.0, %v2436
        %v2438 = vpop.f32.mrb[0].mxu0
        %2439 = vmatprep.mubr.f32.mxu0 0.0
        %2440 = vmatmul.mubr.f32.gmra.mrb[0].mxu0 %v2084
        %v2441 = vpop.f32.mrb[0].mxu0
        %v2442 = vadd.f32 0.0, %v2441
        %v2443 = vpop.f32.mrb[0].mxu0
        %2444 = vmatprep.mubr.f32.mxu0 0.0
        %2445 = vmatmul.mubr.f32.gmra.mrb[0].mxu0 %v2087
        %v2446 = vpop.f32.mrb[0].mxu0
        %v2447 = vadd.f32 0.0, %v2446
        %v2448 = vpop.f32.mrb[0].mxu0
        %2449 = vmatprep.mubr.f32.mxu0 0.0
        %2450 = vmatmul.mubr.f32.gmra.mrb[0].mxu0 %v2090
        %v2451 = vpop.f32.mrb[0].mxu0
        %v2452 = vadd.f32 0.0, %v2451
        %v2453 = vpop.f32.mrb[0].mxu0
        %2454 = vmatprep.mubr.f32.mxu0 0.0
        %2455 = vmatmul.mubr.f32.gmra.mrb[0].mxu0 %v2093
        %v2456 = vpop.f32.mrb[0].mxu0
        %v2457 = vadd.f32 0.0, %v2456
        %v2458 = vpop.f32.mrb[0].mxu0
        %2459 = vmatprep.mubr.f32.mxu0 0.0
        %2460 = vmatmul.mubr.f32.gmra.mrb[0].mxu0 %v2096
        %v2461 = vpop.f32.mrb[0].mxu0
        %v2462 = vadd.f32 0.0, %v2461
        %v2463 = vpop.f32.mrb[0].mxu0
        %2464 = vmatprep.mubr.f32.mxu0 0.0
        %2465 = vmatmul.mubr.f32.gmra.mrb[0].mxu0 %v2099
        %v2466 = vpop.f32.mrb[0].mxu0
        %v2467 = vadd.f32 0.0, %v2466
        %v2468 = vpop.f32.mrb[0].mxu0
        %2469 = vmatprep.mubr.f32.mxu0 0.0
        %2470 = vmatmul.mubr.f32.gmra.mrb[0].mxu0 %v2102
        %v2471 = vpop.f32.mrb[0].mxu0
        %v2472 = vadd.f32 0.0, %v2471
        %v2473 = vpop.f32.mrb[0].mxu0
        %2474 = vmatprep.mubr.f32.mxu0 0.0
        %2475 = vmatmul.mubr.f32.gmra.mrb[0].mxu0 %v2105
        %v2476 = vpop.f32.mrb[0].mxu0
        %v2477 = vadd.f32 0.0, %v2476
        %v2478 = vpop.f32.mrb[0].mxu0
        %2479 = vmatprep.mubr.f32.mxu0 0.0
        %2480 = vmatmul.mubr.f32.gmra.mrb[0].mxu0 %v2108
        %v2481 = vpop.f32.mrb[0].mxu0
        %v2482 = vadd.f32 0.0, %v2481
        %v2483 = vpop.f32.mrb[0].mxu0
        %2484 = vmatprep.mubr.f32.mxu0 0.0
        %2485 = vmatmul.mubr.f32.gmra.mrb[0].mxu0 %v2111
        %v2486 = vpop.f32.mrb[0].mxu0
        %v2487 = vadd.f32 0.0, %v2486
        %v2488 = vpop.f32.mrb[0].mxu0
        %2489 = vmatprep.mubr.f32.mxu0 0.0
        %2490 = vmatmul.mubr.f32.gmra.mrb[0].mxu0 %v2114
        %v2491 = vpop.f32.mrb[0].mxu0
        %v2492 = vadd.f32 0.0, %v2491
        %v2493 = vpop.f32.mrb[0].mxu0
        %2494 = vmatprep.mubr.f32.mxu0 0.0
        %2495 = vmatmul.mubr.f32.gmra.mrb[0].mxu0 %v2117
        %v2496 = vpop.f32.mrb[0].mxu0
        %v2497 = vadd.f32 0.0, %v2496
        %v2498 = vpop.f32.mrb[0].mxu0
        %2499 = vmatprep.mubr.f32.mxu0 0.0
        %2500 = vmatmul.mubr.f32.gmra.mrb[0].mxu0 %v2120
        %v2501 = vpop.f32.mrb[0].mxu0
        %v2502 = vadd.f32 0.0, %v2501
        %v2503 = vpop.f32.mrb[0].mxu0
        %2504 = vmatprep.mubr.f32.mxu0 0.0
        %2505 = vmatmul.mubr.f32.gmra.mrb[0].mxu0 %v2123
        %v2506 = vpop.f32.mrb[0].mxu0
        %v2507 = vadd.f32 0.0, %v2506
        %v2508 = vpop.f32.mrb[0].mxu0
        %2509 = vdwg.mxu0
        %v2510 = vmul.f32 %v1804, %v2192
        %v2511 = vmul.f32 %v1805, %v2197
        %v2512 = vmul.f32 %v1806, %v2202
        %v2513 = vmul.f32 %v1807, %v2207
        %v2514 = vmul.f32 %v1808, %v2212
        %v2515 = vmul.f32 %v1809, %v2217
        %v2516 = vmul.f32 %v1810, %v2222
        %v2517 = vmul.f32 %v1811, %v2227
        %v2518 = vmul.f32 %v1812, %v2232
        %v2519 = vmul.f32 %v1813, %v2237
        %v2520 = vmul.f32 %v1814, %v2242
        %v2521 = vmul.f32 %v1815, %v2247
        %v2522 = vmul.f32 %v1816, %v2252
        %v2523 = vmul.f32 %v1817, %v2257
        %v2524 = vmul.f32 %v1818, %v2262
        %v2525 = vmul.f32 %v1819, %v2267
        %v2526 = vmul.f32 %v1820, %v2272
        %v2527 = vmul.f32 %v1821, %v2277
        %v2528 = vmul.f32 %v1822, %v2282
        %v2529 = vmul.f32 %v1823, %v2287
        %v2530 = vmul.f32 %v1824, %v2292
        %v2531 = vmul.f32 %v1825, %v2297
        %v2532 = vmul.f32 %v1826, %v2302
        %v2533 = vmul.f32 %v1827, %v2307
        %v2534 = vmul.f32 %v1828, %v2312
        %v2535 = vmul.f32 %v1829, %v2317
        %v2536 = vmul.f32 %v1830, %v2322
        %v2537 = vmul.f32 %v1831, %v2327
        %v2538 = vmul.f32 %v1832, %v2332
        %v2539 = vmul.f32 %v1833, %v2337
        %v2540 = vmul.f32 %v1834, %v2342
        %v2541 = vmul.f32 %v1835, %v2347
        %v2542 = vmul.f32 %v1836, %v2352
        %v2543 = vmul.f32 %v1837, %v2357
        %v2544 = vmul.f32 %v1838, %v2362
        %v2545 = vmul.f32 %v1839, %v2367
        %v2546 = vmul.f32 %v1840, %v2372
        %v2547 = vmul.f32 %v1841, %v2377
        %v2548 = vmul.f32 %v1842, %v2382
        %v2549 = vmul.f32 %v1843, %v2387
        %v2550 = vmul.f32 %v1844, %v2392
        %v2551 = vmul.f32 %v1845, %v2397
        %v2552 = vmul.f32 %v1846, %v2402
        %v2553 = vmul.f32 %v1847, %v2407
        %v2554 = vmul.f32 %v1848, %v2412
        %v2555 = vmul.f32 %v1849, %v2417
        %v2556 = vmul.f32 %v1850, %v2422
        %v2557 = vmul.f32 %v1851, %v2427
        %v2558 = vmul.f32 %v1852, %v2432
        %v2559 = vmul.f32 %v1853, %v2437
        %v2560 = vmul.f32 %v1854, %v2442
        %v2561 = vmul.f32 %v1855, %v2447
        %v2562 = vmul.f32 %v1856, %v2452
        %v2563 = vmul.f32 %v1857, %v2457
        %v2564 = vmul.f32 %v1858, %v2462
        %v2565 = vmul.f32 %v1859, %v2467
        %v2566 = vmul.f32 %v1860, %v2472
        %v2567 = vmul.f32 %v1861, %v2477
        %v2568 = vmul.f32 %v1862, %v2482
        %v2569 = vmul.f32 %v1863, %v2487
        %v2570 = vmul.f32 %v1864, %v2492
        %v2571 = vmul.f32 %v1865, %v2497
        %v2572 = vmul.f32 %v1866, %v2502
        %v2573 = vmul.f32 %v1867, %v2507
        %v2574 = vld [vmem:[%s509] sm:$0xff]
        %v2575 = vld [vmem:[%s509 + $0x8] sm:$0xff]
        %v2576 = vld [vmem:[%s509 + $0x10] sm:$0xff]
        %v2577 = vld [vmem:[%s509 + $0x18] sm:$0xff]
        %v2578 = vld [vmem:[%s509 + $0x50] sm:$0xff]
        %v2579 = vld [vmem:[%s509 + $0x58] sm:$0xff]
        %v2580 = vld [vmem:[%s509 + $0x60] sm:$0xff]
        %v2581 = vld [vmem:[%s509 + $0x68] sm:$0xff]
        %v2582 = vld [vmem:[%s509 + $0xa0] sm:$0xff]
        %v2583 = vld [vmem:[%s509 + $0xa8] sm:$0xff]
        %v2584 = vld [vmem:[%s509 + $0xb0] sm:$0xff]
        %v2585 = vld [vmem:[%s509 + $0xb8] sm:$0xff]
        %v2586 = vld [vmem:[%s509 + $0xf0] sm:$0xff]
        %v2587 = vld [vmem:[%s509 + $0xf8] sm:$0xff]
        %v2588 = vld [vmem:[%s509 + $0x100] sm:$0xff]
        %v2589 = vld [vmem:[%s509 + $0x108] sm:$0xff]
        %v2590 = vld [vmem:[%s6] sm:$0xff]
        %v2591 = vld [vmem:[%s6 + $0x8] sm:$0xff]
        %v2592 = vld [vmem:[%s6 + $0x10] sm:$0xff]
        %v2593 = vld [vmem:[%s6 + $0x18] sm:$0xff]
        %v2594 = vld [vmem:[%s6 + $0x20] sm:$0xff]
        %v2595 = vld [vmem:[%s6 + $0x28] sm:$0xff]
        %v2596 = vld [vmem:[%s6 + $0x30] sm:$0xff]
        %v2597 = vld [vmem:[%s6 + $0x38] sm:$0xff]
        %v2598 = vld [vmem:[%s6 + $0x40] sm:$0xff]
        %v2599 = vld [vmem:[%s6 + $0x48] sm:$0xff]
        %v2600 = vld [vmem:[%s6 + $0x50] sm:$0xff]
        %v2601 = vld [vmem:[%s6 + $0x58] sm:$0xff]
        %v2602 = vld [vmem:[%s6 + $0x60] sm:$0xff]
        %v2603 = vld [vmem:[%s6 + $0x68] sm:$0xff]
        %v2604 = vld [vmem:[%s6 + $0x70] sm:$0xff]
        %v2605 = vld [vmem:[%s6 + $0x78] sm:$0xff]
        %v2606 = vld [vmem:[%s6 + $0x80] sm:$0xff]
        %v2607 = vld [vmem:[%s6 + $0x88] sm:$0xff]
        %v2608 = vld [vmem:[%s6 + $0x90] sm:$0xff]
        %v2609 = vld [vmem:[%s6 + $0x98] sm:$0xff]
        %v2610 = vld [vmem:[%s6 + $0xa0] sm:$0xff]
        %v2611 = vld [vmem:[%s6 + $0xa8] sm:$0xff]
        %v2612 = vld [vmem:[%s6 + $0xb0] sm:$0xff]
        %v2613 = vld [vmem:[%s6 + $0xb8] sm:$0xff]
        %v2614 = vld [vmem:[%s6 + $0xc0] sm:$0xff]
        %v2615 = vld [vmem:[%s6 + $0xc8] sm:$0xff]
        %v2616 = vld [vmem:[%s6 + $0xd0] sm:$0xff]
        %v2617 = vld [vmem:[%s6 + $0xd8] sm:$0xff]
        %v2618 = vld [vmem:[%s6 + $0xe0] sm:$0xff]
        %v2619 = vld [vmem:[%s6 + $0xe8] sm:$0xff]
        %v2620 = vld [vmem:[%s6 + $0xf0] sm:$0xff]
        %v2621 = vld [vmem:[%s6 + $0xf8] sm:$0xff]
        %v2622 = vld [vmem:[%s504] sm:$0xff]
        %v2623 = vld [vmem:[%s504 + $0x8] sm:$0xff]
        %vm2624 = vcmask 130048
        %v2626 = vsel %vm2624, %v2590, 0
        %v2629 = vsel %vm2624, %v2591, 0
        %v2632 = vsel %vm2624, %v2592, 0
        %v2635 = vsel %vm2624, %v2593, 0
        %v2638 = vsel %vm2624, %v2594, 0
        %v2641 = vsel %vm2624, %v2595, 0
        %v2644 = vsel %vm2624, %v2596, 0
        %v2647 = vsel %vm2624, %v2597, 0
        %v2650 = vsel %vm2624, %v2598, 0
        %v2653 = vsel %vm2624, %v2599, 0
        %v2656 = vsel %vm2624, %v2600, 0
        %v2659 = vsel %vm2624, %v2601, 0
        %v2662 = vsel %vm2624, %v2602, 0
        %v2665 = vsel %vm2624, %v2603, 0
        %v2668 = vsel %vm2624, %v2604, 0
        %v2671 = vsel %vm2624, %v2605, 0
        %v2674 = vsel %vm2624, %v2606, 0
        %v2677 = vsel %vm2624, %v2607, 0
        %v2680 = vsel %vm2624, %v2608, 0
        %v2683 = vsel %vm2624, %v2609, 0
        %v2686 = vsel %vm2624, %v2610, 0
        %v2689 = vsel %vm2624, %v2611, 0
        %v2692 = vsel %vm2624, %v2612, 0
        %v2695 = vsel %vm2624, %v2613, 0
        %v2698 = vsel %vm2624, %v2614, 0
        %v2701 = vsel %vm2624, %v2615, 0
        %v2704 = vsel %vm2624, %v2616, 0
        %v2707 = vsel %vm2624, %v2617, 0
        %v2710 = vsel %vm2624, %v2618, 0
        %v2713 = vsel %vm2624, %v2619, 0
        %v2716 = vsel %vm2624, %v2620, 0
        %v2719 = vsel %vm2624, %v2621, 0
        %2721 = vmatprep.subr.mxu0 0.0
        %2722 = vmatpush1.msra.mxu0 %v2622
        %2723 = vmatprep.subr.mxu0 0.0
        %2724 = vmatpush1.msra.mxu0 %v2623
        %2725 = vmatprep.subr.mxu0 0.0
        %2726 = vmatpush1.msra.mxu0 0.0
        %2727 = vmatprep.subr.mxu0 0.0
        %2728 = vmatpush1.msra.mxu0 0.0
        %2729 = vmatprep.subr.mxu0 0.0
        %2730 = vmatpush1.msra.mxu0 0.0
        %2731 = vmatprep.subr.mxu0 0.0
        %2732 = vmatpush1.msra.mxu0 0.0
        %2733 = vmatprep.subr.mxu0 0.0
        %2734 = vmatpush1.msra.mxu0 0.0
        %2735 = vmatprep.subr.mxu0 0.0
        %2736 = vmatpush1.msra.mxu0 0.0
        %2737 = vmatprep.subr.mxu0 0.0
        %2738 = vmatpush1.msra.mxu0 0.0
        %2739 = vmatprep.subr.mxu0 0.0
        %2740 = vmatpush1.msra.mxu0 0.0
        %2741 = vmatprep.subr.mxu0 0.0
        %2742 = vmatpush1.msra.mxu0 0.0
        %2743 = vmatprep.subr.mxu0 0.0
        %2744 = vmatpush1.msra.mxu0 0.0
        %2745 = vmatprep.subr.mxu0 0.0
        %2746 = vmatpush1.msra.mxu0 0.0
        %2747 = vmatprep.subr.mxu0 0.0
        %2748 = vmatpush1.msra.mxu0 0.0
        %2749 = vmatprep.subr.mxu0 0.0
        %2750 = vmatpush1.msra.mxu0 0.0
        %2751 = vmatprep.subr.mxu0 0.0
        %2752 = vmatpush1.msra.mxu0 0.0
        %2753 = vmatprep.subr.mxu0 0.0
        %2754 = vmatpush1.msra.mxu0 0.0
        %2755 = vmatprep.subr.mxu0 0.0
        %2756 = vmatpush1.msra.mxu0 0.0
        %2757 = vmatprep.subr.mxu0 0.0
        %2758 = vmatpush1.msra.mxu0 0.0
        %2759 = vmatprep.subr.mxu0 0.0
        %2760 = vmatpush1.msra.mxu0 0.0
        %2761 = vmatprep.subr.mxu0 0.0
        %2762 = vmatpush1.msra.mxu0 0.0
        %2763 = vmatprep.subr.mxu0 0.0
        %2764 = vmatpush1.msra.mxu0 0.0
        %2765 = vmatprep.subr.mxu0 0.0
        %2766 = vmatpush1.msra.mxu0 0.0
        %2767 = vmatprep.subr.mxu0 0.0
        %2768 = vmatpush1.msra.mxu0 0.0
        %2769 = vmatprep.subr.mxu0 0.0
        %2770 = vmatpush1.msra.mxu0 0.0
        %2771 = vmatprep.subr.mxu0 0.0
        %2772 = vmatpush1.msra.mxu0 0.0
        %2773 = vmatprep.subr.mxu0 0.0
        %2774 = vmatpush1.msra.mxu0 0.0
        %2775 = vmatprep.subr.mxu0 0.0
        %2776 = vmatpush1.msra.mxu0 0.0
        %2777 = vmatprep.subr.mxu0 0.0
        %2778 = vmatpush1.msra.mxu0 0.0
        %2779 = vmatprep.subr.mxu0 0.0
        %2780 = vmatpush1.msra.mxu0 0.0
        %2781 = vmatprep.subr.mxu0 0.0
        %2782 = vmatpush1.msra.mxu0 0.0
        %2783 = vmatprep.subr.mxu0 0.0
        %2784 = vmatpush1.msra.mxu0 0.0
        %2785 = vmatprep.mubr.f32.mxu0 0.0
        %2786 = vmatmul.mubr.f32.gmra.mrb[0].mxu0 %v2626
        %v2787 = vpop.f32.mrb[0].mxu0
        %v2788 = vadd.f32 0.0, %v2787
        %v2789 = vpop.f32.mrb[0].mxu0
        %2790 = vmatprep.mubr.f32.mxu0 0.0
        %2791 = vmatmul.mubr.f32.gmra.mrb[0].mxu0 %v2629
        %v2792 = vpop.f32.mrb[0].mxu0
        %v2793 = vadd.f32 0.0, %v2792
        %v2794 = vpop.f32.mrb[0].mxu0
        %2795 = vmatprep.mubr.f32.mxu0 0.0
        %2796 = vmatmul.mubr.f32.gmra.mrb[0].mxu0 %v2632
        %v2797 = vpop.f32.mrb[0].mxu0
        %v2798 = vadd.f32 0.0, %v2797
        %v2799 = vpop.f32.mrb[0].mxu0
        %2800 = vmatprep.mubr.f32.mxu0 0.0
        %2801 = vmatmul.mubr.f32.gmra.mrb[0].mxu0 %v2635
        %v2802 = vpop.f32.mrb[0].mxu0
        %v2803 = vadd.f32 0.0, %v2802
        %v2804 = vpop.f32.mrb[0].mxu0
        %2805 = vmatprep.mubr.f32.mxu0 0.0
        %2806 = vmatmul.mubr.f32.gmra.mrb[0].mxu0 %v2638
        %v2807 = vpop.f32.mrb[0].mxu0
        %v2808 = vadd.f32 0.0, %v2807
        %v2809 = vpop.f32.mrb[0].mxu0
        %2810 = vmatprep.mubr.f32.mxu0 0.0
        %2811 = vmatmul.mubr.f32.gmra.mrb[0].mxu0 %v2641
        %v2812 = vpop.f32.mrb[0].mxu0
        %v2813 = vadd.f32 0.0, %v2812
        %v2814 = vpop.f32.mrb[0].mxu0
        %2815 = vmatprep.mubr.f32.mxu0 0.0
        %2816 = vmatmul.mubr.f32.gmra.mrb[0].mxu0 %v2644
        %v2817 = vpop.f32.mrb[0].mxu0
        %v2818 = vadd.f32 0.0, %v2817
        %v2819 = vpop.f32.mrb[0].mxu0
        %2820 = vmatprep.mubr.f32.mxu0 0.0
        %2821 = vmatmul.mubr.f32.gmra.mrb[0].mxu0 %v2647
        %v2822 = vpop.f32.mrb[0].mxu0
        %v2823 = vadd.f32 0.0, %v2822
        %v2824 = vpop.f32.mrb[0].mxu0
        %2825 = vmatprep.mubr.f32.mxu0 0.0
        %2826 = vmatmul.mubr.f32.gmra.mrb[0].mxu0 %v2650
        %v2827 = vpop.f32.mrb[0].mxu0
        %v2828 = vadd.f32 0.0, %v2827
        %v2829 = vpop.f32.mrb[0].mxu0
        %2830 = vmatprep.mubr.f32.mxu0 0.0
        %2831 = vmatmul.mubr.f32.gmra.mrb[0].mxu0 %v2653
        %v2832 = vpop.f32.mrb[0].mxu0
        %v2833 = vadd.f32 0.0, %v2832
        %v2834 = vpop.f32.mrb[0].mxu0
        %2835 = vmatprep.mubr.f32.mxu0 0.0
        %2836 = vmatmul.mubr.f32.gmra.mrb[0].mxu0 %v2656
        %v2837 = vpop.f32.mrb[0].mxu0
        %v2838 = vadd.f32 0.0, %v2837
        %v2839 = vpop.f32.mrb[0].mxu0
        %2840 = vmatprep.mubr.f32.mxu0 0.0
        %2841 = vmatmul.mubr.f32.gmra.mrb[0].mxu0 %v2659
        %v2842 = vpop.f32.mrb[0].mxu0
        %v2843 = vadd.f32 0.0, %v2842
        %v2844 = vpop.f32.mrb[0].mxu0
        %2845 = vmatprep.mubr.f32.mxu0 0.0
        %2846 = vmatmul.mubr.f32.gmra.mrb[0].mxu0 %v2662
        %v2847 = vpop.f32.mrb[0].mxu0
        %v2848 = vadd.f32 0.0, %v2847
        %v2849 = vpop.f32.mrb[0].mxu0
        %2850 = vmatprep.mubr.f32.mxu0 0.0
        %2851 = vmatmul.mubr.f32.gmra.mrb[0].mxu0 %v2665
        %v2852 = vpop.f32.mrb[0].mxu0
        %v2853 = vadd.f32 0.0, %v2852
        %v2854 = vpop.f32.mrb[0].mxu0
        %2855 = vmatprep.mubr.f32.mxu0 0.0
        %2856 = vmatmul.mubr.f32.gmra.mrb[0].mxu0 %v2668
        %v2857 = vpop.f32.mrb[0].mxu0
        %v2858 = vadd.f32 0.0, %v2857
        %v2859 = vpop.f32.mrb[0].mxu0
        %2860 = vmatprep.mubr.f32.mxu0 0.0
        %2861 = vmatmul.mubr.f32.gmra.mrb[0].mxu0 %v2671
        %v2862 = vpop.f32.mrb[0].mxu0
        %v2863 = vadd.f32 0.0, %v2862
        %v2864 = vpop.f32.mrb[0].mxu0
        %2865 = vmatprep.mubr.f32.mxu0 0.0
        %2866 = vmatmul.mubr.f32.gmra.mrb[0].mxu0 %v2674
        %v2867 = vpop.f32.mrb[0].mxu0
        %v2868 = vadd.f32 0.0, %v2867
        %v2869 = vpop.f32.mrb[0].mxu0
        %2870 = vmatprep.mubr.f32.mxu0 0.0
        %2871 = vmatmul.mubr.f32.gmra.mrb[0].mxu0 %v2677
        %v2872 = vpop.f32.mrb[0].mxu0
        %v2873 = vadd.f32 0.0, %v2872
        %v2874 = vpop.f32.mrb[0].mxu0
        %2875 = vmatprep.mubr.f32.mxu0 0.0
        %2876 = vmatmul.mubr.f32.gmra.mrb[0].mxu0 %v2680
        %v2877 = vpop.f32.mrb[0].mxu0
        %v2878 = vadd.f32 0.0, %v2877
        %v2879 = vpop.f32.mrb[0].mxu0
        %2880 = vmatprep.mubr.f32.mxu0 0.0
        %2881 = vmatmul.mubr.f32.gmra.mrb[0].mxu0 %v2683
        %v2882 = vpop.f32.mrb[0].mxu0
        %v2883 = vadd.f32 0.0, %v2882
        %v2884 = vpop.f32.mrb[0].mxu0
        %2885 = vmatprep.mubr.f32.mxu0 0.0
        %2886 = vmatmul.mubr.f32.gmra.mrb[0].mxu0 %v2686
        %v2887 = vpop.f32.mrb[0].mxu0
        %v2888 = vadd.f32 0.0, %v2887
        %v2889 = vpop.f32.mrb[0].mxu0
        %2890 = vmatprep.mubr.f32.mxu0 0.0
        %2891 = vmatmul.mubr.f32.gmra.mrb[0].mxu0 %v2689
        %v2892 = vpop.f32.mrb[0].mxu0
        %v2893 = vadd.f32 0.0, %v2892
        %v2894 = vpop.f32.mrb[0].mxu0
        %2895 = vmatprep.mubr.f32.mxu0 0.0
        %2896 = vmatmul.mubr.f32.gmra.mrb[0].mxu0 %v2692
        %v2897 = vpop.f32.mrb[0].mxu0
        %v2898 = vadd.f32 0.0, %v2897
        %v2899 = vpop.f32.mrb[0].mxu0
        %2900 = vmatprep.mubr.f32.mxu0 0.0
        %2901 = vmatmul.mubr.f32.gmra.mrb[0].mxu0 %v2695
        %v2902 = vpop.f32.mrb[0].mxu0
        %v2903 = vadd.f32 0.0, %v2902
        %v2904 = vpop.f32.mrb[0].mxu0
        %2905 = vmatprep.mubr.f32.mxu0 0.0
        %2906 = vmatmul.mubr.f32.gmra.mrb[0].mxu0 %v2698
        %v2907 = vpop.f32.mrb[0].mxu0
        %v2908 = vadd.f32 0.0, %v2907
        %v2909 = vpop.f32.mrb[0].mxu0
        %2910 = vmatprep.mubr.f32.mxu0 0.0
        %2911 = vmatmul.mubr.f32.gmra.mrb[0].mxu0 %v2701
        %v2912 = vpop.f32.mrb[0].mxu0
        %v2913 = vadd.f32 0.0, %v2912
        %v2914 = vpop.f32.mrb[0].mxu0
        %2915 = vmatprep.mubr.f32.mxu0 0.0
        %2916 = vmatmul.mubr.f32.gmra.mrb[0].mxu0 %v2704
        %v2917 = vpop.f32.mrb[0].mxu0
        %v2918 = vadd.f32 0.0, %v2917
        %v2919 = vpop.f32.mrb[0].mxu0
        %2920 = vmatprep.mubr.f32.mxu0 0.0
        %2921 = vmatmul.mubr.f32.gmra.mrb[0].mxu0 %v2707
        %v2922 = vpop.f32.mrb[0].mxu0
        %v2923 = vadd.f32 0.0, %v2922
        %v2924 = vpop.f32.mrb[0].mxu0
        %2925 = vmatprep.mubr.f32.mxu0 0.0
        %2926 = vmatmul.mubr.f32.gmra.mrb[0].mxu0 %v2710
        %v2927 = vpop.f32.mrb[0].mxu0
        %v2928 = vadd.f32 0.0, %v2927
        %v2929 = vpop.f32.mrb[0].mxu0
        %2930 = vmatprep.mubr.f32.mxu0 0.0
        %2931 = vmatmul.mubr.f32.gmra.mrb[0].mxu0 %v2713
        %v2932 = vpop.f32.mrb[0].mxu0
        %v2933 = vadd.f32 0.0, %v2932
        %v2934 = vpop.f32.mrb[0].mxu0
        %2935 = vmatprep.mubr.f32.mxu0 0.0
        %2936 = vmatmul.mubr.f32.gmra.mrb[0].mxu0 %v2716
        %v2937 = vpop.f32.mrb[0].mxu0
        %v2938 = vadd.f32 0.0, %v2937
        %v2939 = vpop.f32.mrb[0].mxu0
        %2940 = vmatprep.mubr.f32.mxu0 0.0
        %2941 = vmatmul.mubr.f32.gmra.mrb[0].mxu0 %v2719
        %v2942 = vpop.f32.mrb[0].mxu0
        %v2943 = vadd.f32 0.0, %v2942
        %v2944 = vpop.f32.mrb[0].mxu0
        %2945 = vdwg.mxu0
        %s2946 = scalar_lea.vmem %s504, 16
        %v2947 = vld [vmem:[%s2946] sm:$0xff]
        %v2948 = vld [vmem:[%s2946 + $0x8] sm:$0xff]
        %2949 = vmatprep.subr.mxu0 0.0
        %2950 = vmatpush1.msra.mxu0 %v2947
        %2951 = vmatprep.subr.mxu0 0.0
        %2952 = vmatpush1.msra.mxu0 %v2948
        %2953 = vmatprep.subr.mxu0 0.0
        %2954 = vmatpush1.msra.mxu0 0.0
        %2955 = vmatprep.subr.mxu0 0.0
        %2956 = vmatpush1.msra.mxu0 0.0
        %2957 = vmatprep.subr.mxu0 0.0
        %2958 = vmatpush1.msra.mxu0 0.0
        %2959 = vmatprep.subr.mxu0 0.0
        %2960 = vmatpush1.msra.mxu0 0.0
        %2961 = vmatprep.subr.mxu0 0.0
        %2962 = vmatpush1.msra.mxu0 0.0
        %2963 = vmatprep.subr.mxu0 0.0
        %2964 = vmatpush1.msra.mxu0 0.0
        %2965 = vmatprep.subr.mxu0 0.0
        %2966 = vmatpush1.msra.mxu0 0.0
        %2967 = vmatprep.subr.mxu0 0.0
        %2968 = vmatpush1.msra.mxu0 0.0
        %2969 = vmatprep.subr.mxu0 0.0
        %2970 = vmatpush1.msra.mxu0 0.0
        %2971 = vmatprep.subr.mxu0 0.0
        %2972 = vmatpush1.msra.mxu0 0.0
        %2973 = vmatprep.subr.mxu0 0.0
        %2974 = vmatpush1.msra.mxu0 0.0
        %2975 = vmatprep.subr.mxu0 0.0
        %2976 = vmatpush1.msra.mxu0 0.0
        %2977 = vmatprep.subr.mxu0 0.0
        %2978 = vmatpush1.msra.mxu0 0.0
        %2979 = vmatprep.subr.mxu0 0.0
        %2980 = vmatpush1.msra.mxu0 0.0
        %2981 = vmatprep.subr.mxu0 0.0
        %2982 = vmatpush1.msra.mxu0 0.0
        %2983 = vmatprep.subr.mxu0 0.0
        %2984 = vmatpush1.msra.mxu0 0.0
        %2985 = vmatprep.subr.mxu0 0.0
        %2986 = vmatpush1.msra.mxu0 0.0
        %2987 = vmatprep.subr.mxu0 0.0
        %2988 = vmatpush1.msra.mxu0 0.0
        %2989 = vmatprep.subr.mxu0 0.0
        %2990 = vmatpush1.msra.mxu0 0.0
        %2991 = vmatprep.subr.mxu0 0.0
        %2992 = vmatpush1.msra.mxu0 0.0
        %2993 = vmatprep.subr.mxu0 0.0
        %2994 = vmatpush1.msra.mxu0 0.0
        %2995 = vmatprep.subr.mxu0 0.0
        %2996 = vmatpush1.msra.mxu0 0.0
        %2997 = vmatprep.subr.mxu0 0.0
        %2998 = vmatpush1.msra.mxu0 0.0
        %2999 = vmatprep.subr.mxu0 0.0
        %3000 = vmatpush1.msra.mxu0 0.0
        %3001 = vmatprep.subr.mxu0 0.0
        %3002 = vmatpush1.msra.mxu0 0.0
        %3003 = vmatprep.subr.mxu0 0.0
        %3004 = vmatpush1.msra.mxu0 0.0
        %3005 = vmatprep.subr.mxu0 0.0
        %3006 = vmatpush1.msra.mxu0 0.0
        %3007 = vmatprep.subr.mxu0 0.0
        %3008 = vmatpush1.msra.mxu0 0.0
        %3009 = vmatprep.subr.mxu0 0.0
        %3010 = vmatpush1.msra.mxu0 0.0
        %3011 = vmatprep.subr.mxu0 0.0
        %3012 = vmatpush1.msra.mxu0 0.0
        %3013 = vmatprep.mubr.f32.mxu0 0.0
        %3014 = vmatmul.mubr.f32.gmra.mrb[0].mxu0 %v2626
        %v3015 = vpop.f32.mrb[0].mxu0
        %v3016 = vadd.f32 0.0, %v3015
        %v3017 = vpop.f32.mrb[0].mxu0
        %3018 = vmatprep.mubr.f32.mxu0 0.0
        %3019 = vmatmul.mubr.f32.gmra.mrb[0].mxu0 %v2629
        %v3020 = vpop.f32.mrb[0].mxu0
        %v3021 = vadd.f32 0.0, %v3020
        %v3022 = vpop.f32.mrb[0].mxu0
        %3023 = vmatprep.mubr.f32.mxu0 0.0
        %3024 = vmatmul.mubr.f32.gmra.mrb[0].mxu0 %v2632
        %v3025 = vpop.f32.mrb[0].mxu0
        %v3026 = vadd.f32 0.0, %v3025
        %v3027 = vpop.f32.mrb[0].mxu0
        %3028 = vmatprep.mubr.f32.mxu0 0.0
        %3029 = vmatmul.mubr.f32.gmra.mrb[0].mxu0 %v2635
        %v3030 = vpop.f32.mrb[0].mxu0
        %v3031 = vadd.f32 0.0, %v3030
        %v3032 = vpop.f32.mrb[0].mxu0
        %3033 = vmatprep.mubr.f32.mxu0 0.0
        %3034 = vmatmul.mubr.f32.gmra.mrb[0].mxu0 %v2638
        %v3035 = vpop.f32.mrb[0].mxu0
        %v3036 = vadd.f32 0.0, %v3035
        %v3037 = vpop.f32.mrb[0].mxu0
        %3038 = vmatprep.mubr.f32.mxu0 0.0
        %3039 = vmatmul.mubr.f32.gmra.mrb[0].mxu0 %v2641
        %v3040 = vpop.f32.mrb[0].mxu0
        %v3041 = vadd.f32 0.0, %v3040
        %v3042 = vpop.f32.mrb[0].mxu0
        %3043 = vmatprep.mubr.f32.mxu0 0.0
        %3044 = vmatmul.mubr.f32.gmra.mrb[0].mxu0 %v2644
        %v3045 = vpop.f32.mrb[0].mxu0
        %v3046 = vadd.f32 0.0, %v3045
        %v3047 = vpop.f32.mrb[0].mxu0
        %3048 = vmatprep.mubr.f32.mxu0 0.0
        %3049 = vmatmul.mubr.f32.gmra.mrb[0].mxu0 %v2647
        %v3050 = vpop.f32.mrb[0].mxu0
        %v3051 = vadd.f32 0.0, %v3050
        %v3052 = vpop.f32.mrb[0].mxu0
        %3053 = vmatprep.mubr.f32.mxu0 0.0
        %3054 = vmatmul.mubr.f32.gmra.mrb[0].mxu0 %v2650
        %v3055 = vpop.f32.mrb[0].mxu0
        %v3056 = vadd.f32 0.0, %v3055
        %v3057 = vpop.f32.mrb[0].mxu0
        %3058 = vmatprep.mubr.f32.mxu0 0.0
        %3059 = vmatmul.mubr.f32.gmra.mrb[0].mxu0 %v2653
        %v3060 = vpop.f32.mrb[0].mxu0
        %v3061 = vadd.f32 0.0, %v3060
        %v3062 = vpop.f32.mrb[0].mxu0
        %3063 = vmatprep.mubr.f32.mxu0 0.0
        %3064 = vmatmul.mubr.f32.gmra.mrb[0].mxu0 %v2656
        %v3065 = vpop.f32.mrb[0].mxu0
        %v3066 = vadd.f32 0.0, %v3065
        %v3067 = vpop.f32.mrb[0].mxu0
        %3068 = vmatprep.mubr.f32.mxu0 0.0
        %3069 = vmatmul.mubr.f32.gmra.mrb[0].mxu0 %v2659
        %v3070 = vpop.f32.mrb[0].mxu0
        %v3071 = vadd.f32 0.0, %v3070
        %v3072 = vpop.f32.mrb[0].mxu0
        %3073 = vmatprep.mubr.f32.mxu0 0.0
        %3074 = vmatmul.mubr.f32.gmra.mrb[0].mxu0 %v2662
        %v3075 = vpop.f32.mrb[0].mxu0
        %v3076 = vadd.f32 0.0, %v3075
        %v3077 = vpop.f32.mrb[0].mxu0
        %3078 = vmatprep.mubr.f32.mxu0 0.0
        %3079 = vmatmul.mubr.f32.gmra.mrb[0].mxu0 %v2665
        %v3080 = vpop.f32.mrb[0].mxu0
        %v3081 = vadd.f32 0.0, %v3080
        %v3082 = vpop.f32.mrb[0].mxu0
        %3083 = vmatprep.mubr.f32.mxu0 0.0
        %3084 = vmatmul.mubr.f32.gmra.mrb[0].mxu0 %v2668
        %v3085 = vpop.f32.mrb[0].mxu0
        %v3086 = vadd.f32 0.0, %v3085
        %v3087 = vpop.f32.mrb[0].mxu0
        %3088 = vmatprep.mubr.f32.mxu0 0.0
        %3089 = vmatmul.mubr.f32.gmra.mrb[0].mxu0 %v2671
        %v3090 = vpop.f32.mrb[0].mxu0
        %v3091 = vadd.f32 0.0, %v3090
        %v3092 = vpop.f32.mrb[0].mxu0
        %3093 = vmatprep.mubr.f32.mxu0 0.0
        %3094 = vmatmul.mubr.f32.gmra.mrb[0].mxu0 %v2674
        %v3095 = vpop.f32.mrb[0].mxu0
        %v3096 = vadd.f32 0.0, %v3095
        %v3097 = vpop.f32.mrb[0].mxu0
        %3098 = vmatprep.mubr.f32.mxu0 0.0
        %3099 = vmatmul.mubr.f32.gmra.mrb[0].mxu0 %v2677
        %v3100 = vpop.f32.mrb[0].mxu0
        %v3101 = vadd.f32 0.0, %v3100
        %v3102 = vpop.f32.mrb[0].mxu0
        %3103 = vmatprep.mubr.f32.mxu0 0.0
        %3104 = vmatmul.mubr.f32.gmra.mrb[0].mxu0 %v2680
        %v3105 = vpop.f32.mrb[0].mxu0
        %v3106 = vadd.f32 0.0, %v3105
        %v3107 = vpop.f32.mrb[0].mxu0
        %3108 = vmatprep.mubr.f32.mxu0 0.0
        %3109 = vmatmul.mubr.f32.gmra.mrb[0].mxu0 %v2683
        %v3110 = vpop.f32.mrb[0].mxu0
        %v3111 = vadd.f32 0.0, %v3110
        %v3112 = vpop.f32.mrb[0].mxu0
        %3113 = vmatprep.mubr.f32.mxu0 0.0
        %3114 = vmatmul.mubr.f32.gmra.mrb[0].mxu0 %v2686
        %v3115 = vpop.f32.mrb[0].mxu0
        %v3116 = vadd.f32 0.0, %v3115
        %v3117 = vpop.f32.mrb[0].mxu0
        %3118 = vmatprep.mubr.f32.mxu0 0.0
        %3119 = vmatmul.mubr.f32.gmra.mrb[0].mxu0 %v2689
        %v3120 = vpop.f32.mrb[0].mxu0
        %v3121 = vadd.f32 0.0, %v3120
        %v3122 = vpop.f32.mrb[0].mxu0
        %3123 = vmatprep.mubr.f32.mxu0 0.0
        %3124 = vmatmul.mubr.f32.gmra.mrb[0].mxu0 %v2692
        %v3125 = vpop.f32.mrb[0].mxu0
        %v3126 = vadd.f32 0.0, %v3125
        %v3127 = vpop.f32.mrb[0].mxu0
        %3128 = vmatprep.mubr.f32.mxu0 0.0
        %3129 = vmatmul.mubr.f32.gmra.mrb[0].mxu0 %v2695
        %v3130 = vpop.f32.mrb[0].mxu0
        %v3131 = vadd.f32 0.0, %v3130
        %v3132 = vpop.f32.mrb[0].mxu0
        %3133 = vmatprep.mubr.f32.mxu0 0.0
        %3134 = vmatmul.mubr.f32.gmra.mrb[0].mxu0 %v2698
        %v3135 = vpop.f32.mrb[0].mxu0
        %v3136 = vadd.f32 0.0, %v3135
        %v3137 = vpop.f32.mrb[0].mxu0
        %3138 = vmatprep.mubr.f32.mxu0 0.0
        %3139 = vmatmul.mubr.f32.gmra.mrb[0].mxu0 %v2701
        %v3140 = vpop.f32.mrb[0].mxu0
        %v3141 = vadd.f32 0.0, %v3140
        %v3142 = vpop.f32.mrb[0].mxu0
        %3143 = vmatprep.mubr.f32.mxu0 0.0
        %3144 = vmatmul.mubr.f32.gmra.mrb[0].mxu0 %v2704
        %v3145 = vpop.f32.mrb[0].mxu0
        %v3146 = vadd.f32 0.0, %v3145
        %v3147 = vpop.f32.mrb[0].mxu0
        %3148 = vmatprep.mubr.f32.mxu0 0.0
        %3149 = vmatmul.mubr.f32.gmra.mrb[0].mxu0 %v2707
        %v3150 = vpop.f32.mrb[0].mxu0
        %v3151 = vadd.f32 0.0, %v3150
        %v3152 = vpop.f32.mrb[0].mxu0
        %3153 = vmatprep.mubr.f32.mxu0 0.0
        %3154 = vmatmul.mubr.f32.gmra.mrb[0].mxu0 %v2710
        %v3155 = vpop.f32.mrb[0].mxu0
        %v3156 = vadd.f32 0.0, %v3155
        %v3157 = vpop.f32.mrb[0].mxu0
        %3158 = vmatprep.mubr.f32.mxu0 0.0
        %3159 = vmatmul.mubr.f32.gmra.mrb[0].mxu0 %v2713
        %v3160 = vpop.f32.mrb[0].mxu0
        %v3161 = vadd.f32 0.0, %v3160
        %v3162 = vpop.f32.mrb[0].mxu0
        %3163 = vmatprep.mubr.f32.mxu0 0.0
        %3164 = vmatmul.mubr.f32.gmra.mrb[0].mxu0 %v2716
        %v3165 = vpop.f32.mrb[0].mxu0
        %v3166 = vadd.f32 0.0, %v3165
        %v3167 = vpop.f32.mrb[0].mxu0
        %3168 = vmatprep.mubr.f32.mxu0 0.0
        %3169 = vmatmul.mubr.f32.gmra.mrb[0].mxu0 %v2719
        %v3170 = vpop.f32.mrb[0].mxu0
        %v3171 = vadd.f32 0.0, %v3170
        %v3172 = vpop.f32.mrb[0].mxu0
        %3173 = vdwg.mxu0
        %v3174 = vld [vmem:[%s5] sm:$0xff]
        %v3175 = vld [vmem:[%s5 + $0x8] sm:$0xff]
        %v3176 = vld [vmem:[%s5 + $0x10] sm:$0xff]
        %v3177 = vld [vmem:[%s5 + $0x18] sm:$0xff]
        %v3178 = vld [vmem:[%s5 + $0x20] sm:$0xff]
        %v3179 = vld [vmem:[%s5 + $0x28] sm:$0xff]
        %v3180 = vld [vmem:[%s5 + $0x30] sm:$0xff]
        %v3181 = vld [vmem:[%s5 + $0x38] sm:$0xff]
        %v3182 = vld [vmem:[%s5 + $0x40] sm:$0xff]
        %v3183 = vld [vmem:[%s5 + $0x48] sm:$0xff]
        %v3184 = vld [vmem:[%s5 + $0x50] sm:$0xff]
        %v3185 = vld [vmem:[%s5 + $0x58] sm:$0xff]
        %v3186 = vld [vmem:[%s5 + $0x60] sm:$0xff]
        %v3187 = vld [vmem:[%s5 + $0x68] sm:$0xff]
        %v3188 = vld [vmem:[%s5 + $0x70] sm:$0xff]
        %v3189 = vld [vmem:[%s5 + $0x78] sm:$0xff]
        %v3190 = vld [vmem:[%s5 + $0x80] sm:$0xff]
        %v3191 = vld [vmem:[%s5 + $0x88] sm:$0xff]
        %v3192 = vld [vmem:[%s5 + $0x90] sm:$0xff]
        %v3193 = vld [vmem:[%s5 + $0x98] sm:$0xff]
        %v3194 = vld [vmem:[%s5 + $0xa0] sm:$0xff]
        %v3195 = vld [vmem:[%s5 + $0xa8] sm:$0xff]
        %v3196 = vld [vmem:[%s5 + $0xb0] sm:$0xff]
        %v3197 = vld [vmem:[%s5 + $0xb8] sm:$0xff]
        %v3198 = vld [vmem:[%s5 + $0xc0] sm:$0xff]
        %v3199 = vld [vmem:[%s5 + $0xc8] sm:$0xff]
        %v3200 = vld [vmem:[%s5 + $0xd0] sm:$0xff]
        %v3201 = vld [vmem:[%s5 + $0xd8] sm:$0xff]
        %v3202 = vld [vmem:[%s5 + $0xe0] sm:$0xff]
        %v3203 = vld [vmem:[%s5 + $0xe8] sm:$0xff]
        %v3204 = vld [vmem:[%s5 + $0xf0] sm:$0xff]
        %v3205 = vld [vmem:[%s5 + $0xf8] sm:$0xff]
        %v3207 = vsel %vm2624, %v3174, 0
        %v3210 = vsel %vm2624, %v3175, 0
        %v3213 = vsel %vm2624, %v3176, 0
        %v3216 = vsel %vm2624, %v3177, 0
        %v3219 = vsel %vm2624, %v3178, 0
        %v3222 = vsel %vm2624, %v3179, 0
        %v3225 = vsel %vm2624, %v3180, 0
        %v3228 = vsel %vm2624, %v3181, 0
        %v3231 = vsel %vm2624, %v3182, 0
        %v3234 = vsel %vm2624, %v3183, 0
        %v3237 = vsel %vm2624, %v3184, 0
        %v3240 = vsel %vm2624, %v3185, 0
        %v3243 = vsel %vm2624, %v3186, 0
        %v3246 = vsel %vm2624, %v3187, 0
        %v3249 = vsel %vm2624, %v3188, 0
        %v3252 = vsel %vm2624, %v3189, 0
        %v3255 = vsel %vm2624, %v3190, 0
        %v3258 = vsel %vm2624, %v3191, 0
        %v3261 = vsel %vm2624, %v3192, 0
        %v3264 = vsel %vm2624, %v3193, 0
        %v3267 = vsel %vm2624, %v3194, 0
        %v3270 = vsel %vm2624, %v3195, 0
        %v3273 = vsel %vm2624, %v3196, 0
        %v3276 = vsel %vm2624, %v3197, 0
        %v3279 = vsel %vm2624, %v3198, 0
        %v3282 = vsel %vm2624, %v3199, 0
        %v3285 = vsel %vm2624, %v3200, 0
        %v3288 = vsel %vm2624, %v3201, 0
        %v3291 = vsel %vm2624, %v3202, 0
        %v3294 = vsel %vm2624, %v3203, 0
        %v3297 = vsel %vm2624, %v3204, 0
        %v3300 = vsel %vm2624, %v3205, 0
        %3302 = vmatprep.subr.mxu0 0.0
        %3303 = vmatpush1.msra.mxu0 %v2947
        %3304 = vmatprep.subr.mxu0 0.0
        %3305 = vmatpush1.msra.mxu0 %v2948
        %3306 = vmatprep.subr.mxu0 0.0
        %3307 = vmatpush1.msra.mxu0 0.0
        %3308 = vmatprep.subr.mxu0 0.0
        %3309 = vmatpush1.msra.mxu0 0.0
        %3310 = vmatprep.subr.mxu0 0.0
        %3311 = vmatpush1.msra.mxu0 0.0
        %3312 = vmatprep.subr.mxu0 0.0
        %3313 = vmatpush1.msra.mxu0 0.0
        %3314 = vmatprep.subr.mxu0 0.0
        %3315 = vmatpush1.msra.mxu0 0.0
        %3316 = vmatprep.subr.mxu0 0.0
        %3317 = vmatpush1.msra.mxu0 0.0
        %3318 = vmatprep.subr.mxu0 0.0
        %3319 = vmatpush1.msra.mxu0 0.0
        %3320 = vmatprep.subr.mxu0 0.0
        %3321 = vmatpush1.msra.mxu0 0.0
        %3322 = vmatprep.subr.mxu0 0.0
        %3323 = vmatpush1.msra.mxu0 0.0
        %3324 = vmatprep.subr.mxu0 0.0
        %3325 = vmatpush1.msra.mxu0 0.0
        %3326 = vmatprep.subr.mxu0 0.0
        %3327 = vmatpush1.msra.mxu0 0.0
        %3328 = vmatprep.subr.mxu0 0.0
        %3329 = vmatpush1.msra.mxu0 0.0
        %3330 = vmatprep.subr.mxu0 0.0
        %3331 = vmatpush1.msra.mxu0 0.0
        %3332 = vmatprep.subr.mxu0 0.0
        %3333 = vmatpush1.msra.mxu0 0.0
        %3334 = vmatprep.subr.mxu0 0.0
        %3335 = vmatpush1.msra.mxu0 0.0
        %3336 = vmatprep.subr.mxu0 0.0
        %3337 = vmatpush1.msra.mxu0 0.0
        %3338 = vmatprep.subr.mxu0 0.0
        %3339 = vmatpush1.msra.mxu0 0.0
        %3340 = vmatprep.subr.mxu0 0.0
        %3341 = vmatpush1.msra.mxu0 0.0
        %3342 = vmatprep.subr.mxu0 0.0
        %3343 = vmatpush1.msra.mxu0 0.0
        %3344 = vmatprep.subr.mxu0 0.0
        %3345 = vmatpush1.msra.mxu0 0.0
        %3346 = vmatprep.subr.mxu0 0.0
        %3347 = vmatpush1.msra.mxu0 0.0
        %3348 = vmatprep.subr.mxu0 0.0
        %3349 = vmatpush1.msra.mxu0 0.0
        %3350 = vmatprep.subr.mxu0 0.0
        %3351 = vmatpush1.msra.mxu0 0.0
        %3352 = vmatprep.subr.mxu0 0.0
        %3353 = vmatpush1.msra.mxu0 0.0
        %3354 = vmatprep.subr.mxu0 0.0
        %3355 = vmatpush1.msra.mxu0 0.0
        %3356 = vmatprep.subr.mxu0 0.0
        %3357 = vmatpush1.msra.mxu0 0.0
        %3358 = vmatprep.subr.mxu0 0.0
        %3359 = vmatpush1.msra.mxu0 0.0
        %3360 = vmatprep.subr.mxu0 0.0
        %3361 = vmatpush1.msra.mxu0 0.0
        %3362 = vmatprep.subr.mxu0 0.0
        %3363 = vmatpush1.msra.mxu0 0.0
        %3364 = vmatprep.subr.mxu0 0.0
        %3365 = vmatpush1.msra.mxu0 0.0
        %3366 = vmatprep.mubr.f32.mxu0 0.0
        %3367 = vmatmul.mubr.f32.gmra.mrb[0].mxu0 %v3207
        %v3368 = vpop.f32.mrb[0].mxu0
        %v3369 = vadd.f32 0.0, %v3368
        %v3370 = vpop.f32.mrb[0].mxu0
        %3371 = vmatprep.mubr.f32.mxu0 0.0
        %3372 = vmatmul.mubr.f32.gmra.mrb[0].mxu0 %v3210
        %v3373 = vpop.f32.mrb[0].mxu0
        %v3374 = vadd.f32 0.0, %v3373
        %v3375 = vpop.f32.mrb[0].mxu0
        %3376 = vmatprep.mubr.f32.mxu0 0.0
        %3377 = vmatmul.mubr.f32.gmra.mrb[0].mxu0 %v3213
        %v3378 = vpop.f32.mrb[0].mxu0
        %v3379 = vadd.f32 0.0, %v3378
        %v3380 = vpop.f32.mrb[0].mxu0
        %3381 = vmatprep.mubr.f32.mxu0 0.0
        %3382 = vmatmul.mubr.f32.gmra.mrb[0].mxu0 %v3216
        %v3383 = vpop.f32.mrb[0].mxu0
        %v3384 = vadd.f32 0.0, %v3383
        %v3385 = vpop.f32.mrb[0].mxu0
        %3386 = vmatprep.mubr.f32.mxu0 0.0
        %3387 = vmatmul.mubr.f32.gmra.mrb[0].mxu0 %v3219
        %v3388 = vpop.f32.mrb[0].mxu0
        %v3389 = vadd.f32 0.0, %v3388
        %v3390 = vpop.f32.mrb[0].mxu0
        %3391 = vmatprep.mubr.f32.mxu0 0.0
        %3392 = vmatmul.mubr.f32.gmra.mrb[0].mxu0 %v3222
        %v3393 = vpop.f32.mrb[0].mxu0
        %v3394 = vadd.f32 0.0, %v3393
        %v3395 = vpop.f32.mrb[0].mxu0
        %3396 = vmatprep.mubr.f32.mxu0 0.0
        %3397 = vmatmul.mubr.f32.gmra.mrb[0].mxu0 %v3225
        %v3398 = vpop.f32.mrb[0].mxu0
        %v3399 = vadd.f32 0.0, %v3398
        %v3400 = vpop.f32.mrb[0].mxu0
        %3401 = vmatprep.mubr.f32.mxu0 0.0
        %3402 = vmatmul.mubr.f32.gmra.mrb[0].mxu0 %v3228
        %v3403 = vpop.f32.mrb[0].mxu0
        %v3404 = vadd.f32 0.0, %v3403
        %v3405 = vpop.f32.mrb[0].mxu0
        %3406 = vmatprep.mubr.f32.mxu0 0.0
        %3407 = vmatmul.mubr.f32.gmra.mrb[0].mxu0 %v3231
        %v3408 = vpop.f32.mrb[0].mxu0
        %v3409 = vadd.f32 0.0, %v3408
        %v3410 = vpop.f32.mrb[0].mxu0
        %3411 = vmatprep.mubr.f32.mxu0 0.0
        %3412 = vmatmul.mubr.f32.gmra.mrb[0].mxu0 %v3234
        %v3413 = vpop.f32.mrb[0].mxu0
        %v3414 = vadd.f32 0.0, %v3413
        %v3415 = vpop.f32.mrb[0].mxu0
        %3416 = vmatprep.mubr.f32.mxu0 0.0
        %3417 = vmatmul.mubr.f32.gmra.mrb[0].mxu0 %v3237
        %v3418 = vpop.f32.mrb[0].mxu0
        %v3419 = vadd.f32 0.0, %v3418
        %v3420 = vpop.f32.mrb[0].mxu0
        %3421 = vmatprep.mubr.f32.mxu0 0.0
        %3422 = vmatmul.mubr.f32.gmra.mrb[0].mxu0 %v3240
        %v3423 = vpop.f32.mrb[0].mxu0
        %v3424 = vadd.f32 0.0, %v3423
        %v3425 = vpop.f32.mrb[0].mxu0
        %3426 = vmatprep.mubr.f32.mxu0 0.0
        %3427 = vmatmul.mubr.f32.gmra.mrb[0].mxu0 %v3243
        %v3428 = vpop.f32.mrb[0].mxu0
        %v3429 = vadd.f32 0.0, %v3428
        %v3430 = vpop.f32.mrb[0].mxu0
        %3431 = vmatprep.mubr.f32.mxu0 0.0
        %3432 = vmatmul.mubr.f32.gmra.mrb[0].mxu0 %v3246
        %v3433 = vpop.f32.mrb[0].mxu0
        %v3434 = vadd.f32 0.0, %v3433
        %v3435 = vpop.f32.mrb[0].mxu0
        %3436 = vmatprep.mubr.f32.mxu0 0.0
        %3437 = vmatmul.mubr.f32.gmra.mrb[0].mxu0 %v3249
        %v3438 = vpop.f32.mrb[0].mxu0
        %v3439 = vadd.f32 0.0, %v3438
        %v3440 = vpop.f32.mrb[0].mxu0
        %3441 = vmatprep.mubr.f32.mxu0 0.0
        %3442 = vmatmul.mubr.f32.gmra.mrb[0].mxu0 %v3252
        %v3443 = vpop.f32.mrb[0].mxu0
        %v3444 = vadd.f32 0.0, %v3443
        %v3445 = vpop.f32.mrb[0].mxu0
        %3446 = vmatprep.mubr.f32.mxu0 0.0
        %3447 = vmatmul.mubr.f32.gmra.mrb[0].mxu0 %v3255
        %v3448 = vpop.f32.mrb[0].mxu0
        %v3449 = vadd.f32 0.0, %v3448
        %v3450 = vpop.f32.mrb[0].mxu0
        %3451 = vmatprep.mubr.f32.mxu0 0.0
        %3452 = vmatmul.mubr.f32.gmra.mrb[0].mxu0 %v3258
        %v3453 = vpop.f32.mrb[0].mxu0
        %v3454 = vadd.f32 0.0, %v3453
        %v3455 = vpop.f32.mrb[0].mxu0
        %3456 = vmatprep.mubr.f32.mxu0 0.0
        %3457 = vmatmul.mubr.f32.gmra.mrb[0].mxu0 %v3261
        %v3458 = vpop.f32.mrb[0].mxu0
        %v3459 = vadd.f32 0.0, %v3458
        %v3460 = vpop.f32.mrb[0].mxu0
        %3461 = vmatprep.mubr.f32.mxu0 0.0
        %3462 = vmatmul.mubr.f32.gmra.mrb[0].mxu0 %v3264
        %v3463 = vpop.f32.mrb[0].mxu0
        %v3464 = vadd.f32 0.0, %v3463
        %v3465 = vpop.f32.mrb[0].mxu0
        %3466 = vmatprep.mubr.f32.mxu0 0.0
        %3467 = vmatmul.mubr.f32.gmra.mrb[0].mxu0 %v3267
        %v3468 = vpop.f32.mrb[0].mxu0
        %v3469 = vadd.f32 0.0, %v3468
        %v3470 = vpop.f32.mrb[0].mxu0
        %3471 = vmatprep.mubr.f32.mxu0 0.0
        %3472 = vmatmul.mubr.f32.gmra.mrb[0].mxu0 %v3270
        %v3473 = vpop.f32.mrb[0].mxu0
        %v3474 = vadd.f32 0.0, %v3473
        %v3475 = vpop.f32.mrb[0].mxu0
        %3476 = vmatprep.mubr.f32.mxu0 0.0
        %3477 = vmatmul.mubr.f32.gmra.mrb[0].mxu0 %v3273
        %v3478 = vpop.f32.mrb[0].mxu0
        %v3479 = vadd.f32 0.0, %v3478
        %v3480 = vpop.f32.mrb[0].mxu0
        %3481 = vmatprep.mubr.f32.mxu0 0.0
        %3482 = vmatmul.mubr.f32.gmra.mrb[0].mxu0 %v3276
        %v3483 = vpop.f32.mrb[0].mxu0
        %v3484 = vadd.f32 0.0, %v3483
        %v3485 = vpop.f32.mrb[0].mxu0
        %3486 = vmatprep.mubr.f32.mxu0 0.0
        %3487 = vmatmul.mubr.f32.gmra.mrb[0].mxu0 %v3279
        %v3488 = vpop.f32.mrb[0].mxu0
        %v3489 = vadd.f32 0.0, %v3488
        %v3490 = vpop.f32.mrb[0].mxu0
        %3491 = vmatprep.mubr.f32.mxu0 0.0
        %3492 = vmatmul.mubr.f32.gmra.mrb[0].mxu0 %v3282
        %v3493 = vpop.f32.mrb[0].mxu0
        %v3494 = vadd.f32 0.0, %v3493
        %v3495 = vpop.f32.mrb[0].mxu0
        %3496 = vmatprep.mubr.f32.mxu0 0.0
        %3497 = vmatmul.mubr.f32.gmra.mrb[0].mxu0 %v3285
        %v3498 = vpop.f32.mrb[0].mxu0
        %v3499 = vadd.f32 0.0, %v3498
        %v3500 = vpop.f32.mrb[0].mxu0
        %3501 = vmatprep.mubr.f32.mxu0 0.0
        %3502 = vmatmul.mubr.f32.gmra.mrb[0].mxu0 %v3288
        %v3503 = vpop.f32.mrb[0].mxu0
        %v3504 = vadd.f32 0.0, %v3503
        %v3505 = vpop.f32.mrb[0].mxu0
        %3506 = vmatprep.mubr.f32.mxu0 0.0
        %3507 = vmatmul.mubr.f32.gmra.mrb[0].mxu0 %v3291
        %v3508 = vpop.f32.mrb[0].mxu0
        %v3509 = vadd.f32 0.0, %v3508
        %v3510 = vpop.f32.mrb[0].mxu0
        %3511 = vmatprep.mubr.f32.mxu0 0.0
        %3512 = vmatmul.mubr.f32.gmra.mrb[0].mxu0 %v3294
        %v3513 = vpop.f32.mrb[0].mxu0
        %v3514 = vadd.f32 0.0, %v3513
        %v3515 = vpop.f32.mrb[0].mxu0
        %3516 = vmatprep.mubr.f32.mxu0 0.0
        %3517 = vmatmul.mubr.f32.gmra.mrb[0].mxu0 %v3297
        %v3518 = vpop.f32.mrb[0].mxu0
        %v3519 = vadd.f32 0.0, %v3518
        %v3520 = vpop.f32.mrb[0].mxu0
        %3521 = vmatprep.mubr.f32.mxu0 0.0
        %3522 = vmatmul.mubr.f32.gmra.mrb[0].mxu0 %v3300
        %v3523 = vpop.f32.mrb[0].mxu0
        %v3524 = vadd.f32 0.0, %v3523
        %v3525 = vpop.f32.mrb[0].mxu0
        %3526 = vdwg.mxu0
        %s3527 = scalar_lea.vmem %s504, 32
        %v3528 = vld [vmem:[%s3527] sm:$0xff]
        %v3529 = vld [vmem:[%s3527 + $0x8] sm:$0xff]
        %3530 = vmatprep.subr.mxu0 0.0
        %3531 = vmatpush1.msra.mxu0 %v3528
        %3532 = vmatprep.subr.mxu0 0.0
        %3533 = vmatpush1.msra.mxu0 %v3529
        %3534 = vmatprep.subr.mxu0 0.0
        %3535 = vmatpush1.msra.mxu0 0.0
        %3536 = vmatprep.subr.mxu0 0.0
        %3537 = vmatpush1.msra.mxu0 0.0
        %3538 = vmatprep.subr.mxu0 0.0
        %3539 = vmatpush1.msra.mxu0 0.0
        %3540 = vmatprep.subr.mxu0 0.0
        %3541 = vmatpush1.msra.mxu0 0.0
        %3542 = vmatprep.subr.mxu0 0.0
        %3543 = vmatpush1.msra.mxu0 0.0
        %3544 = vmatprep.subr.mxu0 0.0
        %3545 = vmatpush1.msra.mxu0 0.0
        %3546 = vmatprep.subr.mxu0 0.0
        %3547 = vmatpush1.msra.mxu0 0.0
        %3548 = vmatprep.subr.mxu0 0.0
        %3549 = vmatpush1.msra.mxu0 0.0
        %3550 = vmatprep.subr.mxu0 0.0
        %3551 = vmatpush1.msra.mxu0 0.0
        %3552 = vmatprep.subr.mxu0 0.0
        %3553 = vmatpush1.msra.mxu0 0.0
        %3554 = vmatprep.subr.mxu0 0.0
        %3555 = vmatpush1.msra.mxu0 0.0
        %3556 = vmatprep.subr.mxu0 0.0
        %3557 = vmatpush1.msra.mxu0 0.0
        %3558 = vmatprep.subr.mxu0 0.0
        %3559 = vmatpush1.msra.mxu0 0.0
        %3560 = vmatprep.subr.mxu0 0.0
        %3561 = vmatpush1.msra.mxu0 0.0
        %3562 = vmatprep.subr.mxu0 0.0
        %3563 = vmatpush1.msra.mxu0 0.0
        %3564 = vmatprep.subr.mxu0 0.0
        %3565 = vmatpush1.msra.mxu0 0.0
        %3566 = vmatprep.subr.mxu0 0.0
        %3567 = vmatpush1.msra.mxu0 0.0
        %3568 = vmatprep.subr.mxu0 0.0
        %3569 = vmatpush1.msra.mxu0 0.0
        %3570 = vmatprep.subr.mxu0 0.0
        %3571 = vmatpush1.msra.mxu0 0.0
        %3572 = vmatprep.subr.mxu0 0.0
        %3573 = vmatpush1.msra.mxu0 0.0
        %3574 = vmatprep.subr.mxu0 0.0
        %3575 = vmatpush1.msra.mxu0 0.0
        %3576 = vmatprep.subr.mxu0 0.0
        %3577 = vmatpush1.msra.mxu0 0.0
        %3578 = vmatprep.subr.mxu0 0.0
        %3579 = vmatpush1.msra.mxu0 0.0
        %3580 = vmatprep.subr.mxu0 0.0
        %3581 = vmatpush1.msra.mxu0 0.0
        %3582 = vmatprep.subr.mxu0 0.0
        %3583 = vmatpush1.msra.mxu0 0.0
        %3584 = vmatprep.subr.mxu0 0.0
        %3585 = vmatpush1.msra.mxu0 0.0
        %3586 = vmatprep.subr.mxu0 0.0
        %3587 = vmatpush1.msra.mxu0 0.0
        %3588 = vmatprep.subr.mxu0 0.0
        %3589 = vmatpush1.msra.mxu0 0.0
        %3590 = vmatprep.subr.mxu0 0.0
        %3591 = vmatpush1.msra.mxu0 0.0
        %3592 = vmatprep.subr.mxu0 0.0
        %3593 = vmatpush1.msra.mxu0 0.0
        %3594 = vmatprep.mubr.f32.mxu0 0.0
        %3595 = vmatmul.mubr.f32.gmra.mrb[0].mxu0 %v3207
        %v3596 = vpop.f32.mrb[0].mxu0
        %v3597 = vadd.f32 0.0, %v3596
        %v3598 = vpop.f32.mrb[0].mxu0
        %3599 = vmatprep.mubr.f32.mxu0 0.0
        %3600 = vmatmul.mubr.f32.gmra.mrb[0].mxu0 %v3210
        %v3601 = vpop.f32.mrb[0].mxu0
        %v3602 = vadd.f32 0.0, %v3601
        %v3603 = vpop.f32.mrb[0].mxu0
        %3604 = vmatprep.mubr.f32.mxu0 0.0
        %3605 = vmatmul.mubr.f32.gmra.mrb[0].mxu0 %v3213
        %v3606 = vpop.f32.mrb[0].mxu0
        %v3607 = vadd.f32 0.0, %v3606
        %v3608 = vpop.f32.mrb[0].mxu0
        %3609 = vmatprep.mubr.f32.mxu0 0.0
        %3610 = vmatmul.mubr.f32.gmra.mrb[0].mxu0 %v3216
        %v3611 = vpop.f32.mrb[0].mxu0
        %v3612 = vadd.f32 0.0, %v3611
        %v3613 = vpop.f32.mrb[0].mxu0
        %3614 = vmatprep.mubr.f32.mxu0 0.0
        %3615 = vmatmul.mubr.f32.gmra.mrb[0].mxu0 %v3219
        %v3616 = vpop.f32.mrb[0].mxu0
        %v3617 = vadd.f32 0.0, %v3616
        %v3618 = vpop.f32.mrb[0].mxu0
        %3619 = vmatprep.mubr.f32.mxu0 0.0
        %3620 = vmatmul.mubr.f32.gmra.mrb[0].mxu0 %v3222
        %v3621 = vpop.f32.mrb[0].mxu0
        %v3622 = vadd.f32 0.0, %v3621
        %v3623 = vpop.f32.mrb[0].mxu0
        %3624 = vmatprep.mubr.f32.mxu0 0.0
        %3625 = vmatmul.mubr.f32.gmra.mrb[0].mxu0 %v3225
        %v3626 = vpop.f32.mrb[0].mxu0
        %v3627 = vadd.f32 0.0, %v3626
        %v3628 = vpop.f32.mrb[0].mxu0
        %3629 = vmatprep.mubr.f32.mxu0 0.0
        %3630 = vmatmul.mubr.f32.gmra.mrb[0].mxu0 %v3228
        %v3631 = vpop.f32.mrb[0].mxu0
        %v3632 = vadd.f32 0.0, %v3631
        %v3633 = vpop.f32.mrb[0].mxu0
        %3634 = vmatprep.mubr.f32.mxu0 0.0
        %3635 = vmatmul.mubr.f32.gmra.mrb[0].mxu0 %v3231
        %v3636 = vpop.f32.mrb[0].mxu0
        %v3637 = vadd.f32 0.0, %v3636
        %v3638 = vpop.f32.mrb[0].mxu0
        %3639 = vmatprep.mubr.f32.mxu0 0.0
        %3640 = vmatmul.mubr.f32.gmra.mrb[0].mxu0 %v3234
        %v3641 = vpop.f32.mrb[0].mxu0
        %v3642 = vadd.f32 0.0, %v3641
        %v3643 = vpop.f32.mrb[0].mxu0
        %3644 = vmatprep.mubr.f32.mxu0 0.0
        %3645 = vmatmul.mubr.f32.gmra.mrb[0].mxu0 %v3237
        %v3646 = vpop.f32.mrb[0].mxu0
        %v3647 = vadd.f32 0.0, %v3646
        %v3648 = vpop.f32.mrb[0].mxu0
        %3649 = vmatprep.mubr.f32.mxu0 0.0
        %3650 = vmatmul.mubr.f32.gmra.mrb[0].mxu0 %v3240
        %v3651 = vpop.f32.mrb[0].mxu0
        %v3652 = vadd.f32 0.0, %v3651
        %v3653 = vpop.f32.mrb[0].mxu0
        %3654 = vmatprep.mubr.f32.mxu0 0.0
        %3655 = vmatmul.mubr.f32.gmra.mrb[0].mxu0 %v3243
        %v3656 = vpop.f32.mrb[0].mxu0
        %v3657 = vadd.f32 0.0, %v3656
        %v3658 = vpop.f32.mrb[0].mxu0
        %3659 = vmatprep.mubr.f32.mxu0 0.0
        %3660 = vmatmul.mubr.f32.gmra.mrb[0].mxu0 %v3246
        %v3661 = vpop.f32.mrb[0].mxu0
        %v3662 = vadd.f32 0.0, %v3661
        %v3663 = vpop.f32.mrb[0].mxu0
        %3664 = vmatprep.mubr.f32.mxu0 0.0
        %3665 = vmatmul.mubr.f32.gmra.mrb[0].mxu0 %v3249
        %v3666 = vpop.f32.mrb[0].mxu0
        %v3667 = vadd.f32 0.0, %v3666
        %v3668 = vpop.f32.mrb[0].mxu0
        %3669 = vmatprep.mubr.f32.mxu0 0.0
        %3670 = vmatmul.mubr.f32.gmra.mrb[0].mxu0 %v3252
        %v3671 = vpop.f32.mrb[0].mxu0
        %v3672 = vadd.f32 0.0, %v3671
        %v3673 = vpop.f32.mrb[0].mxu0
        %3674 = vmatprep.mubr.f32.mxu0 0.0
        %3675 = vmatmul.mubr.f32.gmra.mrb[0].mxu0 %v3255
        %v3676 = vpop.f32.mrb[0].mxu0
        %v3677 = vadd.f32 0.0, %v3676
        %v3678 = vpop.f32.mrb[0].mxu0
        %3679 = vmatprep.mubr.f32.mxu0 0.0
        %3680 = vmatmul.mubr.f32.gmra.mrb[0].mxu0 %v3258
        %v3681 = vpop.f32.mrb[0].mxu0
        %v3682 = vadd.f32 0.0, %v3681
        %v3683 = vpop.f32.mrb[0].mxu0
        %3684 = vmatprep.mubr.f32.mxu0 0.0
        %3685 = vmatmul.mubr.f32.gmra.mrb[0].mxu0 %v3261
        %v3686 = vpop.f32.mrb[0].mxu0
        %v3687 = vadd.f32 0.0, %v3686
        %v3688 = vpop.f32.mrb[0].mxu0
        %3689 = vmatprep.mubr.f32.mxu0 0.0
        %3690 = vmatmul.mubr.f32.gmra.mrb[0].mxu0 %v3264
        %v3691 = vpop.f32.mrb[0].mxu0
        %v3692 = vadd.f32 0.0, %v3691
        %v3693 = vpop.f32.mrb[0].mxu0
        %3694 = vmatprep.mubr.f32.mxu0 0.0
        %3695 = vmatmul.mubr.f32.gmra.mrb[0].mxu0 %v3267
        %v3696 = vpop.f32.mrb[0].mxu0
        %v3697 = vadd.f32 0.0, %v3696
        %v3698 = vpop.f32.mrb[0].mxu0
        %3699 = vmatprep.mubr.f32.mxu0 0.0
        %3700 = vmatmul.mubr.f32.gmra.mrb[0].mxu0 %v3270
        %v3701 = vpop.f32.mrb[0].mxu0
        %v3702 = vadd.f32 0.0, %v3701
        %v3703 = vpop.f32.mrb[0].mxu0
        %3704 = vmatprep.mubr.f32.mxu0 0.0
        %3705 = vmatmul.mubr.f32.gmra.mrb[0].mxu0 %v3273
        %v3706 = vpop.f32.mrb[0].mxu0
        %v3707 = vadd.f32 0.0, %v3706
        %v3708 = vpop.f32.mrb[0].mxu0
        %3709 = vmatprep.mubr.f32.mxu0 0.0
        %3710 = vmatmul.mubr.f32.gmra.mrb[0].mxu0 %v3276
        %v3711 = vpop.f32.mrb[0].mxu0
        %v3712 = vadd.f32 0.0, %v3711
        %v3713 = vpop.f32.mrb[0].mxu0
        %3714 = vmatprep.mubr.f32.mxu0 0.0
        %3715 = vmatmul.mubr.f32.gmra.mrb[0].mxu0 %v3279
        %v3716 = vpop.f32.mrb[0].mxu0
        %v3717 = vadd.f32 0.0, %v3716
        %v3718 = vpop.f32.mrb[0].mxu0
        %3719 = vmatprep.mubr.f32.mxu0 0.0
        %3720 = vmatmul.mubr.f32.gmra.mrb[0].mxu0 %v3282
        %v3721 = vpop.f32.mrb[0].mxu0
        %v3722 = vadd.f32 0.0, %v3721
        %v3723 = vpop.f32.mrb[0].mxu0
        %3724 = vmatprep.mubr.f32.mxu0 0.0
        %3725 = vmatmul.mubr.f32.gmra.mrb[0].mxu0 %v3285
        %v3726 = vpop.f32.mrb[0].mxu0
        %v3727 = vadd.f32 0.0, %v3726
        %v3728 = vpop.f32.mrb[0].mxu0
        %3729 = vmatprep.mubr.f32.mxu0 0.0
        %3730 = vmatmul.mubr.f32.gmra.mrb[0].mxu0 %v3288
        %v3731 = vpop.f32.mrb[0].mxu0
        %v3732 = vadd.f32 0.0, %v3731
        %v3733 = vpop.f32.mrb[0].mxu0
        %3734 = vmatprep.mubr.f32.mxu0 0.0
        %3735 = vmatmul.mubr.f32.gmra.mrb[0].mxu0 %v3291
        %v3736 = vpop.f32.mrb[0].mxu0
        %v3737 = vadd.f32 0.0, %v3736
        %v3738 = vpop.f32.mrb[0].mxu0
        %3739 = vmatprep.mubr.f32.mxu0 0.0
        %3740 = vmatmul.mubr.f32.gmra.mrb[0].mxu0 %v3294
        %v3741 = vpop.f32.mrb[0].mxu0
        %v3742 = vadd.f32 0.0, %v3741
        %v3743 = vpop.f32.mrb[0].mxu0
        %3744 = vmatprep.mubr.f32.mxu0 0.0
        %3745 = vmatmul.mubr.f32.gmra.mrb[0].mxu0 %v3297
        %v3746 = vpop.f32.mrb[0].mxu0
        %v3747 = vadd.f32 0.0, %v3746
        %v3748 = vpop.f32.mrb[0].mxu0
        %3749 = vmatprep.mubr.f32.mxu0 0.0
        %3750 = vmatmul.mubr.f32.gmra.mrb[0].mxu0 %v3300
        %v3751 = vpop.f32.mrb[0].mxu0
        %v3752 = vadd.f32 0.0, %v3751
        %v3753 = vpop.f32.mrb[0].mxu0
        %3754 = vdwg.mxu0
        %v3755 = vld [vmem:[%s509 + $0x20] sm:$0xff]
        %v3756 = vld [vmem:[%s509 + $0x28] sm:$0xff]
        %v3757 = vld [vmem:[%s509 + $0x70] sm:$0xff]
        %v3758 = vld [vmem:[%s509 + $0x78] sm:$0xff]
        %v3759 = vld [vmem:[%s509 + $0xc0] sm:$0xff]
        %v3760 = vld [vmem:[%s509 + $0xc8] sm:$0xff]
        %v3761 = vld [vmem:[%s509 + $0x110] sm:$0xff]
        %v3762 = vld [vmem:[%s509 + $0x118] sm:$0xff]
        %v3763 = vmul.f32 %v3597, %v2788
        %v3764 = vmul.f32 %v3602, %v2793
        %v3765 = vmul.f32 %v3607, %v2798
        %v3766 = vmul.f32 %v3612, %v2803
        %v3767 = vmul.f32 %v3617, %v2808
        %v3768 = vmul.f32 %v3622, %v2813
        %v3769 = vmul.f32 %v3627, %v2818
        %v3770 = vmul.f32 %v3632, %v2823
        %v3771 = vmul.f32 %v3637, %v2828
        %v3772 = vmul.f32 %v3642, %v2833
        %v3773 = vmul.f32 %v3647, %v2838
        %v3774 = vmul.f32 %v3652, %v2843
        %v3775 = vmul.f32 %v3657, %v2848
        %v3776 = vmul.f32 %v3662, %v2853
        %v3777 = vmul.f32 %v3667, %v2858
        %v3778 = vmul.f32 %v3672, %v2863
        %v3779 = vmul.f32 %v3677, %v2868
        %v3780 = vmul.f32 %v3682, %v2873
        %v3781 = vmul.f32 %v3687, %v2878
        %v3782 = vmul.f32 %v3692, %v2883
        %v3783 = vmul.f32 %v3697, %v2888
        %v3784 = vmul.f32 %v3702, %v2893
        %v3785 = vmul.f32 %v3707, %v2898
        %v3786 = vmul.f32 %v3712, %v2903
        %v3787 = vmul.f32 %v3717, %v2908
        %v3788 = vmul.f32 %v3722, %v2913
        %v3789 = vmul.f32 %v3727, %v2918
        %v3790 = vmul.f32 %v3732, %v2923
        %v3791 = vmul.f32 %v3737, %v2928
        %v3792 = vmul.f32 %v3742, %v2933
        %v3793 = vmul.f32 %v3747, %v2938
        %v3794 = vmul.f32 %v3752, %v2943
        %3795 = vmatprep.subr.mxu0 0.0
        %3796 = vmatpush1.msra.mxu0 %v3763
        %3797 = vmatprep.subr.mxu0 0.0
        %3798 = vmatpush1.msra.mxu0 %v3764
        %3799 = vmatprep.subr.mxu0 0.0
        %3800 = vmatpush1.msra.mxu0 %v3765
        %3801 = vmatprep.subr.mxu0 0.0
        %3802 = vmatpush1.msra.mxu0 %v3766
        %3803 = vmatprep.subr.mxu0 0.0
        %3804 = vmatpush1.msra.mxu0 %v3767
        %3805 = vmatprep.subr.mxu0 0.0
        %3806 = vmatpush1.msra.mxu0 %v3768
        %3807 = vmatprep.subr.mxu0 0.0
        %3808 = vmatpush1.msra.mxu0 %v3769
        %3809 = vmatprep.subr.mxu0 0.0
        %3810 = vmatpush1.msra.mxu0 %v3770
        %3811 = vmatprep.subr.mxu0 0.0
        %3812 = vmatpush1.msra.mxu0 %v3771
        %3813 = vmatprep.subr.mxu0 0.0
        %3814 = vmatpush1.msra.mxu0 %v3772
        %3815 = vmatprep.subr.mxu0 0.0
        %3816 = vmatpush1.msra.mxu0 %v3773
        %3817 = vmatprep.subr.mxu0 0.0
        %3818 = vmatpush1.msra.mxu0 %v3774
        %3819 = vmatprep.subr.mxu0 0.0
        %3820 = vmatpush1.msra.mxu0 %v3775
        %3821 = vmatprep.subr.mxu0 0.0
        %3822 = vmatpush1.msra.mxu0 %v3776
        %3823 = vmatprep.subr.mxu0 0.0
        %3824 = vmatpush1.msra.mxu0 %v3777
        %3825 = vmatprep.subr.mxu0 0.0
        %3826 = vmatpush1.msra.mxu0 %v3778
        %3827 = vmatprep.subr.mxu0 0.0
        %3828 = vmatpush1.msra.mxu0 %v3779
        %3829 = vmatprep.subr.mxu0 0.0
        %3830 = vmatpush1.msra.mxu0 %v3780
        %3831 = vmatprep.subr.mxu0 0.0
        %3832 = vmatpush1.msra.mxu0 %v3781
        %3833 = vmatprep.subr.mxu0 0.0
        %3834 = vmatpush1.msra.mxu0 %v3782
        %3835 = vmatprep.subr.mxu0 0.0
        %3836 = vmatpush1.msra.mxu0 %v3783
        %3837 = vmatprep.subr.mxu0 0.0
        %3838 = vmatpush1.msra.mxu0 %v3784
        %3839 = vmatprep.subr.mxu0 0.0
        %3840 = vmatpush1.msra.mxu0 %v3785
        %3841 = vmatprep.subr.mxu0 0.0
        %3842 = vmatpush1.msra.mxu0 %v3786
        %3843 = vmatprep.subr.mxu0 0.0
        %3844 = vmatpush1.msra.mxu0 %v3787
        %3845 = vmatprep.subr.mxu0 0.0
        %3846 = vmatpush1.msra.mxu0 %v3788
        %3847 = vmatprep.subr.mxu0 0.0
        %3848 = vmatpush1.msra.mxu0 %v3789
        %3849 = vmatprep.subr.mxu0 0.0
        %3850 = vmatpush1.msra.mxu0 %v3790
        %3851 = vmatprep.subr.mxu0 0.0
        %3852 = vmatpush1.msra.mxu0 %v3791
        %3853 = vmatprep.subr.mxu0 0.0
        %3854 = vmatpush1.msra.mxu0 %v3792
        %3855 = vmatprep.subr.mxu0 0.0
        %3856 = vmatpush1.msra.mxu0 %v3793
        %3857 = vmatprep.subr.mxu0 0.0
        %3858 = vmatpush1.msra.mxu0 %v3794
        %3859 = vmatprep.mubr.f32.mxu0 %v3756
        %3860 = vmatmul.mubr.f32.gmra.mrb[0].mxu0 %v3755
        %v3861 = vpop.f32.mrb[0].mxu0
        %v3862 = vadd.f32 0.0, %v3861
        %v3863 = vpop.f32.mrb[0].mxu0
        %3864 = vmatprep.mubr.f32.mxu0 %v3758
        %3865 = vmatmul.mubr.f32.gmra.mrb[0].mxu0 %v3757
        %v3866 = vpop.f32.mrb[0].mxu0
        %v3867 = vadd.f32 0.0, %v3866
        %v3868 = vpop.f32.mrb[0].mxu0
        %3869 = vmatprep.mubr.f32.mxu0 %v3760
        %3870 = vmatmul.mubr.f32.gmra.mrb[0].mxu0 %v3759
        %v3871 = vpop.f32.mrb[0].mxu0
        %v3872 = vadd.f32 0.0, %v3871
        %v3873 = vpop.f32.mrb[0].mxu0
        %3874 = vmatprep.mubr.f32.mxu0 %v3762
        %3875 = vmatmul.mubr.f32.gmra.mrb[0].mxu0 %v3761
        %v3876 = vpop.f32.mrb[0].mxu0
        %v3877 = vadd.f32 0.0, %v3876
        %v3878 = vpop.f32.mrb[0].mxu0
        %3879 = vdwg.mxu0
        %3880 = vmatprep.subr.mxu0 0.0
        %3881 = vmatpush1.msra.mxu0 %v2510
        %3882 = vmatprep.subr.mxu0 0.0
        %3883 = vmatpush1.msra.mxu0 %v2511
        %3884 = vmatprep.subr.mxu0 0.0
        %3885 = vmatpush1.msra.mxu0 %v2512
        %3886 = vmatprep.subr.mxu0 0.0
        %3887 = vmatpush1.msra.mxu0 %v2513
        %3888 = vmatprep.subr.mxu0 0.0
        %3889 = vmatpush1.msra.mxu0 %v2514
        %3890 = vmatprep.subr.mxu0 0.0
        %3891 = vmatpush1.msra.mxu0 %v2515
        %3892 = vmatprep.subr.mxu0 0.0
        %3893 = vmatpush1.msra.mxu0 %v2516
        %3894 = vmatprep.subr.mxu0 0.0
        %3895 = vmatpush1.msra.mxu0 %v2517
        %3896 = vmatprep.subr.mxu0 0.0
        %3897 = vmatpush1.msra.mxu0 %v2518
        %3898 = vmatprep.subr.mxu0 0.0
        %3899 = vmatpush1.msra.mxu0 %v2519
        %3900 = vmatprep.subr.mxu0 0.0
        %3901 = vmatpush1.msra.mxu0 %v2520
        %3902 = vmatprep.subr.mxu0 0.0
        %3903 = vmatpush1.msra.mxu0 %v2521
        %3904 = vmatprep.subr.mxu0 0.0
        %3905 = vmatpush1.msra.mxu0 %v2522
        %3906 = vmatprep.subr.mxu0 0.0
        %3907 = vmatpush1.msra.mxu0 %v2523
        %3908 = vmatprep.subr.mxu0 0.0
        %3909 = vmatpush1.msra.mxu0 %v2524
        %3910 = vmatprep.subr.mxu0 0.0
        %3911 = vmatpush1.msra.mxu0 %v2525
        %3912 = vmatprep.subr.mxu0 0.0
        %3913 = vmatpush1.msra.mxu0 %v2526
        %3914 = vmatprep.subr.mxu0 0.0
        %3915 = vmatpush1.msra.mxu0 %v2527
        %3916 = vmatprep.subr.mxu0 0.0
        %3917 = vmatpush1.msra.mxu0 %v2528
        %3918 = vmatprep.subr.mxu0 0.0
        %3919 = vmatpush1.msra.mxu0 %v2529
        %3920 = vmatprep.subr.mxu0 0.0
        %3921 = vmatpush1.msra.mxu0 %v2530
        %3922 = vmatprep.subr.mxu0 0.0
        %3923 = vmatpush1.msra.mxu0 %v2531
        %3924 = vmatprep.subr.mxu0 0.0
        %3925 = vmatpush1.msra.mxu0 %v2532
        %3926 = vmatprep.subr.mxu0 0.0
        %3927 = vmatpush1.msra.mxu0 %v2533
        %3928 = vmatprep.subr.mxu0 0.0
        %3929 = vmatpush1.msra.mxu0 %v2534
        %3930 = vmatprep.subr.mxu0 0.0
        %3931 = vmatpush1.msra.mxu0 %v2535
        %3932 = vmatprep.subr.mxu0 0.0
        %3933 = vmatpush1.msra.mxu0 %v2536
        %3934 = vmatprep.subr.mxu0 0.0
        %3935 = vmatpush1.msra.mxu0 %v2537
        %3936 = vmatprep.subr.mxu0 0.0
        %3937 = vmatpush1.msra.mxu0 %v2538
        %3938 = vmatprep.subr.mxu0 0.0
        %3939 = vmatpush1.msra.mxu0 %v2539
        %3940 = vmatprep.subr.mxu0 0.0
        %3941 = vmatpush1.msra.mxu0 %v2540
        %3942 = vmatprep.subr.mxu0 0.0
        %3943 = vmatpush1.msra.mxu0 %v2541
        %3944 = vmatprep.mubr.f32.mxu0 %v2575
        %3945 = vmatmul.mubr.f32.gmra.mrb[0].mxu0 %v2574
        %v3946 = vpop.f32.mrb[0].mxu0
        %v3947 = vadd.f32 %v3862, %v3946
        %v3948 = vpop.f32.mrb[0].mxu0
        %3949 = vmatprep.mubr.f32.mxu0 %v2579
        %3950 = vmatmul.mubr.f32.gmra.mrb[0].mxu0 %v2578
        %v3951 = vpop.f32.mrb[0].mxu0
        %v3952 = vadd.f32 %v3867, %v3951
        %v3953 = vpop.f32.mrb[0].mxu0
        %3954 = vmatprep.mubr.f32.mxu0 %v2583
        %3955 = vmatmul.mubr.f32.gmra.mrb[0].mxu0 %v2582
        %v3956 = vpop.f32.mrb[0].mxu0
        %v3957 = vadd.f32 %v3872, %v3956
        %v3958 = vpop.f32.mrb[0].mxu0
        %3959 = vmatprep.mubr.f32.mxu0 %v2587
        %3960 = vmatmul.mubr.f32.gmra.mrb[0].mxu0 %v2586
        %v3961 = vpop.f32.mrb[0].mxu0
        %v3962 = vadd.f32 %v3877, %v3961
        %v3963 = vpop.f32.mrb[0].mxu0
        %3964 = vdwg.mxu0
        %3965 = vmatprep.subr.mxu0 0.0
        %3966 = vmatpush1.msra.mxu0 %v2542
        %3967 = vmatprep.subr.mxu0 0.0
        %3968 = vmatpush1.msra.mxu0 %v2543
        %3969 = vmatprep.subr.mxu0 0.0
        %3970 = vmatpush1.msra.mxu0 %v2544
        %3971 = vmatprep.subr.mxu0 0.0
        %3972 = vmatpush1.msra.mxu0 %v2545
        %3973 = vmatprep.subr.mxu0 0.0
        %3974 = vmatpush1.msra.mxu0 %v2546
        %3975 = vmatprep.subr.mxu0 0.0
        %3976 = vmatpush1.msra.mxu0 %v2547
        %3977 = vmatprep.subr.mxu0 0.0
        %3978 = vmatpush1.msra.mxu0 %v2548
        %3979 = vmatprep.subr.mxu0 0.0
        %3980 = vmatpush1.msra.mxu0 %v2549
        %3981 = vmatprep.subr.mxu0 0.0
        %3982 = vmatpush1.msra.mxu0 %v2550
        %3983 = vmatprep.subr.mxu0 0.0
        %3984 = vmatpush1.msra.mxu0 %v2551
        %3985 = vmatprep.subr.mxu0 0.0
        %3986 = vmatpush1.msra.mxu0 %v2552
        %3987 = vmatprep.subr.mxu0 0.0
        %3988 = vmatpush1.msra.mxu0 %v2553
        %3989 = vmatprep.subr.mxu0 0.0
        %3990 = vmatpush1.msra.mxu0 %v2554
        %3991 = vmatprep.subr.mxu0 0.0
        %3992 = vmatpush1.msra.mxu0 %v2555
        %3993 = vmatprep.subr.mxu0 0.0
        %3994 = vmatpush1.msra.mxu0 %v2556
        %3995 = vmatprep.subr.mxu0 0.0
        %3996 = vmatpush1.msra.mxu0 %v2557
        %3997 = vmatprep.subr.mxu0 0.0
        %3998 = vmatpush1.msra.mxu0 %v2558
        %3999 = vmatprep.subr.mxu0 0.0
        %4000 = vmatpush1.msra.mxu0 %v2559
        %4001 = vmatprep.subr.mxu0 0.0
        %4002 = vmatpush1.msra.mxu0 %v2560
        %4003 = vmatprep.subr.mxu0 0.0
        %4004 = vmatpush1.msra.mxu0 %v2561
        %4005 = vmatprep.subr.mxu0 0.0
        %4006 = vmatpush1.msra.mxu0 %v2562
        %4007 = vmatprep.subr.mxu0 0.0
        %4008 = vmatpush1.msra.mxu0 %v2563
        %4009 = vmatprep.subr.mxu0 0.0
        %4010 = vmatpush1.msra.mxu0 %v2564
        %4011 = vmatprep.subr.mxu0 0.0
        %4012 = vmatpush1.msra.mxu0 %v2565
        %4013 = vmatprep.subr.mxu0 0.0
        %4014 = vmatpush1.msra.mxu0 %v2566
        %4015 = vmatprep.subr.mxu0 0.0
        %4016 = vmatpush1.msra.mxu0 %v2567
        %4017 = vmatprep.subr.mxu0 0.0
        %4018 = vmatpush1.msra.mxu0 %v2568
        %4019 = vmatprep.subr.mxu0 0.0
        %4020 = vmatpush1.msra.mxu0 %v2569
        %4021 = vmatprep.subr.mxu0 0.0
        %4022 = vmatpush1.msra.mxu0 %v2570
        %4023 = vmatprep.subr.mxu0 0.0
        %4024 = vmatpush1.msra.mxu0 %v2571
        %4025 = vmatprep.subr.mxu0 0.0
        %4026 = vmatpush1.msra.mxu0 %v2572
        %4027 = vmatprep.subr.mxu0 0.0
        %4028 = vmatpush1.msra.mxu0 %v2573
        %4029 = vmatprep.mubr.f32.mxu0 %v2577
        %4030 = vmatmul.mubr.f32.gmra.mrb[0].mxu0 %v2576
        %v4031 = vpop.f32.mrb[0].mxu0
        %v4032 = vadd.f32 %v3947, %v4031
        %v4033 = vpop.f32.mrb[0].mxu0
        %4034 = vmatprep.mubr.f32.mxu0 %v2581
        %4035 = vmatmul.mubr.f32.gmra.mrb[0].mxu0 %v2580
        %v4036 = vpop.f32.mrb[0].mxu0
        %v4037 = vadd.f32 %v3952, %v4036
        %v4038 = vpop.f32.mrb[0].mxu0
        %4039 = vmatprep.mubr.f32.mxu0 %v2585
        %4040 = vmatmul.mubr.f32.gmra.mrb[0].mxu0 %v2584
        %v4041 = vpop.f32.mrb[0].mxu0
        %v4042 = vadd.f32 %v3957, %v4041
        %v4043 = vpop.f32.mrb[0].mxu0
        %4044 = vmatprep.mubr.f32.mxu0 %v2589
        %4045 = vmatmul.mubr.f32.gmra.mrb[0].mxu0 %v2588
        %v4046 = vpop.f32.mrb[0].mxu0
        %v4047 = vadd.f32 %v3962, %v4046
        %v4048 = vpop.f32.mrb[0].mxu0
        %4049 = vdwg.mxu0
        %v4050 = vld [vmem:[%s509 + $0x30] sm:$0xff]
        %v4051 = vld [vmem:[%s509 + $0x38] sm:$0xff]
        %v4052 = vld [vmem:[%s509 + $0x80] sm:$0xff]
        %v4053 = vld [vmem:[%s509 + $0x88] sm:$0xff]
        %v4054 = vld [vmem:[%s509 + $0xd0] sm:$0xff]
        %v4055 = vld [vmem:[%s509 + $0xd8] sm:$0xff]
        %v4056 = vld [vmem:[%s509 + $0x120] sm:$0xff]
        %v4057 = vld [vmem:[%s509 + $0x128] sm:$0xff]
        %v4058 = vmul.f32 %v3369, %v2788
        %v4059 = vmul.f32 %v3374, %v2793
        %v4060 = vmul.f32 %v3379, %v2798
        %v4061 = vmul.f32 %v3384, %v2803
        %v4062 = vmul.f32 %v3389, %v2808
        %v4063 = vmul.f32 %v3394, %v2813
        %v4064 = vmul.f32 %v3399, %v2818
        %v4065 = vmul.f32 %v3404, %v2823
        %v4066 = vmul.f32 %v3409, %v2828
        %v4067 = vmul.f32 %v3414, %v2833
        %v4068 = vmul.f32 %v3419, %v2838
        %v4069 = vmul.f32 %v3424, %v2843
        %v4070 = vmul.f32 %v3429, %v2848
        %v4071 = vmul.f32 %v3434, %v2853
        %v4072 = vmul.f32 %v3439, %v2858
        %v4073 = vmul.f32 %v3444, %v2863
        %v4074 = vmul.f32 %v3449, %v2868
        %v4075 = vmul.f32 %v3454, %v2873
        %v4076 = vmul.f32 %v3459, %v2878
        %v4077 = vmul.f32 %v3464, %v2883
        %v4078 = vmul.f32 %v3469, %v2888
        %v4079 = vmul.f32 %v3474, %v2893
        %v4080 = vmul.f32 %v3479, %v2898
        %v4081 = vmul.f32 %v3484, %v2903
        %v4082 = vmul.f32 %v3489, %v2908
        %v4083 = vmul.f32 %v3494, %v2913
        %v4084 = vmul.f32 %v3499, %v2918
        %v4085 = vmul.f32 %v3504, %v2923
        %v4086 = vmul.f32 %v3509, %v2928
        %v4087 = vmul.f32 %v3514, %v2933
        %v4088 = vmul.f32 %v3519, %v2938
        %v4089 = vmul.f32 %v3524, %v2943
        %4090 = vmatprep.subr.mxu0 0.0
        %4091 = vmatpush1.msra.mxu0 %v4058
        %4092 = vmatprep.subr.mxu0 0.0
        %4093 = vmatpush1.msra.mxu0 %v4059
        %4094 = vmatprep.subr.mxu0 0.0
        %4095 = vmatpush1.msra.mxu0 %v4060
        %4096 = vmatprep.subr.mxu0 0.0
        %4097 = vmatpush1.msra.mxu0 %v4061
        %4098 = vmatprep.subr.mxu0 0.0
        %4099 = vmatpush1.msra.mxu0 %v4062
        %4100 = vmatprep.subr.mxu0 0.0
        %4101 = vmatpush1.msra.mxu0 %v4063
        %4102 = vmatprep.subr.mxu0 0.0
        %4103 = vmatpush1.msra.mxu0 %v4064
        %4104 = vmatprep.subr.mxu0 0.0
        %4105 = vmatpush1.msra.mxu0 %v4065
        %4106 = vmatprep.subr.mxu0 0.0
        %4107 = vmatpush1.msra.mxu0 %v4066
        %4108 = vmatprep.subr.mxu0 0.0
        %4109 = vmatpush1.msra.mxu0 %v4067
        %4110 = vmatprep.subr.mxu0 0.0
        %4111 = vmatpush1.msra.mxu0 %v4068
        %4112 = vmatprep.subr.mxu0 0.0
        %4113 = vmatpush1.msra.mxu0 %v4069
        %4114 = vmatprep.subr.mxu0 0.0
        %4115 = vmatpush1.msra.mxu0 %v4070
        %4116 = vmatprep.subr.mxu0 0.0
        %4117 = vmatpush1.msra.mxu0 %v4071
        %4118 = vmatprep.subr.mxu0 0.0
        %4119 = vmatpush1.msra.mxu0 %v4072
        %4120 = vmatprep.subr.mxu0 0.0
        %4121 = vmatpush1.msra.mxu0 %v4073
        %4122 = vmatprep.subr.mxu0 0.0
        %4123 = vmatpush1.msra.mxu0 %v4074
        %4124 = vmatprep.subr.mxu0 0.0
        %4125 = vmatpush1.msra.mxu0 %v4075
        %4126 = vmatprep.subr.mxu0 0.0
        %4127 = vmatpush1.msra.mxu0 %v4076
        %4128 = vmatprep.subr.mxu0 0.0
        %4129 = vmatpush1.msra.mxu0 %v4077
        %4130 = vmatprep.subr.mxu0 0.0
        %4131 = vmatpush1.msra.mxu0 %v4078
        %4132 = vmatprep.subr.mxu0 0.0
        %4133 = vmatpush1.msra.mxu0 %v4079
        %4134 = vmatprep.subr.mxu0 0.0
        %4135 = vmatpush1.msra.mxu0 %v4080
        %4136 = vmatprep.subr.mxu0 0.0
        %4137 = vmatpush1.msra.mxu0 %v4081
        %4138 = vmatprep.subr.mxu0 0.0
        %4139 = vmatpush1.msra.mxu0 %v4082
        %4140 = vmatprep.subr.mxu0 0.0
        %4141 = vmatpush1.msra.mxu0 %v4083
        %4142 = vmatprep.subr.mxu0 0.0
        %4143 = vmatpush1.msra.mxu0 %v4084
        %4144 = vmatprep.subr.mxu0 0.0
        %4145 = vmatpush1.msra.mxu0 %v4085
        %4146 = vmatprep.subr.mxu0 0.0
        %4147 = vmatpush1.msra.mxu0 %v4086
        %4148 = vmatprep.subr.mxu0 0.0
        %4149 = vmatpush1.msra.mxu0 %v4087
        %4150 = vmatprep.subr.mxu0 0.0
        %4151 = vmatpush1.msra.mxu0 %v4088
        %4152 = vmatprep.subr.mxu0 0.0
        %4153 = vmatpush1.msra.mxu0 %v4089
        %4154 = vmatprep.mubr.f32.mxu0 %v4051
        %4155 = vmatmul.mubr.f32.gmra.mrb[0].mxu0 %v4050
        %v4156 = vpop.f32.mrb[0].mxu0
        %v4157 = vadd.f32 0.0, %v4156
        %v4158 = vpop.f32.mrb[0].mxu0
        %4159 = vmatprep.mubr.f32.mxu0 %v4053
        %4160 = vmatmul.mubr.f32.gmra.mrb[0].mxu0 %v4052
        %v4161 = vpop.f32.mrb[0].mxu0
        %v4162 = vadd.f32 0.0, %v4161
        %v4163 = vpop.f32.mrb[0].mxu0
        %4164 = vmatprep.mubr.f32.mxu0 %v4055
        %4165 = vmatmul.mubr.f32.gmra.mrb[0].mxu0 %v4054
        %v4166 = vpop.f32.mrb[0].mxu0
        %v4167 = vadd.f32 0.0, %v4166
        %v4168 = vpop.f32.mrb[0].mxu0
        %4169 = vmatprep.mubr.f32.mxu0 %v4057
        %4170 = vmatmul.mubr.f32.gmra.mrb[0].mxu0 %v4056
        %v4171 = vpop.f32.mrb[0].mxu0
        %v4172 = vadd.f32 0.0, %v4171
        %v4173 = vpop.f32.mrb[0].mxu0
        %4174 = vdwg.mxu0
        %v4175 = vadd.f32 %v4032, %v4157
        %v4176 = vadd.f32 %v4037, %v4162
        %v4177 = vadd.f32 %v4042, %v4167
        %v4178 = vadd.f32 %v4047, %v4172
        %v4179 = vld [vmem:[%s509 + $0x40] sm:$0xff]
        %v4180 = vld [vmem:[%s509 + $0x48] sm:$0xff]
        %v4181 = vld [vmem:[%s509 + $0x90] sm:$0xff]
        %v4182 = vld [vmem:[%s509 + $0x98] sm:$0xff]
        %v4183 = vld [vmem:[%s509 + $0xe0] sm:$0xff]
        %v4184 = vld [vmem:[%s509 + $0xe8] sm:$0xff]
        %v4185 = vld [vmem:[%s509 + $0x130] sm:$0xff]
        %v4186 = vld [vmem:[%s509 + $0x138] sm:$0xff]
        %v4187 = vmul.f32 %v3597, %v3016
        %v4188 = vmul.f32 %v3602, %v3021
        %v4189 = vmul.f32 %v3607, %v3026
        %v4190 = vmul.f32 %v3612, %v3031
        %v4191 = vmul.f32 %v3617, %v3036
        %v4192 = vmul.f32 %v3622, %v3041
        %v4193 = vmul.f32 %v3627, %v3046
        %v4194 = vmul.f32 %v3632, %v3051
        %v4195 = vmul.f32 %v3637, %v3056
        %v4196 = vmul.f32 %v3642, %v3061
        %v4197 = vmul.f32 %v3647, %v3066
        %v4198 = vmul.f32 %v3652, %v3071
        %v4199 = vmul.f32 %v3657, %v3076
        %v4200 = vmul.f32 %v3662, %v3081
        %v4201 = vmul.f32 %v3667, %v3086
        %v4202 = vmul.f32 %v3672, %v3091
        %v4203 = vmul.f32 %v3677, %v3096
        %v4204 = vmul.f32 %v3682, %v3101
        %v4205 = vmul.f32 %v3687, %v3106
        %v4206 = vmul.f32 %v3692, %v3111
        %v4207 = vmul.f32 %v3697, %v3116
        %v4208 = vmul.f32 %v3702, %v3121
        %v4209 = vmul.f32 %v3707, %v3126
        %v4210 = vmul.f32 %v3712, %v3131
        %v4211 = vmul.f32 %v3717, %v3136
        %v4212 = vmul.f32 %v3722, %v3141
        %v4213 = vmul.f32 %v3727, %v3146
        %v4214 = vmul.f32 %v3732, %v3151
        %v4215 = vmul.f32 %v3737, %v3156
        %v4216 = vmul.f32 %v3742, %v3161
        %v4217 = vmul.f32 %v3747, %v3166
        %v4218 = vmul.f32 %v3752, %v3171
        %4219 = vmatprep.subr.mxu0 0.0
        %4220 = vmatpush1.msra.mxu0 %v4187
        %4221 = vmatprep.subr.mxu0 0.0
        %4222 = vmatpush1.msra.mxu0 %v4188
        %4223 = vmatprep.subr.mxu0 0.0
        %4224 = vmatpush1.msra.mxu0 %v4189
        %4225 = vmatprep.subr.mxu0 0.0
        %4226 = vmatpush1.msra.mxu0 %v4190
        %4227 = vmatprep.subr.mxu0 0.0
        %4228 = vmatpush1.msra.mxu0 %v4191
        %4229 = vmatprep.subr.mxu0 0.0
        %4230 = vmatpush1.msra.mxu0 %v4192
        %4231 = vmatprep.subr.mxu0 0.0
        %4232 = vmatpush1.msra.mxu0 %v4193
        %4233 = vmatprep.subr.mxu0 0.0
        %4234 = vmatpush1.msra.mxu0 %v4194
        %4235 = vmatprep.subr.mxu0 0.0
        %4236 = vmatpush1.msra.mxu0 %v4195
        %4237 = vmatprep.subr.mxu0 0.0
        %4238 = vmatpush1.msra.mxu0 %v4196
        %4239 = vmatprep.subr.mxu0 0.0
        %4240 = vmatpush1.msra.mxu0 %v4197
        %4241 = vmatprep.subr.mxu0 0.0
        %4242 = vmatpush1.msra.mxu0 %v4198
        %4243 = vmatprep.subr.mxu0 0.0
        %4244 = vmatpush1.msra.mxu0 %v4199
        %4245 = vmatprep.subr.mxu0 0.0
        %4246 = vmatpush1.msra.mxu0 %v4200
        %4247 = vmatprep.subr.mxu0 0.0
        %4248 = vmatpush1.msra.mxu0 %v4201
        %4249 = vmatprep.subr.mxu0 0.0
        %4250 = vmatpush1.msra.mxu0 %v4202
        %4251 = vmatprep.subr.mxu0 0.0
        %4252 = vmatpush1.msra.mxu0 %v4203
        %4253 = vmatprep.subr.mxu0 0.0
        %4254 = vmatpush1.msra.mxu0 %v4204
        %4255 = vmatprep.subr.mxu0 0.0
        %4256 = vmatpush1.msra.mxu0 %v4205
        %4257 = vmatprep.subr.mxu0 0.0
        %4258 = vmatpush1.msra.mxu0 %v4206
        %4259 = vmatprep.subr.mxu0 0.0
        %4260 = vmatpush1.msra.mxu0 %v4207
        %4261 = vmatprep.subr.mxu0 0.0
        %4262 = vmatpush1.msra.mxu0 %v4208
        %4263 = vmatprep.subr.mxu0 0.0
        %4264 = vmatpush1.msra.mxu0 %v4209
        %4265 = vmatprep.subr.mxu0 0.0
        %4266 = vmatpush1.msra.mxu0 %v4210
        %4267 = vmatprep.subr.mxu0 0.0
        %4268 = vmatpush1.msra.mxu0 %v4211
        %4269 = vmatprep.subr.mxu0 0.0
        %4270 = vmatpush1.msra.mxu0 %v4212
        %4271 = vmatprep.subr.mxu0 0.0
        %4272 = vmatpush1.msra.mxu0 %v4213
        %4273 = vmatprep.subr.mxu0 0.0
        %4274 = vmatpush1.msra.mxu0 %v4214
        %4275 = vmatprep.subr.mxu0 0.0
        %4276 = vmatpush1.msra.mxu0 %v4215
        %4277 = vmatprep.subr.mxu0 0.0
        %4278 = vmatpush1.msra.mxu0 %v4216
        %4279 = vmatprep.subr.mxu0 0.0
        %4280 = vmatpush1.msra.mxu0 %v4217
        %4281 = vmatprep.subr.mxu0 0.0
        %4282 = vmatpush1.msra.mxu0 %v4218
        %4283 = vmatprep.mubr.f32.mxu0 %v4180
        %4284 = vmatmul.mubr.f32.gmra.mrb[0].mxu0 %v4179
        %v4285 = vpop.f32.mrb[0].mxu0
        %v4286 = vadd.f32 0.0, %v4285
        %v4287 = vpop.f32.mrb[0].mxu0
        %4288 = vmatprep.mubr.f32.mxu0 %v4182
        %4289 = vmatmul.mubr.f32.gmra.mrb[0].mxu0 %v4181
        %v4290 = vpop.f32.mrb[0].mxu0
        %v4291 = vadd.f32 0.0, %v4290
        %v4292 = vpop.f32.mrb[0].mxu0
        %4293 = vmatprep.mubr.f32.mxu0 %v4184
        %4294 = vmatmul.mubr.f32.gmra.mrb[0].mxu0 %v4183
        %v4295 = vpop.f32.mrb[0].mxu0
        %v4296 = vadd.f32 0.0, %v4295
        %v4297 = vpop.f32.mrb[0].mxu0
        %4298 = vmatprep.mubr.f32.mxu0 %v4186
        %4299 = vmatmul.mubr.f32.gmra.mrb[0].mxu0 %v4185
        %v4300 = vpop.f32.mrb[0].mxu0
        %v4301 = vadd.f32 0.0, %v4300
        %v4302 = vpop.f32.mrb[0].mxu0
        %4303 = vdwg.mxu0
        %v4304 = vadd.f32 %v4175, %v4286
        %v4305 = vadd.f32 %v4176, %v4291
        %v4306 = vadd.f32 %v4177, %v4296
        %v4307 = vadd.f32 %v4178, %v4301
        %v4308 = vld [vmem:[%s9] sm:$0xff]
        %v4309 = vld [vmem:[%s9 + $0x8] sm:$0xff]
        %v4310 = vld [vmem:[%s9 + $0x10] sm:$0xff]
        %v4311 = vld [vmem:[%s9 + $0x18] sm:$0xff]
        %4313 = vset.pattern.permute.xlu0 0
        %4314 = vperm.xlu0 %4313, %v4308
        %v4315 = vpop.permute.xlu0 %4314
        %4318 = vset.pattern.permute.xlu0 0
        %4319 = vperm.xlu0 %4318, %v4309
        %v4320 = vpop.permute.xlu0 %4319
        %4323 = vset.pattern.permute.xlu0 0
        %4324 = vperm.xlu0 %4323, %v4310
        %v4325 = vpop.permute.xlu0 %4324
        %4328 = vset.pattern.permute.xlu0 0
        %4329 = vperm.xlu0 %4328, %v4311
        %v4330 = vpop.permute.xlu0 %4329
        %v4332 = vmul.f32 %v4304, %v4315
        %v4333 = vmul.f32 %v4305, %v4320
        %v4334 = vmul.f32 %v4306, %v4325
        %v4335 = vmul.f32 %v4307, %v4330
        %v4336 = vadd.f32 %v4332, %v4333
        %v4337 = vadd.f32 %v4336, %v4334
        %v4338 = vadd.f32 %v4337, %v4335
        %v4339 = vrot.slane %v4338, 4
        %v4340 = vadd.f32 %v4338, %v4339
        %v4341 = vrot.slane %v4340, 2
        %v4342 = vadd.f32 %v4340, %v4341
        %v4343 = vrot.slane %v4342, 1
        %v4344 = vadd.f32 %v4342, %v4343
        %v4345 = vld [vmem:[%s516] sm:$0x7]
        %v4346 = vld [vmem:[%s10] sm:$0x7]
        %4348 = vset.pattern.permute.xlu0 0
        %4349 = vperm.xlu0 %4348, %v4346
        %v4350 = vpop.permute.xlu0 %4349
        %v4352 = vmul.f32 %v4345, %v4350
        %vm4353 = vcmask 1042432
        %v4354 = vsel %vm4353, %v4352, 0.0
        %v4355 = vrot.slane %v4354, 4
        %v4356 = vadd.f32 %v4354, %v4355
        %v4357 = vrot.slane %v4356, 2
        %v4358 = vadd.f32 %v4356, %v4357
        %v4359 = vrot.slane %v4358, 1
        %v4360 = vadd.f32 %v4358, %v4359
        %v4361 = vadd.f32 %v4344, %v4360
        %v4362 = vld [vmem:[#allocation2] sm:$0x1]
        %4364 = vset.pattern.permute.xlu0 0
        %4365 = vperm.xlu0 %4364, %v4362
        %v4366 = vpop.permute.xlu0 %4365
        %v4368 = vlaneseq
        %v4369 = vshrl.u32 %v4368, 7
        %v4370 = vsub.s32 0, %v4369
        %v4371 = vrot.slane %v4366, %v4370
        %v4372 = vadd.f32 %v4361, %v4371
        %4373 = vst [vmem:[%s488] sm:$0x1] %v4372
        %s4374 = sand.u32 %s328, 1
        %s4375 = scalar_lea.sflag [#allocation4], %s4374
        %s4376 = sand.u32 %s328, 1
        %s4377 = scalar_lea.vmem [#allocation3], %s4376
        // Predicated region
        $region69: #{_lambda_.1} parent=67 // pred_check
          %p4378 = pneg %p338
        $region70: #{_lambda_.1} parent=67 // pred_check_branch
          %4380 = sbr.rel (%p4378) target = $region72
        $region71: #{_lambda_.1} parent=67 // pred_region
          %s4382 = ssub.s32 16, 16
          %4383 = vsyncadd %s4375, %s4382
          %s4384 = sadd.s32 %s33, %s32
          %s4385 = smul.addr %s4384, 16
          %s4386 = scalar_lea.hbm %s12, %s4385
          %s4388 = sshll.u32 %s4377, 4
          %s4389 = int_to_ptr.vmem [resolvable:$true] %s4388
          %4391 = dma.vmem_to_hbm [thread:$0]  %s4389, 16, %s4386, %s4375
        $region72: #{_lambda_.1} parent=67 // pred_fallthru
          _
      $region68: #{_lambda_.1} parent=5 // pred_fallthru
        _
      %p4392 = scmp.le.s32.totalorder 2, %s23
      // Predicated region
      $region73: #{_lambda_.1} parent=5 // pred_check
        %p4393 = pneg %p4392
      $region74: #{_lambda_.1} parent=5 // pred_check_branch
        %4395 = sbr.rel (%p4393) target = $region76
      $region75: #{_lambda_.1} parent=5 // pred_region
        %s4396 = ssub.s32 %s23, 2
        // Predicated region
        $region77: #{_lambda_.1} parent=75 // pred_check
          %p4397 = pneg %p344
        $region78: #{_lambda_.1} parent=75 // pred_check_branch
          %4399 = sbr.rel (%p4397) target = $region80
        $region79: #{_lambda_.1} parent=75 // pred_region
          %s4400 = sand.u32 %s329, 1
          %s4401 = scalar_lea.sflag [#allocation4], %s4400
          %s4402 = sand.u32 %s329, 1
          %s4403 = scalar_lea.vmem [#allocation3], %s4402
          %4404 = dma.done %s4401, 16
        $region80: #{_lambda_.1} parent=75 // pred_fallthru
          _
      $region76: #{_lambda_.1} parent=5 // pred_fallthru
        _
    $region6: #{_lambda_.1} parent=1 // loop_footer
      %s27 = sadd.s32 1, %s23
    $region7: #{_lambda_.1} parent=1 // loop_footer_branch
      %22 = sbr.rel target = $region3
    $region8: #{_lambda_.1} parent=1 // loop_exit
      _
    %4405 = vsyncpa [#allocation4], 1
    %s4406 = scalar_lea.sflag [#allocation4], 1
    %4407 = vsyncpa %s4406, 1

</llo_original>
